<compile_context>
chip_gen: v5e
topology: v5e:2x2
jax: 0.10.0
libtpu: 0.0.40
codegen_flags: <defaults>
</compile_context>

<pallas_src>
import jax
import jax.numpy as jnp
import numpy as np
from jax.experimental import pallas as pl
from jax.experimental.pallas import tpu as pltpu

_CompilerParams = getattr(pltpu, "CompilerParams", None)
if _CompilerParams is None:  # fallback for older JAX naming
    _CompilerParams = pltpu.TPUCompilerParams  # type: ignore[attr-defined]

_K = 5  # conv kernel size


# ----------------------------------------------------------------------------
# Fused whole-network kernel (one image per grid step)
# ----------------------------------------------------------------------------
def net3_kernel(x_ref, w1_ref, b1_ref, w2_ref, b2_ref,
                wf1_ref, bf1_ref, wf2_ref, bf2_ref, o_ref, a1_ref):
    # x_ref : (4, 7, 128)   image rows, 4-way row-deinterleaved:
    #                       x_ref[m, t, :] = image row (4*t + m), row layout = w*3 + c,
    #                       zero padded 84 -> 128 lanes.
    # w1_ref: (2, 640, 256) conv1 Toeplitz weights (one per pool-column offset dx).
    # w2_ref: (2, 1280, 128) conv2 Toeplitz weights.
    # a1_ref: (2, 6, 256)   scratch, conv1 stage output split by row parity:
    #                       a1_ref[q, s, :] = pooled row (2*s + q).

    def rows1(c):
        # image rows {4*s + c : s = 0..5} -> (6, 128)
        return x_ref[c % 4, pl.ds(c // 4, 6), :]

    def rows2(c):
        # conv1-pooled rows {2*i + c : i = 0..3} -> (4, 256)
        return a1_ref[c % 2, pl.ds(c // 2, 4), :]

    def conv_pool_relu(lhs_rows, base, w_ref, b_row):
        # conv (VALID, k=5) + 2x2 max-pool + bias + relu, fused as 4 matmuls.
        xc = [jnp.concatenate([lhs_rows(base + dy + kh) for kh in range(_K)], axis=1)
              for dy in (0, 1)]
        wt = [w_ref[0], w_ref[1]]
        ys = [jnp.dot(xc[dy], wt[dx], preferred_element_type=jnp.float32)
              for dy in (0, 1) for dx in (0, 1)]
        pooled = jnp.maximum(jnp.maximum(ys[0], ys[1]), jnp.maximum(ys[2], ys[3]))
        return jnp.maximum(pooled + b_row, 0.0)

    # ---- conv1 (3->15) + pool + relu, computed per output-row parity q ----
    for q in (0, 1):
        a1_ref[q] = conv_pool_relu(rows1, 2 * q, w1_ref, b1_ref[...])

    # ---- conv2 (15->20) + pool + relu  (Dropout2d is identity in eval mode) ----
    a2 = conv_pool_relu(rows2, 0, w2_ref, b2_ref[...])          # (4, 128), cols j*20+c (pad 0)

    # ---- flatten + fc1 + relu + fc2 + log_softmax ----
    # TODO(synk): training-mode dropout masks (Dropout2d / F.dropout) are not implemented;
    #             eval-mode (identity) semantics are used, matching the reference in eval.
    flat = jnp.concatenate([a2[r:r + 1, :] for r in range(4)], axis=1)      # (1, 512)
    h = jnp.dot(flat, wf1_ref[...], preferred_element_type=jnp.float32) + bf1_ref[...]
    h = jnp.maximum(h, 0.0)                                                 # (1, 500)
    logits = jnp.dot(h, wf2_ref[...], preferred_element_type=jnp.float32) + bf2_ref[...]
    m = jnp.max(logits, axis=1, keepdims=True)
    s = logits - m
    o_ref[...] = s - jnp.log(jnp.sum(jnp.exp(s), axis=1, keepdims=True))


# ----------------------------------------------------------------------------
# One-time parameter preparation (PyTorch layout -> fused-kernel layout)
# ----------------------------------------------------------------------------
def _conv_toeplitz(w, in_cols, in_width_pad, out_width_pad):
    """Pool-fused Toeplitz matmul weights for a VALID KxK conv.

    w: (Cout, Cin, K, K) PyTorch conv weight.  Returns T of shape
    (2, K*in_width_pad, out_width_pad) such that for an input row-block
    X[r, kh*in_width_pad + jin*Cin + ci]  (jin = input column, ci = channel),
    (X @ T[dx])[r, j*Cout + co] is the conv output at output column 2*j + dx.
    """
    w = np.asarray(w, np.float32)
    Cout, Cin, K, _ = w.shape
    wp = (in_cols - K + 1) // 2                      # pooled output columns
    T = np.zeros((2, K * in_width_pad, out_width_pad), np.float32)
    for dx in range(2):
        for kh in range(K):
            for j in range(wp):
                for kw in range(K):
                    jin = 2 * j + dx + kw
                    r0 = kh * in_width_pad + jin * Cin
                    T[dx, r0:r0 + Cin, j * Cout:(j + 1) * Cout] = w[:, :, kh, kw].T
    return T


def prepare_params(p):
    """Convert PyTorch-layout Net_3 params into the fused-kernel layout (done once)."""
    b1 = np.zeros((1, 256), np.float32)
    b1[0, :12 * 15] = np.tile(np.asarray(p["conv1_b"], np.float32), 12)
    b2 = np.zeros((1, 128), np.float32)
    b2[0, :4 * 20] = np.tile(np.asarray(p["conv2_b"], np.float32), 4)

    # fc1: permute input columns from the NCHW .view(-1, 320) order (c*16 + h*4 + w)
    # to the kernel's lane-padded NHWC flatten order (h*128 + w*20 + c); store as (in, out).
    fw1 = np.asarray(p["fc1_w"], np.float32).reshape(500, 20, 4, 4)   # [o, c, h, w]
    wf1 = np.zeros((512, 500), np.float32)
    for h in range(4):
        wf1[h * 128:h * 128 + 80, :] = fw1[:, :, h, :].transpose(2, 1, 0).reshape(80, 500)

    return {
        "w1t": jnp.asarray(_conv_toeplitz(p["conv1_w"], 28, 128, 256)),   # (2, 640, 256)
        "b1":  jnp.asarray(b1),
        "w2t": jnp.asarray(_conv_toeplitz(p["conv2_w"], 12, 256, 128)),   # (2, 1280, 128)
        "b2":  jnp.asarray(b2),
        "wf1": jnp.asarray(wf1),                                          # (512, 500)
        "bf1": jnp.asarray(np.asarray(p["fc1_b"], np.float32)[None, :]),
        "wf2": jnp.asarray(np.asarray(p["fc2_w"], np.float32).T.copy()),  # (500, 10)
        "bf2": jnp.asarray(np.asarray(p["fc2_b"], np.float32)[None, :]),
    }


# ----------------------------------------------------------------------------
# Forward wrapper
# ----------------------------------------------------------------------------
def net3_forward(x_nchw, kp):
    """Fused Net_3 forward (eval mode). x_nchw: (N, 3, 28, 28) -> log-probs (N, 10)."""
    N = x_nchw.shape[0]
    # Input-only layout plumbing: NCHW -> rows with (w, c) on lanes, pad 84 -> 128,
    # 4-way row de-interleave so the kernel only needs unit-stride static slices.
    x2d = jnp.transpose(x_nchw, (0, 2, 3, 1)).reshape(N, 28, 28 * 3)
    x2d = jnp.pad(x2d, ((0, 0), (0, 0), (0, 128 - 28 * 3)))
    x4 = x2d.reshape(N, 7, 4, 128).transpose(0, 2, 1, 3)                  # (N, 4, 7, 128)

    out = pl.pallas_call(
        net3_kernel,
        out_shape=jax.ShapeDtypeStruct((N, 1, 10), jnp.float32),
        grid_spec=pltpu.PrefetchScalarGridSpec(
            num_scalar_prefetch=0,
            grid=(N,),                                                    # one image per step
            in_specs=[
                pl.BlockSpec((None, 4, 7, 128), lambda b: (b, 0, 0, 0)),  # image block
                pl.BlockSpec((2, 640, 256),     lambda b: (0, 0, 0)),     # conv1 Toeplitz
                pl.BlockSpec((1, 256),          lambda b: (0, 0)),        # conv1 bias (tiled)
                pl.BlockSpec((2, 1280, 128),    lambda b: (0, 0, 0)),     # conv2 Toeplitz
                pl.BlockSpec((1, 128),          lambda b: (0, 0)),        # conv2 bias (tiled)
                pl.BlockSpec((512, 500),        lambda b: (0, 0)),        # fc1 weight
                pl.BlockSpec((1, 500),          lambda b: (0, 0)),        # fc1 bias
                pl.BlockSpec((500, 10),         lambda b: (0, 0)),        # fc2 weight
                pl.BlockSpec((1, 10),           lambda b: (0, 0)),        # fc2 bias
            ],
            out_specs=pl.BlockSpec((None, 1, 10), lambda b: (b, 0, 0)),
            scratch_shapes=[pltpu.VMEM((2, 6, 256), jnp.float32)],        # conv1 activations
        ),
        compiler_params=_CompilerParams(dimension_semantics=("parallel",)),
    )(x4, kp["w1t"], kp["b1"], kp["w2t"], kp["b2"],
      kp["wf1"], kp["bf1"], kp["wf2"], kp["bf2"])
    return out.reshape(N, 10)


# ----------------------------------------------------------------------------
# Deterministic (PyTorch-default-style uniform) parameter init + plain-JAX reference
# ----------------------------------------------------------------------------
def init_params(key):
    ks = jax.random.split(key, 8)

    def u(k, shape, fan_in):
        bound = 1.0 / float(fan_in) ** 0.5
        return jax.random.uniform(k, shape, jnp.float32, -bound, bound)

    return {
        "conv1_w": u(ks[0], (15, 3, 5, 5), 3 * 5 * 5),
        "conv1_b": u(ks[1], (15,), 3 * 5 * 5),
        "conv2_w": u(ks[2], (20, 15, 5, 5), 15 * 5 * 5),
        "conv2_b": u(ks[3], (20,), 15 * 5 * 5),
        "fc1_w":  u(ks[4], (500, 320), 320),   # PyTorch Linear layout (out, in)
        "fc1_b":  u(ks[5], (500,), 320),
        "fc2_w":  u(ks[6], (10, 500), 500),
        "fc2_b":  u(ks[7], (10,), 500),
    }


def net3_reference(x, p):
    """Plain JAX/XLA implementation of the PyTorch forward (eval mode), for checking."""
    hi = jax.lax.Precision.HIGHEST

    def conv(h, w, b):
        y = jax.lax.conv_general_dilated(h, w, (1, 1), "VALID",
                                         dimension_numbers=("NCHW", "OIHW", "NCHW"),
                                         precision=hi)
        return y + b[None, :, None, None]

    def pool2(h):
        return jax.lax.reduce_window(h, -jnp.inf, jax.lax.max,
                                     (1, 1, 2, 2), (1, 1, 2, 2), "VALID")

    h = jax.nn.relu(pool2(conv(x, p["conv1_w"], p["conv1_b"])))
    h = jax.nn.relu(pool2(conv(h, p["conv2_w"], p["conv2_b"])))
    h = h.reshape(h.shape[0], -1)                                   # == torch .view(-1, 320)
    h = jax.nn.relu(jnp.dot(h, p["fc1_w"].T, precision=hi) + p["fc1_b"])
    logits = jnp.dot(h, p["fc2_w"].T, precision=hi) + p["fc2_b"]
    return jax.nn.log_softmax(logits, axis=1)


if __name__ == "__main__":
    key = jax.random.PRNGKey(0)
    kparam, kx = jax.random.split(key)
    params = init_params(kparam)
    kernel_params = prepare_params(params)

    # 28x28 input is required by the fixed 320-dim flatten (20 * 4 * 4); batch = 2.
    x = jax.random.normal(kx, (2, 3, 28, 28), dtype=jnp.float32)

    fwd = jax.jit(net3_forward)
    out = fwd(x, kernel_params)
    jax.block_until_ready(out)

    ref = net3_reference(x, params)
    assert out.shape == (2, 10)
    assert bool(jnp.all(jnp.isfinite(out)))
    # rows of exp(log_softmax) must sum to 1
    assert bool(jnp.all(jnp.abs(jnp.sum(jnp.exp(out), axis=1) - 1.0) < 1e-4))
    # and match the plain-JAX reference of the PyTorch forward
    assert bool(jnp.max(jnp.abs(out - ref)) < 5e-2)
    print("KERNEL_OK")
</pallas_src>

<mosaic_0001>
module attributes {stable_mosaic.version = 11 : i64} {
  func.func @net3_kernel(%arg0: i32, %arg1: memref<1x4x7x128xf32, #tpu.memory_space<vmem>>, %arg2: memref<2x640x256xf32, #tpu.memory_space<vmem>>, %arg3: memref<1x256xf32, #tpu.memory_space<vmem>>, %arg4: memref<2x1280x128xf32, #tpu.memory_space<vmem>>, %arg5: memref<1x128xf32, #tpu.memory_space<vmem>>, %arg6: memref<512x500xf32, #tpu.memory_space<vmem>>, %arg7: memref<1x500xf32, #tpu.memory_space<vmem>>, %arg8: memref<500x10xf32, #tpu.memory_space<vmem>>, %arg9: memref<1x10xf32, #tpu.memory_space<vmem>>, %arg10: memref<1x1x10xf32, #tpu.memory_space<vmem>>, %arg11: memref<2x6x256xf32, #tpu.memory_space<vmem>>) attributes {dimension_semantics = [#tpu.dimension_semantics<parallel>], iteration_bounds = array<i64: 2>, scalar_prefetch = 0 : i64, scratch_operands = 1 : i64, tpu.core_type = #tpu.core_type<tc>, window_params = [{transform_indices = @transform_0, window_bounds = array<i64: 1, 4, 7, 128>}, {pipeline_mode = #tpu.pipeline_mode<synchronous>, transform_indices = @transform_1, window_bounds = array<i64: 2, 640, 256>}, {pipeline_mode = #tpu.pipeline_mode<synchronous>, transform_indices = @transform_2, window_bounds = array<i64: 1, 256>}, {pipeline_mode = #tpu.pipeline_mode<synchronous>, transform_indices = @transform_3, window_bounds = array<i64: 2, 1280, 128>}, {pipeline_mode = #tpu.pipeline_mode<synchronous>, transform_indices = @transform_4, window_bounds = array<i64: 1, 128>}, {pipeline_mode = #tpu.pipeline_mode<synchronous>, transform_indices = @transform_5, window_bounds = array<i64: 512, 500>}, {pipeline_mode = #tpu.pipeline_mode<synchronous>, transform_indices = @transform_6, window_bounds = array<i64: 1, 500>}, {pipeline_mode = #tpu.pipeline_mode<synchronous>, transform_indices = @transform_7, window_bounds = array<i64: 500, 10>}, {pipeline_mode = #tpu.pipeline_mode<synchronous>, transform_indices = @transform_8, window_bounds = array<i64: 1, 10>}, {transform_indices = @transform_9, window_bounds = array<i64: 1, 1, 10>}]} {
    %c0 = arith.constant 0 : index
    %c0_0 = arith.constant 0 : index
    %0 = vector.load %arg3[%c0, %c0_0] : memref<1x256xf32, #tpu.memory_space<vmem>>, vector<1x256xf32>
    %c0_1 = arith.constant 0 : index
    %c0_2 = arith.constant 0 : index
    %c0_3 = arith.constant 0 : index
    %c0_4 = arith.constant 0 : index
    %1 = vector.load %arg1[%c0_1, %c0_2, %c0_3, %c0_4] : memref<1x4x7x128xf32, #tpu.memory_space<vmem>>, vector<1x1x6x128xf32>
    %2 = vector.shape_cast %1 : vector<1x1x6x128xf32> to vector<6x128xf32>
    %c0_5 = arith.constant 0 : index
    %c1 = arith.constant 1 : index
    %c0_6 = arith.constant 0 : index
    %c0_7 = arith.constant 0 : index
    %3 = vector.load %arg1[%c0_5, %c1, %c0_6, %c0_7] : memref<1x4x7x128xf32, #tpu.memory_space<vmem>>, vector<1x1x6x128xf32>
    %4 = vector.shape_cast %3 : vector<1x1x6x128xf32> to vector<6x128xf32>
    %c0_8 = arith.constant 0 : index
    %c2 = arith.constant 2 : index
    %c0_9 = arith.constant 0 : index
    %c0_10 = arith.constant 0 : index
    %5 = vector.load %arg1[%c0_8, %c2, %c0_9, %c0_10] : memref<1x4x7x128xf32, #tpu.memory_space<vmem>>, vector<1x1x6x128xf32>
    %6 = vector.shape_cast %5 : vector<1x1x6x128xf32> to vector<6x128xf32>
    %c0_11 = arith.constant 0 : index
    %c3 = arith.constant 3 : index
    %c0_12 = arith.constant 0 : index
    %c0_13 = arith.constant 0 : index
    %7 = vector.load %arg1[%c0_11, %c3, %c0_12, %c0_13] : memref<1x4x7x128xf32, #tpu.memory_space<vmem>>, vector<1x1x6x128xf32>
    %8 = vector.shape_cast %7 : vector<1x1x6x128xf32> to vector<6x128xf32>
    %c0_14 = arith.constant 0 : index
    %c0_15 = arith.constant 0 : index
    %c1_16 = arith.constant 1 : index
    %c0_17 = arith.constant 0 : index
    %9 = vector.load %arg1[%c0_14, %c0_15, %c1_16, %c0_17] : memref<1x4x7x128xf32, #tpu.memory_space<vmem>>, vector<1x1x6x128xf32>
    %10 = vector.shape_cast %9 : vector<1x1x6x128xf32> to vector<6x128xf32>
    %11 = tpu.concatenate %2, %4, %6, %8, %10 in 1 : vector<6x128xf32>, vector<6x128xf32>, vector<6x128xf32>, vector<6x128xf32>, vector<6x128xf32> -> vector<6x640xf32>
    %c0_18 = arith.constant 0 : index
    %c1_19 = arith.constant 1 : index
    %c0_20 = arith.constant 0 : index
    %c0_21 = arith.constant 0 : index
    %12 = vector.load %arg1[%c0_18, %c1_19, %c0_20, %c0_21] : memref<1x4x7x128xf32, #tpu.memory_space<vmem>>, vector<1x1x6x128xf32>
    %13 = vector.shape_cast %12 : vector<1x1x6x128xf32> to vector<6x128xf32>
    %c0_22 = arith.constant 0 : index
    %c2_23 = arith.constant 2 : index
    %c0_24 = arith.constant 0 : index
    %c0_25 = arith.constant 0 : index
    %14 = vector.load %arg1[%c0_22, %c2_23, %c0_24, %c0_25] : memref<1x4x7x128xf32, #tpu.memory_space<vmem>>, vector<1x1x6x128xf32>
    %15 = vector.shape_cast %14 : vector<1x1x6x128xf32> to vector<6x128xf32>
    %c0_26 = arith.constant 0 : index
    %c3_27 = arith.constant 3 : index
    %c0_28 = arith.constant 0 : index
    %c0_29 = arith.constant 0 : index
    %16 = vector.load %arg1[%c0_26, %c3_27, %c0_28, %c0_29] : memref<1x4x7x128xf32, #tpu.memory_space<vmem>>, vector<1x1x6x128xf32>
    %17 = vector.shape_cast %16 : vector<1x1x6x128xf32> to vector<6x128xf32>
    %c0_30 = arith.constant 0 : index
    %c0_31 = arith.constant 0 : index
    %c1_32 = arith.constant 1 : index
    %c0_33 = arith.constant 0 : index
    %18 = vector.load %arg1[%c0_30, %c0_31, %c1_32, %c0_33] : memref<1x4x7x128xf32, #tpu.memory_space<vmem>>, vector<1x1x6x128xf32>
    %19 = vector.shape_cast %18 : vector<1x1x6x128xf32> to vector<6x128xf32>
    %c0_34 = arith.constant 0 : index
    %c1_35 = arith.constant 1 : index
    %c1_36 = arith.constant 1 : index
    %c0_37 = arith.constant 0 : index
    %20 = vector.load %arg1[%c0_34, %c1_35, %c1_36, %c0_37] : memref<1x4x7x128xf32, #tpu.memory_space<vmem>>, vector<1x1x6x128xf32>
    %21 = vector.shape_cast %20 : vector<1x1x6x128xf32> to vector<6x128xf32>
    %22 = tpu.concatenate %13, %15, %17, %19, %21 in 1 : vector<6x128xf32>, vector<6x128xf32>, vector<6x128xf32>, vector<6x128xf32>, vector<6x128xf32> -> vector<6x640xf32>
    %c0_38 = arith.constant 0 : index
    %c0_39 = arith.constant 0 : index
    %c0_40 = arith.constant 0 : index
    %23 = vector.load %arg2[%c0_38, %c0_39, %c0_40] : memref<2x640x256xf32, #tpu.memory_space<vmem>>, vector<1x640x256xf32>
    %24 = vector.shape_cast %23 : vector<1x640x256xf32> to vector<640x256xf32>
    %c1_41 = arith.constant 1 : index
    %c0_42 = arith.constant 0 : index
    %c0_43 = arith.constant 0 : index
    %25 = vector.load %arg2[%c1_41, %c0_42, %c0_43] : memref<2x640x256xf32, #tpu.memory_space<vmem>>, vector<1x640x256xf32>
    %26 = vector.shape_cast %25 : vector<1x640x256xf32> to vector<640x256xf32>
    %cst = arith.constant dense<0.000000e+00> : vector<6x256xf32>
    %27 = tpu.matmul %11, %24, %cst {dimension_numbers = #tpu.dot_dimension_numbers<[1], [0], [0], [1], [0, 0, 1, 1], [], []>} : vector<6x640xf32>, vector<640x256xf32>, vector<6x256xf32> -> vector<6x256xf32>
    %cst_44 = arith.constant dense<0.000000e+00> : vector<6x256xf32>
    %28 = tpu.matmul %11, %26, %cst_44 {dimension_numbers = #tpu.dot_dimension_numbers<[1], [0], [0], [1], [0, 0, 1, 1], [], []>} : vector<6x640xf32>, vector<640x256xf32>, vector<6x256xf32> -> vector<6x256xf32>
    %cst_45 = arith.constant dense<0.000000e+00> : vector<6x256xf32>
    %29 = tpu.matmul %22, %24, %cst_45 {dimension_numbers = #tpu.dot_dimension_numbers<[1], [0], [0], [1], [0, 0, 1, 1], [], []>} : vector<6x640xf32>, vector<640x256xf32>, vector<6x256xf32> -> vector<6x256xf32>
    %cst_46 = arith.constant dense<0.000000e+00> : vector<6x256xf32>
    %30 = tpu.matmul %22, %26, %cst_46 {dimension_numbers = #tpu.dot_dimension_numbers<[1], [0], [0], [1], [0, 0, 1, 1], [], []>} : vector<6x640xf32>, vector<640x256xf32>, vector<6x256xf32> -> vector<6x256xf32>
    %31 = arith.maximumf %27, %28 : vector<6x256xf32>
    %32 = arith.maximumf %29, %30 : vector<6x256xf32>
    %33 = arith.maximumf %31, %32 : vector<6x256xf32>
    %34 = vector.broadcast %0 : vector<1x256xf32> to vector<6x256xf32>
    %35 = arith.addf %33, %34 : vector<6x256xf32>
    %cst_47 = arith.constant 0.000000e+00 : f32
    %36 = vector.broadcast %cst_47 : f32 to vector<6x256xf32>
    %37 = arith.maximumf %35, %36 : vector<6x256xf32>
    %c0_48 = arith.constant 0 : index
    %c0_49 = arith.constant 0 : index
    %c0_50 = arith.constant 0 : index
    %38 = vector.load %arg11[%c0_48, %c0_49, %c0_50] : memref<2x6x256xf32, #tpu.memory_space<vmem>>, vector<1x6x256xf32>
    %39 = vector.shape_cast %38 : vector<1x6x256xf32> to vector<6x256xf32>
    %40 = vector.shape_cast %37 : vector<6x256xf32> to vector<1x6x256xf32>
    tpu.vector_store %arg11[%c0_48, %c0_49, %c0_50], %40 {strides = array<i32>} : memref<2x6x256xf32, #tpu.memory_space<vmem>>, vector<1x6x256xf32>,
    %c0_51 = arith.constant 0 : index
    %c0_52 = arith.constant 0 : index
    %41 = vector.load %arg3[%c0_51, %c0_52] : memref<1x256xf32, #tpu.memory_space<vmem>>, vector<1x256xf32>
    %c0_53 = arith.constant 0 : index
    %c2_54 = arith.constant 2 : index
    %c0_55 = arith.constant 0 : index
    %c0_56 = arith.constant 0 : index
    %42 = vector.load %arg1[%c0_53, %c2_54, %c0_55, %c0_56] : memref<1x4x7x128xf32, #tpu.memory_space<vmem>>, vector<1x1x6x128xf32>
    %43 = vector.shape_cast %42 : vector<1x1x6x128xf32> to vector<6x128xf32>
    %c0_57 = arith.constant 0 : index
    %c3_58 = arith.constant 3 : index
    %c0_59 = arith.constant 0 : index
    %c0_60 = arith.constant 0 : index
    %44 = vector.load %arg1[%c0_57, %c3_58, %c0_59, %c0_60] : memref<1x4x7x128xf32, #tpu.memory_space<vmem>>, vector<1x1x6x128xf32>
    %45 = vector.shape_cast %44 : vector<1x1x6x128xf32> to vector<6x128xf32>
    %c0_61 = arith.constant 0 : index
    %c0_62 = arith.constant 0 : index
    %c1_63 = arith.constant 1 : index
    %c0_64 = arith.constant 0 : index
    %46 = vector.load %arg1[%c0_61, %c0_62, %c1_63, %c0_64] : memref<1x4x7x128xf32, #tpu.memory_space<vmem>>, vector<1x1x6x128xf32>
    %47 = vector.shape_cast %46 : vector<1x1x6x128xf32> to vector<6x128xf32>
    %c0_65 = arith.constant 0 : index
    %c1_66 = arith.constant 1 : index
    %c1_67 = arith.constant 1 : index
    %c0_68 = arith.constant 0 : index
    %48 = vector.load %arg1[%c0_65, %c1_66, %c1_67, %c0_68] : memref<1x4x7x128xf32, #tpu.memory_space<vmem>>, vector<1x1x6x128xf32>
    %49 = vector.shape_cast %48 : vector<1x1x6x128xf32> to vector<6x128xf32>
    %c0_69 = arith.constant 0 : index
    %c2_70 = arith.constant 2 : index
    %c1_71 = arith.constant 1 : index
    %c0_72 = arith.constant 0 : index
    %50 = vector.load %arg1[%c0_69, %c2_70, %c1_71, %c0_72] : memref<1x4x7x128xf32, #tpu.memory_space<vmem>>, vector<1x1x6x128xf32>
    %51 = vector.shape_cast %50 : vector<1x1x6x128xf32> to vector<6x128xf32>
    %52 = tpu.concatenate %43, %45, %47, %49, %51 in 1 : vector<6x128xf32>, vector<6x128xf32>, vector<6x128xf32>, vector<6x128xf32>, vector<6x128xf32> -> vector<6x640xf32>
    %c0_73 = arith.constant 0 : index
    %c3_74 = arith.constant 3 : index
    %c0_75 = arith.constant 0 : index
    %c0_76 = arith.constant 0 : index
    %53 = vector.load %arg1[%c0_73, %c3_74, %c0_75, %c0_76] : memref<1x4x7x128xf32, #tpu.memory_space<vmem>>, vector<1x1x6x128xf32>
    %54 = vector.shape_cast %53 : vector<1x1x6x128xf32> to vector<6x128xf32>
    %c0_77 = arith.constant 0 : index
    %c0_78 = arith.constant 0 : index
    %c1_79 = arith.constant 1 : index
    %c0_80 = arith.constant 0 : index
    %55 = vector.load %arg1[%c0_77, %c0_78, %c1_79, %c0_80] : memref<1x4x7x128xf32, #tpu.memory_space<vmem>>, vector<1x1x6x128xf32>
    %56 = vector.shape_cast %55 : vector<1x1x6x128xf32> to vector<6x128xf32>
    %c0_81 = arith.constant 0 : index
    %c1_82 = arith.constant 1 : index
    %c1_83 = arith.constant 1 : index
    %c0_84 = arith.constant 0 : index
    %57 = vector.load %arg1[%c0_81, %c1_82, %c1_83, %c0_84] : memref<1x4x7x128xf32, #tpu.memory_space<vmem>>, vector<1x1x6x128xf32>
    %58 = vector.shape_cast %57 : vector<1x1x6x128xf32> to vector<6x128xf32>
    %c0_85 = arith.constant 0 : index
    %c2_86 = arith.constant 2 : index
    %c1_87 = arith.constant 1 : index
    %c0_88 = arith.constant 0 : index
    %59 = vector.load %arg1[%c0_85, %c2_86, %c1_87, %c0_88] : memref<1x4x7x128xf32, #tpu.memory_space<vmem>>, vector<1x1x6x128xf32>
    %60 = vector.shape_cast %59 : vector<1x1x6x128xf32> to vector<6x128xf32>
    %c0_89 = arith.constant 0 : index
    %c3_90 = arith.constant 3 : index
    %c1_91 = arith.constant 1 : index
    %c0_92 = arith.constant 0 : index
    %61 = vector.load %arg1[%c0_89, %c3_90, %c1_91, %c0_92] : memref<1x4x7x128xf32, #tpu.memory_space<vmem>>, vector<1x1x6x128xf32>
    %62 = vector.shape_cast %61 : vector<1x1x6x128xf32> to vector<6x128xf32>
    %63 = tpu.concatenate %54, %56, %58, %60, %62 in 1 : vector<6x128xf32>, vector<6x128xf32>, vector<6x128xf32>, vector<6x128xf32>, vector<6x128xf32> -> vector<6x640xf32>
    %c0_93 = arith.constant 0 : index
    %c0_94 = arith.constant 0 : index
    %c0_95 = arith.constant 0 : index
    %64 = vector.load %arg2[%c0_93, %c0_94, %c0_95] : memref<2x640x256xf32, #tpu.memory_space<vmem>>, vector<1x640x256xf32>
    %65 = vector.shape_cast %64 : vector<1x640x256xf32> to vector<640x256xf32>
    %c1_96 = arith.constant 1 : index
    %c0_97 = arith.constant 0 : index
    %c0_98 = arith.constant 0 : index
    %66 = vector.load %arg2[%c1_96, %c0_97, %c0_98] : memref<2x640x256xf32, #tpu.memory_space<vmem>>, vector<1x640x256xf32>
    %67 = vector.shape_cast %66 : vector<1x640x256xf32> to vector<640x256xf32>
    %cst_99 = arith.constant dense<0.000000e+00> : vector<6x256xf32>
    %68 = tpu.matmul %52, %65, %cst_99 {dimension_numbers = #tpu.dot_dimension_numbers<[1], [0], [0], [1], [0, 0, 1, 1], [], []>} : vector<6x640xf32>, vector<640x256xf32>, vector<6x256xf32> -> vector<6x256xf32>
    %cst_100 = arith.constant dense<0.000000e+00> : vector<6x256xf32>
    %69 = tpu.matmul %52, %67, %cst_100 {dimension_numbers = #tpu.dot_dimension_numbers<[1], [0], [0], [1], [0, 0, 1, 1], [], []>} : vector<6x640xf32>, vector<640x256xf32>, vector<6x256xf32> -> vector<6x256xf32>
    %cst_101 = arith.constant dense<0.000000e+00> : vector<6x256xf32>
    %70 = tpu.matmul %63, %65, %cst_101 {dimension_numbers = #tpu.dot_dimension_numbers<[1], [0], [0], [1], [0, 0, 1, 1], [], []>} : vector<6x640xf32>, vector<640x256xf32>, vector<6x256xf32> -> vector<6x256xf32>
    %cst_102 = arith.constant dense<0.000000e+00> : vector<6x256xf32>
    %71 = tpu.matmul %63, %67, %cst_102 {dimension_numbers = #tpu.dot_dimension_numbers<[1], [0], [0], [1], [0, 0, 1, 1], [], []>} : vector<6x640xf32>, vector<640x256xf32>, vector<6x256xf32> -> vector<6x256xf32>
    %72 = arith.maximumf %68, %69 : vector<6x256xf32>
    %73 = arith.maximumf %70, %71 : vector<6x256xf32>
    %74 = arith.maximumf %72, %73 : vector<6x256xf32>
    %75 = vector.broadcast %41 : vector<1x256xf32> to vector<6x256xf32>
    %76 = arith.addf %74, %75 : vector<6x256xf32>
    %cst_103 = arith.constant 0.000000e+00 : f32
    %77 = vector.broadcast %cst_103 : f32 to vector<6x256xf32>
    %78 = arith.maximumf %76, %77 : vector<6x256xf32>
    %c1_104 = arith.constant 1 : index
    %c0_105 = arith.constant 0 : index
    %c0_106 = arith.constant 0 : index
    %79 = vector.load %arg11[%c1_104, %c0_105, %c0_106] : memref<2x6x256xf32, #tpu.memory_space<vmem>>, vector<1x6x256xf32>
    %80 = vector.shape_cast %79 : vector<1x6x256xf32> to vector<6x256xf32>
    %81 = vector.shape_cast %78 : vector<6x256xf32> to vector<1x6x256xf32>
    tpu.vector_store %arg11[%c1_104, %c0_105, %c0_106], %81 {strides = array<i32>} : memref<2x6x256xf32, #tpu.memory_space<vmem>>, vector<1x6x256xf32>,
    %c0_107 = arith.constant 0 : index
    %c0_108 = arith.constant 0 : index
    %82 = vector.load %arg5[%c0_107, %c0_108] : memref<1x128xf32, #tpu.memory_space<vmem>>, vector<1x128xf32>
    %c0_109 = arith.constant 0 : index
    %c0_110 = arith.constant 0 : index
    %c0_111 = arith.constant 0 : index
    %83 = vector.load %arg11[%c0_109, %c0_110, %c0_111] : memref<2x6x256xf32, #tpu.memory_space<vmem>>, vector<1x4x256xf32>
    %84 = vector.shape_cast %83 : vector<1x4x256xf32> to vector<4x256xf32>
    %c1_112 = arith.constant 1 : index
    %c0_113 = arith.constant 0 : index
    %c0_114 = arith.constant 0 : index
    %85 = vector.load %arg11[%c1_112, %c0_113, %c0_114] : memref<2x6x256xf32, #tpu.memory_space<vmem>>, vector<1x4x256xf32>
    %86 = vector.shape_cast %85 : vector<1x4x256xf32> to vector<4x256xf32>
    %c0_115 = arith.constant 0 : index
    %c1_116 = arith.constant 1 : index
    %c0_117 = arith.constant 0 : index
    %87 = vector.load %arg11[%c0_115, %c1_116, %c0_117] : memref<2x6x256xf32, #tpu.memory_space<vmem>>, vector<1x4x256xf32>
    %88 = vector.shape_cast %87 : vector<1x4x256xf32> to vector<4x256xf32>
    %c1_118 = arith.constant 1 : index
    %c1_119 = arith.constant 1 : index
    %c0_120 = arith.constant 0 : index
    %89 = vector.load %arg11[%c1_118, %c1_119, %c0_120] : memref<2x6x256xf32, #tpu.memory_space<vmem>>, vector<1x4x256xf32>
    %90 = vector.shape_cast %89 : vector<1x4x256xf32> to vector<4x256xf32>
    %c0_121 = arith.constant 0 : index
    %c2_122 = arith.constant 2 : index
    %c0_123 = arith.constant 0 : index
    %91 = vector.load %arg11[%c0_121, %c2_122, %c0_123] : memref<2x6x256xf32, #tpu.memory_space<vmem>>, vector<1x4x256xf32>
    %92 = vector.shape_cast %91 : vector<1x4x256xf32> to vector<4x256xf32>
    %93 = tpu.concatenate %84, %86, %88, %90, %92 in 1 : vector<4x256xf32>, vector<4x256xf32>, vector<4x256xf32>, vector<4x256xf32>, vector<4x256xf32> -> vector<4x1280xf32>
    %c1_124 = arith.constant 1 : index
    %c0_125 = arith.constant 0 : index
    %c0_126 = arith.constant 0 : index
    %94 = vector.load %arg11[%c1_124, %c0_125, %c0_126] : memref<2x6x256xf32, #tpu.memory_space<vmem>>, vector<1x4x256xf32>
    %95 = vector.shape_cast %94 : vector<1x4x256xf32> to vector<4x256xf32>
    %c0_127 = arith.constant 0 : index
    %c1_128 = arith.constant 1 : index
    %c0_129 = arith.constant 0 : index
    %96 = vector.load %arg11[%c0_127, %c1_128, %c0_129] : memref<2x6x256xf32, #tpu.memory_space<vmem>>, vector<1x4x256xf32>
    %97 = vector.shape_cast %96 : vector<1x4x256xf32> to vector<4x256xf32>
    %c1_130 = arith.constant 1 : index
    %c1_131 = arith.constant 1 : index
    %c0_132 = arith.constant 0 : index
    %98 = vector.load %arg11[%c1_130, %c1_131, %c0_132] : memref<2x6x256xf32, #tpu.memory_space<vmem>>, vector<1x4x256xf32>
    %99 = vector.shape_cast %98 : vector<1x4x256xf32> to vector<4x256xf32>
    %c0_133 = arith.constant 0 : index
    %c2_134 = arith.constant 2 : index
    %c0_135 = arith.constant 0 : index
    %100 = vector.load %arg11[%c0_133, %c2_134, %c0_135] : memref<2x6x256xf32, #tpu.memory_space<vmem>>, vector<1x4x256xf32>
    %101 = vector.shape_cast %100 : vector<1x4x256xf32> to vector<4x256xf32>
    %c1_136 = arith.constant 1 : index
    %c2_137 = arith.constant 2 : index
    %c0_138 = arith.constant 0 : index
    %102 = vector.load %arg11[%c1_136, %c2_137, %c0_138] : memref<2x6x256xf32, #tpu.memory_space<vmem>>, vector<1x4x256xf32>
    %103 = vector.shape_cast %102 : vector<1x4x256xf32> to vector<4x256xf32>
    %104 = tpu.concatenate %95, %97, %99, %101, %103 in 1 : vector<4x256xf32>, vector<4x256xf32>, vector<4x256xf32>, vector<4x256xf32>, vector<4x256xf32> -> vector<4x1280xf32>
    %c0_139 = arith.constant 0 : index
    %c0_140 = arith.constant 0 : index
    %c0_141 = arith.constant 0 : index
    %105 = vector.load %arg4[%c0_139, %c0_140, %c0_141] : memref<2x1280x128xf32, #tpu.memory_space<vmem>>, vector<1x1280x128xf32>
    %106 = vector.shape_cast %105 : vector<1x1280x128xf32> to vector<1280x128xf32>
    %c1_142 = arith.constant 1 : index
    %c0_143 = arith.constant 0 : index
    %c0_144 = arith.constant 0 : index
    %107 = vector.load %arg4[%c1_142, %c0_143, %c0_144] : memref<2x1280x128xf32, #tpu.memory_space<vmem>>, vector<1x1280x128xf32>
    %108 = vector.shape_cast %107 : vector<1x1280x128xf32> to vector<1280x128xf32>
    %cst_145 = arith.constant dense<0.000000e+00> : vector<4x128xf32>
    %109 = tpu.matmul %93, %106, %cst_145 {dimension_numbers = #tpu.dot_dimension_numbers<[1], [0], [0], [1], [0, 0, 1, 1], [], []>} : vector<4x1280xf32>, vector<1280x128xf32>, vector<4x128xf32> -> vector<4x128xf32>
    %cst_146 = arith.constant dense<0.000000e+00> : vector<4x128xf32>
    %110 = tpu.matmul %93, %108, %cst_146 {dimension_numbers = #tpu.dot_dimension_numbers<[1], [0], [0], [1], [0, 0, 1, 1], [], []>} : vector<4x1280xf32>, vector<1280x128xf32>, vector<4x128xf32> -> vector<4x128xf32>
    %cst_147 = arith.constant dense<0.000000e+00> : vector<4x128xf32>
    %111 = tpu.matmul %104, %106, %cst_147 {dimension_numbers = #tpu.dot_dimension_numbers<[1], [0], [0], [1], [0, 0, 1, 1], [], []>} : vector<4x1280xf32>, vector<1280x128xf32>, vector<4x128xf32> -> vector<4x128xf32>
    %cst_148 = arith.constant dense<0.000000e+00> : vector<4x128xf32>
    %112 = tpu.matmul %104, %108, %cst_148 {dimension_numbers = #tpu.dot_dimension_numbers<[1], [0], [0], [1], [0, 0, 1, 1], [], []>} : vector<4x1280xf32>, vector<1280x128xf32>, vector<4x128xf32> -> vector<4x128xf32>
    %113 = arith.maximumf %109, %110 : vector<4x128xf32>
    %114 = arith.maximumf %111, %112 : vector<4x128xf32>
    %115 = arith.maximumf %113, %114 : vector<4x128xf32>
    %116 = vector.broadcast %82 : vector<1x128xf32> to vector<4x128xf32>
    %117 = arith.addf %115, %116 : vector<4x128xf32>
    %cst_149 = arith.constant 0.000000e+00 : f32
    %118 = vector.broadcast %cst_149 : f32 to vector<4x128xf32>
    %119 = arith.maximumf %117, %118 : vector<4x128xf32>
    %120 = vector.extract_strided_slice %119 {offsets = [0, 0], sizes = [1, 128], strides = [1, 1]} : vector<4x128xf32> to vector<1x128xf32>
    %121 = vector.extract_strided_slice %119 {offsets = [1, 0], sizes = [1, 128], strides = [1, 1]} : vector<4x128xf32> to vector<1x128xf32>
    %122 = vector.extract_strided_slice %119 {offsets = [2, 0], sizes = [1, 128], strides = [1, 1]} : vector<4x128xf32> to vector<1x128xf32>
    %123 = vector.extract_strided_slice %119 {offsets = [3, 0], sizes = [1, 128], strides = [1, 1]} : vector<4x128xf32> to vector<1x128xf32>
    %124 = tpu.concatenate %120, %121, %122, %123 in 1 : vector<1x128xf32>, vector<1x128xf32>, vector<1x128xf32>, vector<1x128xf32> -> vector<1x512xf32>
    %c0_150 = arith.constant 0 : index
    %c0_151 = arith.constant 0 : index
    %125 = vector.load %arg6[%c0_150, %c0_151] : memref<512x500xf32, #tpu.memory_space<vmem>>, vector<512x500xf32>
    %cst_152 = arith.constant dense<0.000000e+00> : vector<1x500xf32>
    %126 = tpu.matmul %124, %125, %cst_152 {dimension_numbers = #tpu.dot_dimension_numbers<[1], [0], [0], [1], [0, 0, 1, 1], [], []>} : vector<1x512xf32>, vector<512x500xf32>, vector<1x500xf32> -> vector<1x500xf32>
    %c0_153 = arith.constant 0 : index
    %c0_154 = arith.constant 0 : index
    %127 = vector.load %arg7[%c0_153, %c0_154] : memref<1x500xf32, #tpu.memory_space<vmem>>, vector<1x500xf32>
    %128 = arith.addf %126, %127 : vector<1x500xf32>
    %cst_155 = arith.constant 0.000000e+00 : f32
    %129 = vector.broadcast %cst_155 : f32 to vector<1x500xf32>
    %130 = arith.maximumf %128, %129 : vector<1x500xf32>
    %c0_156 = arith.constant 0 : index
    %c0_157 = arith.constant 0 : index
    %131 = vector.load %arg8[%c0_156, %c0_157] : memref<500x10xf32, #tpu.memory_space<vmem>>, vector<500x10xf32>
    %cst_158 = arith.constant dense<0.000000e+00> : vector<1x10xf32>
    %132 = tpu.matmul %130, %131, %cst_158 {dimension_numbers = #tpu.dot_dimension_numbers<[1], [0], [0], [1], [0, 0, 1, 1], [], []>} : vector<1x500xf32>, vector<500x10xf32>, vector<1x10xf32> -> vector<1x10xf32>
    %c0_159 = arith.constant 0 : index
    %c0_160 = arith.constant 0 : index
    %133 = vector.load %arg9[%c0_159, %c0_160] : memref<1x10xf32, #tpu.memory_space<vmem>>, vector<1x10xf32>
    %134 = arith.addf %132, %133 : vector<1x10xf32>
    %cst_161 = arith.constant dense<0xFF800000> : vector<1xf32>
    %135 = vector.multi_reduction <maximumf>, %134, %cst_161 [1] : vector<1x10xf32> to vector<1xf32>
    %136 = vector.shape_cast %135 : vector<1xf32> to vector<1x1xf32>
    %137 = vector.broadcast %136 : vector<1x1xf32> to vector<1x10xf32>
    %138 = arith.subf %134, %137 : vector<1x10xf32>
    %139 = math.exp %138 : vector<1x10xf32>
    %cst_162 = arith.constant dense<0.000000e+00> : vector<1xf32>
    %140 = vector.multi_reduction <add>, %139, %cst_162 [1] : vector<1x10xf32> to vector<1xf32>
    %141 = vector.shape_cast %140 : vector<1xf32> to vector<1x1xf32>
    %142 = math.log %141 : vector<1x1xf32>
    %143 = vector.broadcast %142 : vector<1x1xf32> to vector<1x10xf32>
    %144 = arith.subf %138, %143 : vector<1x10xf32>
    %c0_163 = arith.constant 0 : index
    %c0_164 = arith.constant 0 : index
    %c0_165 = arith.constant 0 : index
    %145 = vector.load %arg10[%c0_163, %c0_164, %c0_165] : memref<1x1x10xf32, #tpu.memory_space<vmem>>, vector<1x1x10xf32>
    %146 = vector.shape_cast %145 : vector<1x1x10xf32> to vector<1x10xf32>
    %147 = vector.shape_cast %144 : vector<1x10xf32> to vector<1x1x10xf32>
    tpu.vector_store %arg10[%c0_163, %c0_164, %c0_165], %147 {strides = array<i32>} : memref<1x1x10xf32, #tpu.memory_space<vmem>>, vector<1x1x10xf32>,
    return
  }
  func.func @transform_0(%arg0: i32) -> (i32, i32, i32, i32) {
    %c0_i32 = arith.constant 0 : i32
    %c0_i32_0 = arith.constant 0 : i32
    %c0_i32_1 = arith.constant 0 : i32
    %c0_i32_2 = arith.constant 0 : i32
    return %arg0, %c0_i32, %c0_i32_0, %c0_i32_1 : i32, i32, i32, i32
  }
  func.func @transform_1(%arg0: i32) -> (i32, i32, i32) {
    %c0_i32 = arith.constant 0 : i32
    %c0_i32_0 = arith.constant 0 : i32
    %c0_i32_1 = arith.constant 0 : i32
    %c0_i32_2 = arith.constant 0 : i32
    return %c0_i32, %c0_i32_0, %c0_i32_1 : i32, i32, i32
  }
  func.func @transform_2(%arg0: i32) -> (i32, i32) {
    %c0_i32 = arith.constant 0 : i32
    %c0_i32_0 = arith.constant 0 : i32
    %c0_i32_1 = arith.constant 0 : i32
    return %c0_i32, %c0_i32_0 : i32, i32
  }
  func.func @transform_3(%arg0: i32) -> (i32, i32, i32) {
    %c0_i32 = arith.constant 0 : i32
    %c0_i32_0 = arith.constant 0 : i32
    %c0_i32_1 = arith.constant 0 : i32
    %c0_i32_2 = arith.constant 0 : i32
    return %c0_i32, %c0_i32_0, %c0_i32_1 : i32, i32, i32
  }
  func.func @transform_4(%arg0: i32) -> (i32, i32) {
    %c0_i32 = arith.constant 0 : i32
    %c0_i32_0 = arith.constant 0 : i32
    %c0_i32_1 = arith.constant 0 : i32
    return %c0_i32, %c0_i32_0 : i32, i32
  }
  func.func @transform_5(%arg0: i32) -> (i32, i32) {
    %c0_i32 = arith.constant 0 : i32
    %c0_i32_0 = arith.constant 0 : i32
    %c0_i32_1 = arith.constant 0 : i32
    return %c0_i32, %c0_i32_0 : i32, i32
  }
  func.func @transform_6(%arg0: i32) -> (i32, i32) {
    %c0_i32 = arith.constant 0 : i32
    %c0_i32_0 = arith.constant 0 : i32
    %c0_i32_1 = arith.constant 0 : i32
    return %c0_i32, %c0_i32_0 : i32, i32
  }
  func.func @transform_7(%arg0: i32) -> (i32, i32) {
    %c0_i32 = arith.constant 0 : i32
    %c0_i32_0 = arith.constant 0 : i32
    %c0_i32_1 = arith.constant 0 : i32
    return %c0_i32, %c0_i32_0 : i32, i32
  }
  func.func @transform_8(%arg0: i32) -> (i32, i32) {
    %c0_i32 = arith.constant 0 : i32
    %c0_i32_0 = arith.constant 0 : i32
    %c0_i32_1 = arith.constant 0 : i32
    return %c0_i32, %c0_i32_0 : i32, i32
  }
  func.func @transform_9(%arg0: i32) -> (i32, i32, i32) {
    %c0_i32 = arith.constant 0 : i32
    %c0_i32_0 = arith.constant 0 : i32
    %c0_i32_1 = arith.constant 0 : i32
    return %arg0, %c0_i32, %c0_i32_0 : i32, i32, i32
  }
}

</mosaic_0001>

<llo_original>
// kernel: net3_forward.1
$region0: #{net3_forward.1}
  #allocation0 [shape = 'u32[]', space=smem, size = 0x4, offset = 0x4, fixed_abs, tag = 'smem constant byte address 0x4 - core index']
  #allocation1 [shape = 'u32[72,128]{1,0:T(1,128)}', space=vmem, size = 0x9000, scoped, tag = 'internal scratch']
  #allocation2 [shape = 'f32[2,6,256]{2,1,0:T(8,128)}', space=vmem, size = 0x4000, scoped, tag = 'scratch operand']
  %s0 = inlined_call_operand.vmem [shape: f32[2,4,7,128], index: 0, kind: input, shape index: {}]
  %s1 = inlined_call_operand.vmem [shape: f32[2,640,256], index: 1, kind: input, shape index: {}]
  %s2 = inlined_call_operand.vmem [shape: f32[1,256], index: 2, kind: input, shape index: {}]
  %s3 = inlined_call_operand.vmem [shape: f32[2,1280,128], index: 3, kind: input, shape index: {}]
  %s4 = inlined_call_operand.vmem [shape: f32[1,128], index: 4, kind: input, shape index: {}]
  %s5 = inlined_call_operand.vmem [shape: f32[512,500], index: 5, kind: input, shape index: {}]
  %s6 = inlined_call_operand.vmem [shape: f32[1,500], index: 6, kind: input, shape index: {}]
  %s7 = inlined_call_operand.vmem [shape: f32[500,10], index: 7, kind: input, shape index: {}]
  %s8 = inlined_call_operand.vmem [shape: f32[1,10], index: 8, kind: input, shape index: {}]
  %s9 = inlined_call_operand.hbm [shape: f32[2,1,10], index: 9, kind: output, shape index: {}]
  %s10 = sld [smem:[#allocation0]]
  $region69: #{net3_forward.1} parent=0
    _
  %s12 = ssub.s32 1, %s10
  %s13 = scalar_select 0, %s12, %s10
  $region1: #{net3_forward.1} parent=0
    #allocation3 [shape = 'u8[1024]{0}', space=vmem, size = 0x400, scoped, tag = 'output window, operand 0']
    #allocation4 [shape = 's32[2]{0}', space=sflag, size = 0x8, scoped, tag = 'scoped memory for net3_forward.1']
    %14 = vsyncpa [#allocation4], 0
    %s15 = scalar_lea.sflag [#allocation4], 1
    %16 = vsyncpa %s15, 0
    loop: start=0, step=1, limit=4
    $region2: #{net3_forward.1} parent=1 // loop_pre_header
      _
    $region3: #{net3_forward.1} parent=1 // loop_header
      %s18 = sphi 0, %s22
      %p19 = scmp.ge.s32.totalorder %s18, 4
      %s28 = sphi 0, %s30
      %s31 = sphi 0, %s28
      %s32 = sphi 0, %s31
      %s48 = sphi 0, %s32
      %s52 = sphi 0, %s52
      %s54 = sphi 0, %s52
      %s55 = sphi 0, %s54
      %s69 = sphi 0, %s55
      %s73 = sphi 0, %s73
      %s75 = sphi 0, %s73
      %s76 = sphi 0, %s75
      %s90 = sphi 0, %s76
      %s94 = sphi 0, %s94
      %s96 = sphi 0, %s94
      %s97 = sphi 0, %s96
      %s111 = sphi 0, %s97
      %s115 = sphi 0, %s115
      %s117 = sphi 0, %s115
      %s118 = sphi 0, %s117
      %s132 = sphi 0, %s118
      %s136 = sphi 0, %s136
      %s138 = sphi 0, %s136
      %s139 = sphi 0, %s138
      %s153 = sphi 0, %s139
      %s157 = sphi 0, %s157
      %s159 = sphi 0, %s157
      %s160 = sphi 0, %s159
      %s174 = sphi 0, %s160
      %s178 = sphi 0, %s178
      %s180 = sphi 0, %s178
      %s181 = sphi 0, %s180
      %s195 = sphi 0, %s181
      %s199 = sphi 0, %s199
      %s201 = sphi 0, %s199
      %s202 = sphi 0, %s201
      %s216 = sphi 0, %s202
      %s222 = sphi 0, %s224
      %s225 = sphi 0, %s222
      %s226 = sphi 0, %s225
      %s242 = sphi 0, %s226
    $region4: #{net3_forward.1} parent=1 // loop_header_branch
      %21 = sbr.rel (%p19) target = $region8
    $region5: #{net3_forward.1} parent=1 // loop_body
      %s23 = ssub.s32 %s18, 1
      %s24 = ssub.s32 %s18, 2
      %s25 = sadd.s32 %s18, 1
      %s26 = ssub.s32 %s18, %s25
      %p27 = scmp.eq.s32.totalorder %s26, 0
      %s29 = sadd.s32 %s28, 1
      %s30 = scalar_select %p27, %s28, %s29
      %p33 = pneg %p27
      %p34 = scmp.eq.s32.totalorder %s18, 1
      %p35 = por %p33, %p34
      %p36 = scmp.ne.s32.totalorder %s28, %s31
      %p37 = scmp.eq.s32.totalorder %s18, 0
      %p38 = por %p36, %p37
      %p39 = scmp.ne.s32.totalorder %s28, %s31
      %p40 = scmp.eq.s32.totalorder %s23, 1
      %p41 = por %p39, %p40
      %p42 = scmp.ne.s32.totalorder %s31, %s32
      %p43 = scmp.eq.s32.totalorder %s23, 0
      %p44 = por %p42, %p43
      %p45 = scmp.ne.s32.totalorder %s31, %s32
      %p46 = scmp.eq.s32.totalorder %s24, 1
      %p47 = por %p45, %p46
      %p49 = scmp.ne.s32.totalorder %s32, %s48
      %p50 = scmp.eq.s32.totalorder %s24, 0
      %p51 = por %p49, %p50
      %s53 = sadd.s32 %s52, 1
      %p56 = scmp.eq.s32.totalorder %s18, 1
      %p57 = scmp.ne.s32.totalorder %s52, %s54
      %p58 = scmp.eq.s32.totalorder %s18, 0
      %p59 = por %p57, %p58
      %p60 = scmp.ne.s32.totalorder %s52, %s54
      %p61 = scmp.eq.s32.totalorder %s23, 1
      %p62 = por %p60, %p61
      %p63 = scmp.ne.s32.totalorder %s54, %s55
      %p64 = scmp.eq.s32.totalorder %s23, 0
      %p65 = por %p63, %p64
      %p66 = scmp.ne.s32.totalorder %s54, %s55
      %p67 = scmp.eq.s32.totalorder %s24, 1
      %p68 = por %p66, %p67
      %p70 = scmp.ne.s32.totalorder %s55, %s69
      %p71 = scmp.eq.s32.totalorder %s24, 0
      %p72 = por %p70, %p71
      %s74 = sadd.s32 %s73, 1
      %p77 = scmp.eq.s32.totalorder %s18, 1
      %p78 = scmp.ne.s32.totalorder %s73, %s75
      %p79 = scmp.eq.s32.totalorder %s18, 0
      %p80 = por %p78, %p79
      %p81 = scmp.ne.s32.totalorder %s73, %s75
      %p82 = scmp.eq.s32.totalorder %s23, 1
      %p83 = por %p81, %p82
      %p84 = scmp.ne.s32.totalorder %s75, %s76
      %p85 = scmp.eq.s32.totalorder %s23, 0
      %p86 = por %p84, %p85
      %p87 = scmp.ne.s32.totalorder %s75, %s76
      %p88 = scmp.eq.s32.totalorder %s24, 1
      %p89 = por %p87, %p88
      %p91 = scmp.ne.s32.totalorder %s76, %s90
      %p92 = scmp.eq.s32.totalorder %s24, 0
      %p93 = por %p91, %p92
      %s95 = sadd.s32 %s94, 1
      %p98 = scmp.eq.s32.totalorder %s18, 1
      %p99 = scmp.ne.s32.totalorder %s94, %s96
      %p100 = scmp.eq.s32.totalorder %s18, 0
      %p101 = por %p99, %p100
      %p102 = scmp.ne.s32.totalorder %s94, %s96
      %p103 = scmp.eq.s32.totalorder %s23, 1
      %p104 = por %p102, %p103
      %p105 = scmp.ne.s32.totalorder %s96, %s97
      %p106 = scmp.eq.s32.totalorder %s23, 0
      %p107 = por %p105, %p106
      %p108 = scmp.ne.s32.totalorder %s96, %s97
      %p109 = scmp.eq.s32.totalorder %s24, 1
      %p110 = por %p108, %p109
      %p112 = scmp.ne.s32.totalorder %s97, %s111
      %p113 = scmp.eq.s32.totalorder %s24, 0
      %p114 = por %p112, %p113
      %s116 = sadd.s32 %s115, 1
      %p119 = scmp.eq.s32.totalorder %s18, 1
      %p120 = scmp.ne.s32.totalorder %s115, %s117
      %p121 = scmp.eq.s32.totalorder %s18, 0
      %p122 = por %p120, %p121
      %p123 = scmp.ne.s32.totalorder %s115, %s117
      %p124 = scmp.eq.s32.totalorder %s23, 1
      %p125 = por %p123, %p124
      %p126 = scmp.ne.s32.totalorder %s117, %s118
      %p127 = scmp.eq.s32.totalorder %s23, 0
      %p128 = por %p126, %p127
      %p129 = scmp.ne.s32.totalorder %s117, %s118
      %p130 = scmp.eq.s32.totalorder %s24, 1
      %p131 = por %p129, %p130
      %p133 = scmp.ne.s32.totalorder %s118, %s132
      %p134 = scmp.eq.s32.totalorder %s24, 0
      %p135 = por %p133, %p134
      %s137 = sadd.s32 %s136, 1
      %p140 = scmp.eq.s32.totalorder %s18, 1
      %p141 = scmp.ne.s32.totalorder %s136, %s138
      %p142 = scmp.eq.s32.totalorder %s18, 0
      %p143 = por %p141, %p142
      %p144 = scmp.ne.s32.totalorder %s136, %s138
      %p145 = scmp.eq.s32.totalorder %s23, 1
      %p146 = por %p144, %p145
      %p147 = scmp.ne.s32.totalorder %s138, %s139
      %p148 = scmp.eq.s32.totalorder %s23, 0
      %p149 = por %p147, %p148
      %p150 = scmp.ne.s32.totalorder %s138, %s139
      %p151 = scmp.eq.s32.totalorder %s24, 1
      %p152 = por %p150, %p151
      %p154 = scmp.ne.s32.totalorder %s139, %s153
      %p155 = scmp.eq.s32.totalorder %s24, 0
      %p156 = por %p154, %p155
      %s158 = sadd.s32 %s157, 1
      %p161 = scmp.eq.s32.totalorder %s18, 1
      %p162 = scmp.ne.s32.totalorder %s157, %s159
      %p163 = scmp.eq.s32.totalorder %s18, 0
      %p164 = por %p162, %p163
      %p165 = scmp.ne.s32.totalorder %s157, %s159
      %p166 = scmp.eq.s32.totalorder %s23, 1
      %p167 = por %p165, %p166
      %p168 = scmp.ne.s32.totalorder %s159, %s160
      %p169 = scmp.eq.s32.totalorder %s23, 0
      %p170 = por %p168, %p169
      %p171 = scmp.ne.s32.totalorder %s159, %s160
      %p172 = scmp.eq.s32.totalorder %s24, 1
      %p173 = por %p171, %p172
      %p175 = scmp.ne.s32.totalorder %s160, %s174
      %p176 = scmp.eq.s32.totalorder %s24, 0
      %p177 = por %p175, %p176
      %s179 = sadd.s32 %s178, 1
      %p182 = scmp.eq.s32.totalorder %s18, 1
      %p183 = scmp.ne.s32.totalorder %s178, %s180
      %p184 = scmp.eq.s32.totalorder %s18, 0
      %p185 = por %p183, %p184
      %p186 = scmp.ne.s32.totalorder %s178, %s180
      %p187 = scmp.eq.s32.totalorder %s23, 1
      %p188 = por %p186, %p187
      %p189 = scmp.ne.s32.totalorder %s180, %s181
      %p190 = scmp.eq.s32.totalorder %s23, 0
      %p191 = por %p189, %p190
      %p192 = scmp.ne.s32.totalorder %s180, %s181
      %p193 = scmp.eq.s32.totalorder %s24, 1
      %p194 = por %p192, %p193
      %p196 = scmp.ne.s32.totalorder %s181, %s195
      %p197 = scmp.eq.s32.totalorder %s24, 0
      %p198 = por %p196, %p197
      %s200 = sadd.s32 %s199, 1
      %p203 = scmp.eq.s32.totalorder %s18, 1
      %p204 = scmp.ne.s32.totalorder %s199, %s201
      %p205 = scmp.eq.s32.totalorder %s18, 0
      %p206 = por %p204, %p205
      %p207 = scmp.ne.s32.totalorder %s199, %s201
      %p208 = scmp.eq.s32.totalorder %s23, 1
      %p209 = por %p207, %p208
      %p210 = scmp.ne.s32.totalorder %s201, %s202
      %p211 = scmp.eq.s32.totalorder %s23, 0
      %p212 = por %p210, %p211
      %p213 = scmp.ne.s32.totalorder %s201, %s202
      %p214 = scmp.eq.s32.totalorder %s24, 1
      %p215 = por %p213, %p214
      %p217 = scmp.ne.s32.totalorder %s202, %s216
      %p218 = scmp.eq.s32.totalorder %s24, 0
      %p219 = por %p217, %p218
      %s220 = ssub.s32 %s18, %s25
      %p221 = scmp.eq.s32.totalorder %s220, 0
      %s223 = sadd.s32 %s222, 1
      %s224 = scalar_select %p221, %s222, %s223
      %p227 = pneg %p221
      %p228 = scmp.eq.s32.totalorder %s18, 1
      %p229 = por %p227, %p228
      %p230 = scmp.ne.s32.totalorder %s222, %s225
      %p231 = scmp.eq.s32.totalorder %s18, 0
      %p232 = por %p230, %p231
      %p233 = scmp.ne.s32.totalorder %s222, %s225
      %p234 = scmp.eq.s32.totalorder %s23, 1
      %p235 = por %p233, %p234
      %p236 = scmp.ne.s32.totalorder %s225, %s226
      %p237 = scmp.eq.s32.totalorder %s23, 0
      %p238 = por %p236, %p237
      %p239 = scmp.ne.s32.totalorder %s225, %s226
      %p240 = scmp.eq.s32.totalorder %s24, 1
      %p241 = por %p239, %p240
      %p243 = scmp.ne.s32.totalorder %s226, %s242
      %p244 = scmp.eq.s32.totalorder %s24, 0
      %p245 = por %p243, %p244
      %p246 = scmp.le.s32.totalorder 1, %s18
      %p247 = scmp.lt.s32.totalorder %s18, 3
      %p248 = pnand %p246, %p247
      %p249 = pneg %p248
      // Predicated region
      $region9: #{net3_forward.1} parent=5 // pred_check
        _
      $region10: #{net3_forward.1} parent=5 // pred_check_branch
        %251 = sbr.rel (%p248) target = $region12
      $region11: #{net3_forward.1} parent=5 // pred_region
        %s252 = ssub.s32 %s18, 1
        // Predicated region
        $region13: #{net3_forward.1} parent=11 // pred_check
          %p253 = pneg %p65
        $region14: #{net3_forward.1} parent=11 // pred_check_branch
          %255 = sbr.rel (%p253) target = $region16
        $region15: #{net3_forward.1} parent=11 // pred_region
          _
        $region16: #{net3_forward.1} parent=11 // pred_fallthru
          _
        // Predicated region
        $region17: #{net3_forward.1} parent=11 // pred_check
          %p256 = pneg %p86
        $region18: #{net3_forward.1} parent=11 // pred_check_branch
          %258 = sbr.rel (%p256) target = $region20
        $region19: #{net3_forward.1} parent=11 // pred_region
          _
        $region20: #{net3_forward.1} parent=11 // pred_fallthru
          _
        // Predicated region
        $region21: #{net3_forward.1} parent=11 // pred_check
          %p259 = pneg %p107
        $region22: #{net3_forward.1} parent=11 // pred_check_branch
          %261 = sbr.rel (%p259) target = $region24
        $region23: #{net3_forward.1} parent=11 // pred_region
          _
        $region24: #{net3_forward.1} parent=11 // pred_fallthru
          _
        // Predicated region
        $region25: #{net3_forward.1} parent=11 // pred_check
          %p262 = pneg %p128
        $region26: #{net3_forward.1} parent=11 // pred_check_branch
          %264 = sbr.rel (%p262) target = $region28
        $region27: #{net3_forward.1} parent=11 // pred_region
          _
        $region28: #{net3_forward.1} parent=11 // pred_fallthru
          _
        // Predicated region
        $region29: #{net3_forward.1} parent=11 // pred_check
          %p265 = pneg %p149
        $region30: #{net3_forward.1} parent=11 // pred_check_branch
          %267 = sbr.rel (%p265) target = $region32
        $region31: #{net3_forward.1} parent=11 // pred_region
          _
        $region32: #{net3_forward.1} parent=11 // pred_fallthru
          _
        // Predicated region
        $region33: #{net3_forward.1} parent=11 // pred_check
          %p268 = pneg %p170
        $region34: #{net3_forward.1} parent=11 // pred_check_branch
          %270 = sbr.rel (%p268) target = $region36
        $region35: #{net3_forward.1} parent=11 // pred_region
          _
        $region36: #{net3_forward.1} parent=11 // pred_fallthru
          _
        // Predicated region
        $region37: #{net3_forward.1} parent=11 // pred_check
          %p271 = pneg %p191
        $region38: #{net3_forward.1} parent=11 // pred_check_branch
          %273 = sbr.rel (%p271) target = $region40
        $region39: #{net3_forward.1} parent=11 // pred_region
          _
        $region40: #{net3_forward.1} parent=11 // pred_fallthru
          _
        // Predicated region
        $region41: #{net3_forward.1} parent=11 // pred_check
          %p274 = pneg %p212
        $region42: #{net3_forward.1} parent=11 // pred_check_branch
          %276 = sbr.rel (%p274) target = $region44
        $region43: #{net3_forward.1} parent=11 // pred_region
          _
        $region44: #{net3_forward.1} parent=11 // pred_fallthru
          _
      $region12: #{net3_forward.1} parent=5 // pred_fallthru
        _
      %p277 = scmp.lt.s32.totalorder %s18, 2
      // Predicated region
      $region45: #{net3_forward.1} parent=5 // pred_check
        %p278 = pneg %p277
      $region46: #{net3_forward.1} parent=5 // pred_check_branch
        %280 = sbr.rel (%p278) target = $region48
      $region47: #{net3_forward.1} parent=5 // pred_region
        // Predicated region
        $region49: #{net3_forward.1} parent=47 // pred_check
          %p281 = pneg %p38
        $region50: #{net3_forward.1} parent=47 // pred_check_branch
          %283 = sbr.rel (%p281) target = $region52
        $region51: #{net3_forward.1} parent=47 // pred_region
          %p284 = scmp.lt.s32.totalorder %s18, 1
          %s285 = scalar_select %p284, %s18, 1
          %s286 = smul.addr %s285, 4
          %s287 = smul.addr %s286, 8
          %s288 = scalar_lea.vmem %s0, %s287
        $region52: #{net3_forward.1} parent=47 // pred_fallthru
          _
      $region48: #{net3_forward.1} parent=5 // pred_fallthru
        _
      %p289 = scmp.le.s32.totalorder 1, %s18
      %p290 = scmp.lt.s32.totalorder %s18, 3
      %p291 = pnand %p289, %p290
      %p292 = pneg %p291
      // Predicated region
      $region53: #{net3_forward.1} parent=5 // pred_check
        _
      $region54: #{net3_forward.1} parent=5 // pred_check_branch
        %294 = sbr.rel (%p291) target = $region56
      $region55: #{net3_forward.1} parent=5 // pred_region
        %s295 = ssub.s32 %s18, 1
        %p296 = scmp.lt.s32.totalorder %s23, 1
        %s297 = scalar_select %p296, %s23, 1
        %s298 = smul.addr %s297, 4
        %s299 = smul.addr %s298, 8
        %s300 = scalar_lea.vmem %s0, %s299
        %p301 = pneg %p44
        %p302 = pneg %p41
        %p303 = pneg %p65
        %p304 = pneg %p62
        %p305 = pneg %p86
        %p306 = pneg %p83
        %p307 = pneg %p107
        %p308 = pneg %p104
        %p309 = pneg %p128
        %p310 = pneg %p125
        %p311 = pneg %p149
        %p312 = pneg %p146
        %p313 = pneg %p170
        %p314 = pneg %p167
        %p315 = pneg %p191
        %p316 = pneg %p188
        %p317 = pneg %p212
        %p318 = pneg %p209
        %p319 = pneg %p238
        %p320 = pneg %p235
        %s321 = sand.u32 %s225, 1
        %s322 = scalar_lea.sflag [#allocation4], %s321
        %s323 = sand.u32 %s225, 1
        %s324 = scalar_lea.vmem [#allocation3], %s323
        %p325 = scmp.lt.s32.totalorder %s23, 1
        %s326 = scalar_select %p325, %s23, 1
        %s327 = smul.addr %s326, 4
        %s328 = smul.addr %s327, 8
        %s329 = scalar_lea.vmem %s0, %s328
        %v330 = vld [vmem:[%s2] sm:$0x3]
        %v331 = vld [vmem:[%s329] sm:$0x3f]
        %s332 = scalar_lea.vmem %s329, 8
        %v333 = vld [vmem:[%s332] sm:$0x3f]
        %s334 = scalar_lea.vmem %s329, 16
        %v335 = vld [vmem:[%s334] sm:$0x3f]
        %s336 = scalar_lea.vmem %s329, 24
        %v337 = vld [vmem:[%s336] sm:$0x3f]
        %v338 = vld [vmem:[%s329 + $0x1] sm:$0x3f]
        %v339 = vld [vmem:[%s332 + $0x1] sm:$0x3f]
        %v340 = vld [vmem:[%s1] sm:$0xff]
        %v341 = vld [vmem:[%s1 + $0x8] sm:$0xff]
        %v342 = vld [vmem:[%s1 + $0x10] sm:$0xff]
        %v343 = vld [vmem:[%s1 + $0x18] sm:$0xff]
        %v344 = vld [vmem:[%s1 + $0x20] sm:$0xff]
        %v345 = vld [vmem:[%s1 + $0x28] sm:$0xff]
        %v346 = vld [vmem:[%s1 + $0x30] sm:$0xff]
        %v347 = vld [vmem:[%s1 + $0x38] sm:$0xff]
        %v348 = vld [vmem:[%s1 + $0x40] sm:$0xff]
        %v349 = vld [vmem:[%s1 + $0x48] sm:$0xff]
        %v350 = vld [vmem:[%s1 + $0x50] sm:$0xff]
        %v351 = vld [vmem:[%s1 + $0x58] sm:$0xff]
        %v352 = vld [vmem:[%s1 + $0x60] sm:$0xff]
        %v353 = vld [vmem:[%s1 + $0x68] sm:$0xff]
        %v354 = vld [vmem:[%s1 + $0x70] sm:$0xff]
        %v355 = vld [vmem:[%s1 + $0x78] sm:$0xff]
        %v356 = vld [vmem:[%s1 + $0x80] sm:$0xff]
        %v357 = vld [vmem:[%s1 + $0x88] sm:$0xff]
        %v358 = vld [vmem:[%s1 + $0x90] sm:$0xff]
        %v359 = vld [vmem:[%s1 + $0x98] sm:$0xff]
        %v360 = vld [vmem:[%s1 + $0xa0] sm:$0xff]
        %v361 = vld [vmem:[%s1 + $0xa8] sm:$0xff]
        %v362 = vld [vmem:[%s1 + $0xb0] sm:$0xff]
        %v363 = vld [vmem:[%s1 + $0xb8] sm:$0xff]
        %v364 = vld [vmem:[%s1 + $0xc0] sm:$0xff]
        %v365 = vld [vmem:[%s1 + $0xc8] sm:$0xff]
        %v366 = vld [vmem:[%s1 + $0xd0] sm:$0xff]
        %v367 = vld [vmem:[%s1 + $0xd8] sm:$0xff]
        %v368 = vld [vmem:[%s1 + $0xe0] sm:$0xff]
        %v369 = vld [vmem:[%s1 + $0xe8] sm:$0xff]
        %v370 = vld [vmem:[%s1 + $0xf0] sm:$0xff]
        %v371 = vld [vmem:[%s1 + $0xf8] sm:$0xff]
        %v372 = vld [vmem:[%s1 + $0x100] sm:$0xff]
        %v373 = vld [vmem:[%s1 + $0x108] sm:$0xff]
        %v374 = vld [vmem:[%s1 + $0x110] sm:$0xff]
        %v375 = vld [vmem:[%s1 + $0x118] sm:$0xff]
        %v376 = vld [vmem:[%s1 + $0x120] sm:$0xff]
        %v377 = vld [vmem:[%s1 + $0x128] sm:$0xff]
        %v378 = vld [vmem:[%s1 + $0x130] sm:$0xff]
        %v379 = vld [vmem:[%s1 + $0x138] sm:$0xff]
        %v380 = vld [vmem:[%s1 + $0x140] sm:$0xff]
        %v381 = vld [vmem:[%s1 + $0x148] sm:$0xff]
        %v382 = vld [vmem:[%s1 + $0x150] sm:$0xff]
        %v383 = vld [vmem:[%s1 + $0x158] sm:$0xff]
        %v384 = vld [vmem:[%s1 + $0x160] sm:$0xff]
        %v385 = vld [vmem:[%s1 + $0x168] sm:$0xff]
        %v386 = vld [vmem:[%s1 + $0x170] sm:$0xff]
        %v387 = vld [vmem:[%s1 + $0x178] sm:$0xff]
        %v388 = vld [vmem:[%s1 + $0x180] sm:$0xff]
        %v389 = vld [vmem:[%s1 + $0x188] sm:$0xff]
        %v390 = vld [vmem:[%s1 + $0x190] sm:$0xff]
        %v391 = vld [vmem:[%s1 + $0x198] sm:$0xff]
        %v392 = vld [vmem:[%s1 + $0x1a0] sm:$0xff]
        %v393 = vld [vmem:[%s1 + $0x1a8] sm:$0xff]
        %v394 = vld [vmem:[%s1 + $0x1b0] sm:$0xff]
        %v395 = vld [vmem:[%s1 + $0x1b8] sm:$0xff]
        %v396 = vld [vmem:[%s1 + $0x1c0] sm:$0xff]
        %v397 = vld [vmem:[%s1 + $0x1c8] sm:$0xff]
        %v398 = vld [vmem:[%s1 + $0x1d0] sm:$0xff]
        %v399 = vld [vmem:[%s1 + $0x1d8] sm:$0xff]
        %v400 = vld [vmem:[%s1 + $0x1e0] sm:$0xff]
        %v401 = vld [vmem:[%s1 + $0x1e8] sm:$0xff]
        %v402 = vld [vmem:[%s1 + $0x1f0] sm:$0xff]
        %v403 = vld [vmem:[%s1 + $0x1f8] sm:$0xff]
        %v404 = vld [vmem:[%s1 + $0x200] sm:$0xff]
        %v405 = vld [vmem:[%s1 + $0x208] sm:$0xff]
        %v406 = vld [vmem:[%s1 + $0x210] sm:$0xff]
        %v407 = vld [vmem:[%s1 + $0x218] sm:$0xff]
        %v408 = vld [vmem:[%s1 + $0x220] sm:$0xff]
        %v409 = vld [vmem:[%s1 + $0x228] sm:$0xff]
        %v410 = vld [vmem:[%s1 + $0x230] sm:$0xff]
        %v411 = vld [vmem:[%s1 + $0x238] sm:$0xff]
        %v412 = vld [vmem:[%s1 + $0x240] sm:$0xff]
        %v413 = vld [vmem:[%s1 + $0x248] sm:$0xff]
        %v414 = vld [vmem:[%s1 + $0x250] sm:$0xff]
        %v415 = vld [vmem:[%s1 + $0x258] sm:$0xff]
        %v416 = vld [vmem:[%s1 + $0x260] sm:$0xff]
        %v417 = vld [vmem:[%s1 + $0x268] sm:$0xff]
        %v418 = vld [vmem:[%s1 + $0x270] sm:$0xff]
        %v419 = vld [vmem:[%s1 + $0x278] sm:$0xff]
        %v420 = vld [vmem:[%s1 + $0x280] sm:$0xff]
        %v421 = vld [vmem:[%s1 + $0x288] sm:$0xff]
        %v422 = vld [vmem:[%s1 + $0x290] sm:$0xff]
        %v423 = vld [vmem:[%s1 + $0x298] sm:$0xff]
        %v424 = vld [vmem:[%s1 + $0x2a0] sm:$0xff]
        %v425 = vld [vmem:[%s1 + $0x2a8] sm:$0xff]
        %v426 = vld [vmem:[%s1 + $0x2b0] sm:$0xff]
        %v427 = vld [vmem:[%s1 + $0x2b8] sm:$0xff]
        %v428 = vld [vmem:[%s1 + $0x2c0] sm:$0xff]
        %v429 = vld [vmem:[%s1 + $0x2c8] sm:$0xff]
        %v430 = vld [vmem:[%s1 + $0x2d0] sm:$0xff]
        %v431 = vld [vmem:[%s1 + $0x2d8] sm:$0xff]
        %v432 = vld [vmem:[%s1 + $0x2e0] sm:$0xff]
        %v433 = vld [vmem:[%s1 + $0x2e8] sm:$0xff]
        %v434 = vld [vmem:[%s1 + $0x2f0] sm:$0xff]
        %v435 = vld [vmem:[%s1 + $0x2f8] sm:$0xff]
        %v436 = vld [vmem:[%s1 + $0x300] sm:$0xff]
        %v437 = vld [vmem:[%s1 + $0x308] sm:$0xff]
        %v438 = vld [vmem:[%s1 + $0x310] sm:$0xff]
        %v439 = vld [vmem:[%s1 + $0x318] sm:$0xff]
        %v440 = vld [vmem:[%s1 + $0x320] sm:$0xff]
        %v441 = vld [vmem:[%s1 + $0x328] sm:$0xff]
        %v442 = vld [vmem:[%s1 + $0x330] sm:$0xff]
        %v443 = vld [vmem:[%s1 + $0x338] sm:$0xff]
        %v444 = vld [vmem:[%s1 + $0x340] sm:$0xff]
        %v445 = vld [vmem:[%s1 + $0x348] sm:$0xff]
        %v446 = vld [vmem:[%s1 + $0x350] sm:$0xff]
        %v447 = vld [vmem:[%s1 + $0x358] sm:$0xff]
        %v448 = vld [vmem:[%s1 + $0x360] sm:$0xff]
        %v449 = vld [vmem:[%s1 + $0x368] sm:$0xff]
        %v450 = vld [vmem:[%s1 + $0x370] sm:$0xff]
        %v451 = vld [vmem:[%s1 + $0x378] sm:$0xff]
        %v452 = vld [vmem:[%s1 + $0x380] sm:$0xff]
        %v453 = vld [vmem:[%s1 + $0x388] sm:$0xff]
        %v454 = vld [vmem:[%s1 + $0x390] sm:$0xff]
        %v455 = vld [vmem:[%s1 + $0x398] sm:$0xff]
        %v456 = vld [vmem:[%s1 + $0x3a0] sm:$0xff]
        %v457 = vld [vmem:[%s1 + $0x3a8] sm:$0xff]
        %v458 = vld [vmem:[%s1 + $0x3b0] sm:$0xff]
        %v459 = vld [vmem:[%s1 + $0x3b8] sm:$0xff]
        %v460 = vld [vmem:[%s1 + $0x3c0] sm:$0xff]
        %v461 = vld [vmem:[%s1 + $0x3c8] sm:$0xff]
        %v462 = vld [vmem:[%s1 + $0x3d0] sm:$0xff]
        %v463 = vld [vmem:[%s1 + $0x3d8] sm:$0xff]
        %v464 = vld [vmem:[%s1 + $0x3e0] sm:$0xff]
        %v465 = vld [vmem:[%s1 + $0x3e8] sm:$0xff]
        %v466 = vld [vmem:[%s1 + $0x3f0] sm:$0xff]
        %v467 = vld [vmem:[%s1 + $0x3f8] sm:$0xff]
        %v468 = vld [vmem:[%s1 + $0x400] sm:$0xff]
        %v469 = vld [vmem:[%s1 + $0x408] sm:$0xff]
        %v470 = vld [vmem:[%s1 + $0x410] sm:$0xff]
        %v471 = vld [vmem:[%s1 + $0x418] sm:$0xff]
        %v472 = vld [vmem:[%s1 + $0x420] sm:$0xff]
        %v473 = vld [vmem:[%s1 + $0x428] sm:$0xff]
        %v474 = vld [vmem:[%s1 + $0x430] sm:$0xff]
        %v475 = vld [vmem:[%s1 + $0x438] sm:$0xff]
        %v476 = vld [vmem:[%s1 + $0x440] sm:$0xff]
        %v477 = vld [vmem:[%s1 + $0x448] sm:$0xff]
        %v478 = vld [vmem:[%s1 + $0x450] sm:$0xff]
        %v479 = vld [vmem:[%s1 + $0x458] sm:$0xff]
        %v480 = vld [vmem:[%s1 + $0x460] sm:$0xff]
        %v481 = vld [vmem:[%s1 + $0x468] sm:$0xff]
        %v482 = vld [vmem:[%s1 + $0x470] sm:$0xff]
        %v483 = vld [vmem:[%s1 + $0x478] sm:$0xff]
        %v484 = vld [vmem:[%s1 + $0x480] sm:$0xff]
        %v485 = vld [vmem:[%s1 + $0x488] sm:$0xff]
        %v486 = vld [vmem:[%s1 + $0x490] sm:$0xff]
        %v487 = vld [vmem:[%s1 + $0x498] sm:$0xff]
        %v488 = vld [vmem:[%s1 + $0x4a0] sm:$0xff]
        %v489 = vld [vmem:[%s1 + $0x4a8] sm:$0xff]
        %v490 = vld [vmem:[%s1 + $0x4b0] sm:$0xff]
        %v491 = vld [vmem:[%s1 + $0x4b8] sm:$0xff]
        %v492 = vld [vmem:[%s1 + $0x4c0] sm:$0xff]
        %v493 = vld [vmem:[%s1 + $0x4c8] sm:$0xff]
        %v494 = vld [vmem:[%s1 + $0x4d0] sm:$0xff]
        %v495 = vld [vmem:[%s1 + $0x4d8] sm:$0xff]
        %v496 = vld [vmem:[%s1 + $0x4e0] sm:$0xff]
        %v497 = vld [vmem:[%s1 + $0x4e8] sm:$0xff]
        %v498 = vld [vmem:[%s1 + $0x4f0] sm:$0xff]
        %v499 = vld [vmem:[%s1 + $0x4f8] sm:$0xff]
        %s500 = scalar_lea.vmem %s1, 1280
        %v501 = vld [vmem:[%s500] sm:$0xff]
        %v502 = vld [vmem:[%s500 + $0x8] sm:$0xff]
        %v503 = vld [vmem:[%s500 + $0x10] sm:$0xff]
        %v504 = vld [vmem:[%s500 + $0x18] sm:$0xff]
        %v505 = vld [vmem:[%s500 + $0x20] sm:$0xff]
        %v506 = vld [vmem:[%s500 + $0x28] sm:$0xff]
        %v507 = vld [vmem:[%s500 + $0x30] sm:$0xff]
        %v508 = vld [vmem:[%s500 + $0x38] sm:$0xff]
        %v509 = vld [vmem:[%s500 + $0x40] sm:$0xff]
        %v510 = vld [vmem:[%s500 + $0x48] sm:$0xff]
        %v511 = vld [vmem:[%s500 + $0x50] sm:$0xff]
        %v512 = vld [vmem:[%s500 + $0x58] sm:$0xff]
        %v513 = vld [vmem:[%s500 + $0x60] sm:$0xff]
        %v514 = vld [vmem:[%s500 + $0x68] sm:$0xff]
        %v515 = vld [vmem:[%s500 + $0x70] sm:$0xff]
        %v516 = vld [vmem:[%s500 + $0x78] sm:$0xff]
        %v517 = vld [vmem:[%s500 + $0x80] sm:$0xff]
        %v518 = vld [vmem:[%s500 + $0x88] sm:$0xff]
        %v519 = vld [vmem:[%s500 + $0x90] sm:$0xff]
        %v520 = vld [vmem:[%s500 + $0x98] sm:$0xff]
        %v521 = vld [vmem:[%s500 + $0xa0] sm:$0xff]
        %v522 = vld [vmem:[%s500 + $0xa8] sm:$0xff]
        %v523 = vld [vmem:[%s500 + $0xb0] sm:$0xff]
        %v524 = vld [vmem:[%s500 + $0xb8] sm:$0xff]
        %v525 = vld [vmem:[%s500 + $0xc0] sm:$0xff]
        %v526 = vld [vmem:[%s500 + $0xc8] sm:$0xff]
        %v527 = vld [vmem:[%s500 + $0xd0] sm:$0xff]
        %v528 = vld [vmem:[%s500 + $0xd8] sm:$0xff]
        %v529 = vld [vmem:[%s500 + $0xe0] sm:$0xff]
        %v530 = vld [vmem:[%s500 + $0xe8] sm:$0xff]
        %v531 = vld [vmem:[%s500 + $0xf0] sm:$0xff]
        %v532 = vld [vmem:[%s500 + $0xf8] sm:$0xff]
        %v533 = vld [vmem:[%s500 + $0x100] sm:$0xff]
        %v534 = vld [vmem:[%s500 + $0x108] sm:$0xff]
        %v535 = vld [vmem:[%s500 + $0x110] sm:$0xff]
        %v536 = vld [vmem:[%s500 + $0x118] sm:$0xff]
        %v537 = vld [vmem:[%s500 + $0x120] sm:$0xff]
        %v538 = vld [vmem:[%s500 + $0x128] sm:$0xff]
        %v539 = vld [vmem:[%s500 + $0x130] sm:$0xff]
        %v540 = vld [vmem:[%s500 + $0x138] sm:$0xff]
        %v541 = vld [vmem:[%s500 + $0x140] sm:$0xff]
        %v542 = vld [vmem:[%s500 + $0x148] sm:$0xff]
        %v543 = vld [vmem:[%s500 + $0x150] sm:$0xff]
        %v544 = vld [vmem:[%s500 + $0x158] sm:$0xff]
        %v545 = vld [vmem:[%s500 + $0x160] sm:$0xff]
        %v546 = vld [vmem:[%s500 + $0x168] sm:$0xff]
        %v547 = vld [vmem:[%s500 + $0x170] sm:$0xff]
        %v548 = vld [vmem:[%s500 + $0x178] sm:$0xff]
        %v549 = vld [vmem:[%s500 + $0x180] sm:$0xff]
        %v550 = vld [vmem:[%s500 + $0x188] sm:$0xff]
        %v551 = vld [vmem:[%s500 + $0x190] sm:$0xff]
        %v552 = vld [vmem:[%s500 + $0x198] sm:$0xff]
        %v553 = vld [vmem:[%s500 + $0x1a0] sm:$0xff]
        %v554 = vld [vmem:[%s500 + $0x1a8] sm:$0xff]
        %v555 = vld [vmem:[%s500 + $0x1b0] sm:$0xff]
        %v556 = vld [vmem:[%s500 + $0x1b8] sm:$0xff]
        %v557 = vld [vmem:[%s500 + $0x1c0] sm:$0xff]
        %v558 = vld [vmem:[%s500 + $0x1c8] sm:$0xff]
        %v559 = vld [vmem:[%s500 + $0x1d0] sm:$0xff]
        %v560 = vld [vmem:[%s500 + $0x1d8] sm:$0xff]
        %v561 = vld [vmem:[%s500 + $0x1e0] sm:$0xff]
        %v562 = vld [vmem:[%s500 + $0x1e8] sm:$0xff]
        %v563 = vld [vmem:[%s500 + $0x1f0] sm:$0xff]
        %v564 = vld [vmem:[%s500 + $0x1f8] sm:$0xff]
        %v565 = vld [vmem:[%s500 + $0x200] sm:$0xff]
        %v566 = vld [vmem:[%s500 + $0x208] sm:$0xff]
        %v567 = vld [vmem:[%s500 + $0x210] sm:$0xff]
        %v568 = vld [vmem:[%s500 + $0x218] sm:$0xff]
        %v569 = vld [vmem:[%s500 + $0x220] sm:$0xff]
        %v570 = vld [vmem:[%s500 + $0x228] sm:$0xff]
        %v571 = vld [vmem:[%s500 + $0x230] sm:$0xff]
        %v572 = vld [vmem:[%s500 + $0x238] sm:$0xff]
        %v573 = vld [vmem:[%s500 + $0x240] sm:$0xff]
        %v574 = vld [vmem:[%s500 + $0x248] sm:$0xff]
        %v575 = vld [vmem:[%s500 + $0x250] sm:$0xff]
        %v576 = vld [vmem:[%s500 + $0x258] sm:$0xff]
        %v577 = vld [vmem:[%s500 + $0x260] sm:$0xff]
        %v578 = vld [vmem:[%s500 + $0x268] sm:$0xff]
        %v579 = vld [vmem:[%s500 + $0x270] sm:$0xff]
        %v580 = vld [vmem:[%s500 + $0x278] sm:$0xff]
        %v581 = vld [vmem:[%s500 + $0x280] sm:$0xff]
        %v582 = vld [vmem:[%s500 + $0x288] sm:$0xff]
        %v583 = vld [vmem:[%s500 + $0x290] sm:$0xff]
        %v584 = vld [vmem:[%s500 + $0x298] sm:$0xff]
        %v585 = vld [vmem:[%s500 + $0x2a0] sm:$0xff]
        %v586 = vld [vmem:[%s500 + $0x2a8] sm:$0xff]
        %v587 = vld [vmem:[%s500 + $0x2b0] sm:$0xff]
        %v588 = vld [vmem:[%s500 + $0x2b8] sm:$0xff]
        %v589 = vld [vmem:[%s500 + $0x2c0] sm:$0xff]
        %v590 = vld [vmem:[%s500 + $0x2c8] sm:$0xff]
        %v591 = vld [vmem:[%s500 + $0x2d0] sm:$0xff]
        %v592 = vld [vmem:[%s500 + $0x2d8] sm:$0xff]
        %v593 = vld [vmem:[%s500 + $0x2e0] sm:$0xff]
        %v594 = vld [vmem:[%s500 + $0x2e8] sm:$0xff]
        %v595 = vld [vmem:[%s500 + $0x2f0] sm:$0xff]
        %v596 = vld [vmem:[%s500 + $0x2f8] sm:$0xff]
        %v597 = vld [vmem:[%s500 + $0x300] sm:$0xff]
        %v598 = vld [vmem:[%s500 + $0x308] sm:$0xff]
        %v599 = vld [vmem:[%s500 + $0x310] sm:$0xff]
        %v600 = vld [vmem:[%s500 + $0x318] sm:$0xff]
        %v601 = vld [vmem:[%s500 + $0x320] sm:$0xff]
        %v602 = vld [vmem:[%s500 + $0x328] sm:$0xff]
        %v603 = vld [vmem:[%s500 + $0x330] sm:$0xff]
        %v604 = vld [vmem:[%s500 + $0x338] sm:$0xff]
        %v605 = vld [vmem:[%s500 + $0x340] sm:$0xff]
        %v606 = vld [vmem:[%s500 + $0x348] sm:$0xff]
        %v607 = vld [vmem:[%s500 + $0x350] sm:$0xff]
        %v608 = vld [vmem:[%s500 + $0x358] sm:$0xff]
        %v609 = vld [vmem:[%s500 + $0x360] sm:$0xff]
        %v610 = vld [vmem:[%s500 + $0x368] sm:$0xff]
        %v611 = vld [vmem:[%s500 + $0x370] sm:$0xff]
        %v612 = vld [vmem:[%s500 + $0x378] sm:$0xff]
        %v613 = vld [vmem:[%s500 + $0x380] sm:$0xff]
        %v614 = vld [vmem:[%s500 + $0x388] sm:$0xff]
        %v615 = vld [vmem:[%s500 + $0x390] sm:$0xff]
        %v616 = vld [vmem:[%s500 + $0x398] sm:$0xff]
        %v617 = vld [vmem:[%s500 + $0x3a0] sm:$0xff]
        %v618 = vld [vmem:[%s500 + $0x3a8] sm:$0xff]
        %v619 = vld [vmem:[%s500 + $0x3b0] sm:$0xff]
        %v620 = vld [vmem:[%s500 + $0x3b8] sm:$0xff]
        %v621 = vld [vmem:[%s500 + $0x3c0] sm:$0xff]
        %v622 = vld [vmem:[%s500 + $0x3c8] sm:$0xff]
        %v623 = vld [vmem:[%s500 + $0x3d0] sm:$0xff]
        %v624 = vld [vmem:[%s500 + $0x3d8] sm:$0xff]
        %v625 = vld [vmem:[%s500 + $0x3e0] sm:$0xff]
        %v626 = vld [vmem:[%s500 + $0x3e8] sm:$0xff]
        %v627 = vld [vmem:[%s500 + $0x3f0] sm:$0xff]
        %v628 = vld [vmem:[%s500 + $0x3f8] sm:$0xff]
        %v629 = vld [vmem:[%s500 + $0x400] sm:$0xff]
        %v630 = vld [vmem:[%s500 + $0x408] sm:$0xff]
        %v631 = vld [vmem:[%s500 + $0x410] sm:$0xff]
        %v632 = vld [vmem:[%s500 + $0x418] sm:$0xff]
        %v633 = vld [vmem:[%s500 + $0x420] sm:$0xff]
        %v634 = vld [vmem:[%s500 + $0x428] sm:$0xff]
        %v635 = vld [vmem:[%s500 + $0x430] sm:$0xff]
        %v636 = vld [vmem:[%s500 + $0x438] sm:$0xff]
        %v637 = vld [vmem:[%s500 + $0x440] sm:$0xff]
        %v638 = vld [vmem:[%s500 + $0x448] sm:$0xff]
        %v639 = vld [vmem:[%s500 + $0x450] sm:$0xff]
        %v640 = vld [vmem:[%s500 + $0x458] sm:$0xff]
        %v641 = vld [vmem:[%s500 + $0x460] sm:$0xff]
        %v642 = vld [vmem:[%s500 + $0x468] sm:$0xff]
        %v643 = vld [vmem:[%s500 + $0x470] sm:$0xff]
        %v644 = vld [vmem:[%s500 + $0x478] sm:$0xff]
        %v645 = vld [vmem:[%s500 + $0x480] sm:$0xff]
        %v646 = vld [vmem:[%s500 + $0x488] sm:$0xff]
        %v647 = vld [vmem:[%s500 + $0x490] sm:$0xff]
        %v648 = vld [vmem:[%s500 + $0x498] sm:$0xff]
        %v649 = vld [vmem:[%s500 + $0x4a0] sm:$0xff]
        %v650 = vld [vmem:[%s500 + $0x4a8] sm:$0xff]
        %v651 = vld [vmem:[%s500 + $0x4b0] sm:$0xff]
        %v652 = vld [vmem:[%s500 + $0x4b8] sm:$0xff]
        %v653 = vld [vmem:[%s500 + $0x4c0] sm:$0xff]
        %v654 = vld [vmem:[%s500 + $0x4c8] sm:$0xff]
        %v655 = vld [vmem:[%s500 + $0x4d0] sm:$0xff]
        %v656 = vld [vmem:[%s500 + $0x4d8] sm:$0xff]
        %v657 = vld [vmem:[%s500 + $0x4e0] sm:$0xff]
        %v658 = vld [vmem:[%s500 + $0x4e8] sm:$0xff]
        %v659 = vld [vmem:[%s500 + $0x4f0] sm:$0xff]
        %v660 = vld [vmem:[%s500 + $0x4f8] sm:$0xff]
        %661 = vmatpush.msra.mxu0 %v370
        %662 = vmatpush.msra.mxu0 %v368
        %663 = vmatpush.msra.mxu0 %v366
        %664 = vmatpush.msra.mxu0 %v364
        %665 = vmatpush.msra.mxu0 %v362
        %666 = vmatpush.msra.mxu0 %v360
        %667 = vmatpush.msra.mxu0 %v358
        %668 = vmatpush.msra.mxu0 %v356
        %669 = vmatpush.msra.mxu0 %v354
        %670 = vmatpush.msra.mxu0 %v352
        %671 = vmatpush.msra.mxu0 %v350
        %672 = vmatpush.msra.mxu0 %v348
        %673 = vmatpush.msra.mxu0 %v346
        %674 = vmatpush.msra.mxu0 %v344
        %675 = vmatpush.msra.mxu0 %v342
        %676 = vmatpush.msra.mxu0 %v340
        %677 = vmatmul.f32.gmra.mxu0 %v331
        %v678 = vpop.f32.mrf.mxu0
        %v679 = vadd.f32 0.0, %v678
        %680 = vdwg.mxu0
        %681 = vmatpush.msra.mxu0 %v402
        %682 = vmatpush.msra.mxu0 %v400
        %683 = vmatpush.msra.mxu0 %v398
        %684 = vmatpush.msra.mxu0 %v396
        %685 = vmatpush.msra.mxu0 %v394
        %686 = vmatpush.msra.mxu0 %v392
        %687 = vmatpush.msra.mxu0 %v390
        %688 = vmatpush.msra.mxu0 %v388
        %689 = vmatpush.msra.mxu0 %v386
        %690 = vmatpush.msra.mxu0 %v384
        %691 = vmatpush.msra.mxu0 %v382
        %692 = vmatpush.msra.mxu0 %v380
        %693 = vmatpush.msra.mxu0 %v378
        %694 = vmatpush.msra.mxu0 %v376
        %695 = vmatpush.msra.mxu0 %v374
        %696 = vmatpush.msra.mxu0 %v372
        %697 = vmatmul.f32.gmra.mxu0 %v333
        %v698 = vpop.f32.mrf.mxu0
        %v699 = vadd.f32 %v679, %v698
        %700 = vdwg.mxu0
        %701 = vmatpush.msra.mxu0 %v434
        %702 = vmatpush.msra.mxu0 %v432
        %703 = vmatpush.msra.mxu0 %v430
        %704 = vmatpush.msra.mxu0 %v428
        %705 = vmatpush.msra.mxu0 %v426
        %706 = vmatpush.msra.mxu0 %v424
        %707 = vmatpush.msra.mxu0 %v422
        %708 = vmatpush.msra.mxu0 %v420
        %709 = vmatpush.msra.mxu0 %v418
        %710 = vmatpush.msra.mxu0 %v416
        %711 = vmatpush.msra.mxu0 %v414
        %712 = vmatpush.msra.mxu0 %v412
        %713 = vmatpush.msra.mxu0 %v410
        %714 = vmatpush.msra.mxu0 %v408
        %715 = vmatpush.msra.mxu0 %v406
        %716 = vmatpush.msra.mxu0 %v404
        %717 = vmatmul.f32.gmra.mxu0 %v335
        %v718 = vpop.f32.mrf.mxu0
        %v719 = vadd.f32 %v699, %v718
        %720 = vdwg.mxu0
        %721 = vmatpush.msra.mxu0 %v466
        %722 = vmatpush.msra.mxu0 %v464
        %723 = vmatpush.msra.mxu0 %v462
        %724 = vmatpush.msra.mxu0 %v460
        %725 = vmatpush.msra.mxu0 %v458
        %726 = vmatpush.msra.mxu0 %v456
        %727 = vmatpush.msra.mxu0 %v454
        %728 = vmatpush.msra.mxu0 %v452
        %729 = vmatpush.msra.mxu0 %v450
        %730 = vmatpush.msra.mxu0 %v448
        %731 = vmatpush.msra.mxu0 %v446
        %732 = vmatpush.msra.mxu0 %v444
        %733 = vmatpush.msra.mxu0 %v442
        %734 = vmatpush.msra.mxu0 %v440
        %735 = vmatpush.msra.mxu0 %v438
        %736 = vmatpush.msra.mxu0 %v436
        %737 = vmatmul.f32.gmra.mxu0 %v337
        %v738 = vpop.f32.mrf.mxu0
        %v739 = vadd.f32 %v719, %v738
        %740 = vdwg.mxu0
        %741 = vmatpush.msra.mxu0 %v498
        %742 = vmatpush.msra.mxu0 %v496
        %743 = vmatpush.msra.mxu0 %v494
        %744 = vmatpush.msra.mxu0 %v492
        %745 = vmatpush.msra.mxu0 %v490
        %746 = vmatpush.msra.mxu0 %v488
        %747 = vmatpush.msra.mxu0 %v486
        %748 = vmatpush.msra.mxu0 %v484
        %749 = vmatpush.msra.mxu0 %v482
        %750 = vmatpush.msra.mxu0 %v480
        %751 = vmatpush.msra.mxu0 %v478
        %752 = vmatpush.msra.mxu0 %v476
        %753 = vmatpush.msra.mxu0 %v474
        %754 = vmatpush.msra.mxu0 %v472
        %755 = vmatpush.msra.mxu0 %v470
        %756 = vmatpush.msra.mxu0 %v468
        %757 = vmatmul.f32.gmra.mxu0 %v338
        %v758 = vpop.f32.mrf.mxu0
        %v759 = vadd.f32 %v739, %v758
        %760 = vdwg.mxu0
        %761 = vmatpush.msra.mxu0 %v371
        %762 = vmatpush.msra.mxu0 %v369
        %763 = vmatpush.msra.mxu0 %v367
        %764 = vmatpush.msra.mxu0 %v365
        %765 = vmatpush.msra.mxu0 %v363
        %766 = vmatpush.msra.mxu0 %v361
        %767 = vmatpush.msra.mxu0 %v359
        %768 = vmatpush.msra.mxu0 %v357
        %769 = vmatpush.msra.mxu0 %v355
        %770 = vmatpush.msra.mxu0 %v353
        %771 = vmatpush.msra.mxu0 %v351
        %772 = vmatpush.msra.mxu0 %v349
        %773 = vmatpush.msra.mxu0 %v347
        %774 = vmatpush.msra.mxu0 %v345
        %775 = vmatpush.msra.mxu0 %v343
        %776 = vmatpush.msra.mxu0 %v341
        %777 = vmatmul.f32.gmra.mxu0 %v331
        %v778 = vpop.f32.mrf.mxu0
        %v779 = vadd.f32 0.0, %v778
        %780 = vdwg.mxu0
        %781 = vmatpush.msra.mxu0 %v403
        %782 = vmatpush.msra.mxu0 %v401
        %783 = vmatpush.msra.mxu0 %v399
        %784 = vmatpush.msra.mxu0 %v397
        %785 = vmatpush.msra.mxu0 %v395
        %786 = vmatpush.msra.mxu0 %v393
        %787 = vmatpush.msra.mxu0 %v391
        %788 = vmatpush.msra.mxu0 %v389
        %789 = vmatpush.msra.mxu0 %v387
        %790 = vmatpush.msra.mxu0 %v385
        %791 = vmatpush.msra.mxu0 %v383
        %792 = vmatpush.msra.mxu0 %v381
        %793 = vmatpush.msra.mxu0 %v379
        %794 = vmatpush.msra.mxu0 %v377
        %795 = vmatpush.msra.mxu0 %v375
        %796 = vmatpush.msra.mxu0 %v373
        %797 = vmatmul.f32.gmra.mxu0 %v333
        %v798 = vpop.f32.mrf.mxu0
        %v799 = vadd.f32 %v779, %v798
        %800 = vdwg.mxu0
        %801 = vmatpush.msra.mxu0 %v435
        %802 = vmatpush.msra.mxu0 %v433
        %803 = vmatpush.msra.mxu0 %v431
        %804 = vmatpush.msra.mxu0 %v429
        %805 = vmatpush.msra.mxu0 %v427
        %806 = vmatpush.msra.mxu0 %v425
        %807 = vmatpush.msra.mxu0 %v423
        %808 = vmatpush.msra.mxu0 %v421
        %809 = vmatpush.msra.mxu0 %v419
        %810 = vmatpush.msra.mxu0 %v417
        %811 = vmatpush.msra.mxu0 %v415
        %812 = vmatpush.msra.mxu0 %v413
        %813 = vmatpush.msra.mxu0 %v411
        %814 = vmatpush.msra.mxu0 %v409
        %815 = vmatpush.msra.mxu0 %v407
        %816 = vmatpush.msra.mxu0 %v405
        %817 = vmatmul.f32.gmra.mxu0 %v335
        %v818 = vpop.f32.mrf.mxu0
        %v819 = vadd.f32 %v799, %v818
        %820 = vdwg.mxu0
        %821 = vmatpush.msra.mxu0 %v467
        %822 = vmatpush.msra.mxu0 %v465
        %823 = vmatpush.msra.mxu0 %v463
        %824 = vmatpush.msra.mxu0 %v461
        %825 = vmatpush.msra.mxu0 %v459
        %826 = vmatpush.msra.mxu0 %v457
        %827 = vmatpush.msra.mxu0 %v455
        %828 = vmatpush.msra.mxu0 %v453
        %829 = vmatpush.msra.mxu0 %v451
        %830 = vmatpush.msra.mxu0 %v449
        %831 = vmatpush.msra.mxu0 %v447
        %832 = vmatpush.msra.mxu0 %v445
        %833 = vmatpush.msra.mxu0 %v443
        %834 = vmatpush.msra.mxu0 %v441
        %835 = vmatpush.msra.mxu0 %v439
        %836 = vmatpush.msra.mxu0 %v437
        %837 = vmatmul.f32.gmra.mxu0 %v337
        %v838 = vpop.f32.mrf.mxu0
        %v839 = vadd.f32 %v819, %v838
        %840 = vdwg.mxu0
        %841 = vmatpush.msra.mxu0 %v499
        %842 = vmatpush.msra.mxu0 %v497
        %843 = vmatpush.msra.mxu0 %v495
        %844 = vmatpush.msra.mxu0 %v493
        %845 = vmatpush.msra.mxu0 %v491
        %846 = vmatpush.msra.mxu0 %v489
        %847 = vmatpush.msra.mxu0 %v487
        %848 = vmatpush.msra.mxu0 %v485
        %849 = vmatpush.msra.mxu0 %v483
        %850 = vmatpush.msra.mxu0 %v481
        %851 = vmatpush.msra.mxu0 %v479
        %852 = vmatpush.msra.mxu0 %v477
        %853 = vmatpush.msra.mxu0 %v475
        %854 = vmatpush.msra.mxu0 %v473
        %855 = vmatpush.msra.mxu0 %v471
        %856 = vmatpush.msra.mxu0 %v469
        %857 = vmatmul.f32.gmra.mxu0 %v338
        %v858 = vpop.f32.mrf.mxu0
        %v859 = vadd.f32 %v839, %v858
        %860 = vdwg.mxu0
        %861 = vmatpush.msra.mxu0 %v531
        %862 = vmatpush.msra.mxu0 %v529
        %863 = vmatpush.msra.mxu0 %v527
        %864 = vmatpush.msra.mxu0 %v525
        %865 = vmatpush.msra.mxu0 %v523
        %866 = vmatpush.msra.mxu0 %v521
        %867 = vmatpush.msra.mxu0 %v519
        %868 = vmatpush.msra.mxu0 %v517
        %869 = vmatpush.msra.mxu0 %v515
        %870 = vmatpush.msra.mxu0 %v513
        %871 = vmatpush.msra.mxu0 %v511
        %872 = vmatpush.msra.mxu0 %v509
        %873 = vmatpush.msra.mxu0 %v507
        %874 = vmatpush.msra.mxu0 %v505
        %875 = vmatpush.msra.mxu0 %v503
        %876 = vmatpush.msra.mxu0 %v501
        %877 = vmatmul.f32.gmra.mxu0 %v331
        %v878 = vpop.f32.mrf.mxu0
        %v879 = vadd.f32 0.0, %v878
        %880 = vdwg.mxu0
        %881 = vmatpush.msra.mxu0 %v563
        %882 = vmatpush.msra.mxu0 %v561
        %883 = vmatpush.msra.mxu0 %v559
        %884 = vmatpush.msra.mxu0 %v557
        %885 = vmatpush.msra.mxu0 %v555
        %886 = vmatpush.msra.mxu0 %v553
        %887 = vmatpush.msra.mxu0 %v551
        %888 = vmatpush.msra.mxu0 %v549
        %889 = vmatpush.msra.mxu0 %v547
        %890 = vmatpush.msra.mxu0 %v545
        %891 = vmatpush.msra.mxu0 %v543
        %892 = vmatpush.msra.mxu0 %v541
        %893 = vmatpush.msra.mxu0 %v539
        %894 = vmatpush.msra.mxu0 %v537
        %895 = vmatpush.msra.mxu0 %v535
        %896 = vmatpush.msra.mxu0 %v533
        %897 = vmatmul.f32.gmra.mxu0 %v333
        %v898 = vpop.f32.mrf.mxu0
        %v899 = vadd.f32 %v879, %v898
        %900 = vdwg.mxu0
        %901 = vmatpush.msra.mxu0 %v595
        %902 = vmatpush.msra.mxu0 %v593
        %903 = vmatpush.msra.mxu0 %v591
        %904 = vmatpush.msra.mxu0 %v589
        %905 = vmatpush.msra.mxu0 %v587
        %906 = vmatpush.msra.mxu0 %v585
        %907 = vmatpush.msra.mxu0 %v583
        %908 = vmatpush.msra.mxu0 %v581
        %909 = vmatpush.msra.mxu0 %v579
        %910 = vmatpush.msra.mxu0 %v577
        %911 = vmatpush.msra.mxu0 %v575
        %912 = vmatpush.msra.mxu0 %v573
        %913 = vmatpush.msra.mxu0 %v571
        %914 = vmatpush.msra.mxu0 %v569
        %915 = vmatpush.msra.mxu0 %v567
        %916 = vmatpush.msra.mxu0 %v565
        %917 = vmatmul.f32.gmra.mxu0 %v335
        %v918 = vpop.f32.mrf.mxu0
        %v919 = vadd.f32 %v899, %v918
        %920 = vdwg.mxu0
        %921 = vmatpush.msra.mxu0 %v627
        %922 = vmatpush.msra.mxu0 %v625
        %923 = vmatpush.msra.mxu0 %v623
        %924 = vmatpush.msra.mxu0 %v621
        %925 = vmatpush.msra.mxu0 %v619
        %926 = vmatpush.msra.mxu0 %v617
        %927 = vmatpush.msra.mxu0 %v615
        %928 = vmatpush.msra.mxu0 %v613
        %929 = vmatpush.msra.mxu0 %v611
        %930 = vmatpush.msra.mxu0 %v609
        %931 = vmatpush.msra.mxu0 %v607
        %932 = vmatpush.msra.mxu0 %v605
        %933 = vmatpush.msra.mxu0 %v603
        %934 = vmatpush.msra.mxu0 %v601
        %935 = vmatpush.msra.mxu0 %v599
        %936 = vmatpush.msra.mxu0 %v597
        %937 = vmatmul.f32.gmra.mxu0 %v337
        %v938 = vpop.f32.mrf.mxu0
        %v939 = vadd.f32 %v919, %v938
        %940 = vdwg.mxu0
        %941 = vmatpush.msra.mxu0 %v659
        %942 = vmatpush.msra.mxu0 %v657
        %943 = vmatpush.msra.mxu0 %v655
        %944 = vmatpush.msra.mxu0 %v653
        %945 = vmatpush.msra.mxu0 %v651
        %946 = vmatpush.msra.mxu0 %v649
        %947 = vmatpush.msra.mxu0 %v647
        %948 = vmatpush.msra.mxu0 %v645
        %949 = vmatpush.msra.mxu0 %v643
        %950 = vmatpush.msra.mxu0 %v641
        %951 = vmatpush.msra.mxu0 %v639
        %952 = vmatpush.msra.mxu0 %v637
        %953 = vmatpush.msra.mxu0 %v635
        %954 = vmatpush.msra.mxu0 %v633
        %955 = vmatpush.msra.mxu0 %v631
        %956 = vmatpush.msra.mxu0 %v629
        %957 = vmatmul.f32.gmra.mxu0 %v338
        %v958 = vpop.f32.mrf.mxu0
        %v959 = vadd.f32 %v939, %v958
        %960 = vdwg.mxu0
        %961 = vmatpush.msra.mxu0 %v532
        %962 = vmatpush.msra.mxu0 %v530
        %963 = vmatpush.msra.mxu0 %v528
        %964 = vmatpush.msra.mxu0 %v526
        %965 = vmatpush.msra.mxu0 %v524
        %966 = vmatpush.msra.mxu0 %v522
        %967 = vmatpush.msra.mxu0 %v520
        %968 = vmatpush.msra.mxu0 %v518
        %969 = vmatpush.msra.mxu0 %v516
        %970 = vmatpush.msra.mxu0 %v514
        %971 = vmatpush.msra.mxu0 %v512
        %972 = vmatpush.msra.mxu0 %v510
        %973 = vmatpush.msra.mxu0 %v508
        %974 = vmatpush.msra.mxu0 %v506
        %975 = vmatpush.msra.mxu0 %v504
        %976 = vmatpush.msra.mxu0 %v502
        %977 = vmatmul.f32.gmra.mxu0 %v331
        %v978 = vpop.f32.mrf.mxu0
        %v979 = vadd.f32 0.0, %v978
        %980 = vdwg.mxu0
        %981 = vmatpush.msra.mxu0 %v564
        %982 = vmatpush.msra.mxu0 %v562
        %983 = vmatpush.msra.mxu0 %v560
        %984 = vmatpush.msra.mxu0 %v558
        %985 = vmatpush.msra.mxu0 %v556
        %986 = vmatpush.msra.mxu0 %v554
        %987 = vmatpush.msra.mxu0 %v552
        %988 = vmatpush.msra.mxu0 %v550
        %989 = vmatpush.msra.mxu0 %v548
        %990 = vmatpush.msra.mxu0 %v546
        %991 = vmatpush.msra.mxu0 %v544
        %992 = vmatpush.msra.mxu0 %v542
        %993 = vmatpush.msra.mxu0 %v540
        %994 = vmatpush.msra.mxu0 %v538
        %995 = vmatpush.msra.mxu0 %v536
        %996 = vmatpush.msra.mxu0 %v534
        %997 = vmatmul.f32.gmra.mxu0 %v333
        %v998 = vpop.f32.mrf.mxu0
        %v999 = vadd.f32 %v979, %v998
        %1000 = vdwg.mxu0
        %1001 = vmatpush.msra.mxu0 %v596
        %1002 = vmatpush.msra.mxu0 %v594
        %1003 = vmatpush.msra.mxu0 %v592
        %1004 = vmatpush.msra.mxu0 %v590
        %1005 = vmatpush.msra.mxu0 %v588
        %1006 = vmatpush.msra.mxu0 %v586
        %1007 = vmatpush.msra.mxu0 %v584
        %1008 = vmatpush.msra.mxu0 %v582
        %1009 = vmatpush.msra.mxu0 %v580
        %1010 = vmatpush.msra.mxu0 %v578
        %1011 = vmatpush.msra.mxu0 %v576
        %1012 = vmatpush.msra.mxu0 %v574
        %1013 = vmatpush.msra.mxu0 %v572
        %1014 = vmatpush.msra.mxu0 %v570
        %1015 = vmatpush.msra.mxu0 %v568
        %1016 = vmatpush.msra.mxu0 %v566
        %1017 = vmatmul.f32.gmra.mxu0 %v335
        %v1018 = vpop.f32.mrf.mxu0
        %v1019 = vadd.f32 %v999, %v1018
        %1020 = vdwg.mxu0
        %1021 = vmatpush.msra.mxu0 %v628
        %1022 = vmatpush.msra.mxu0 %v626
        %1023 = vmatpush.msra.mxu0 %v624
        %1024 = vmatpush.msra.mxu0 %v622
        %1025 = vmatpush.msra.mxu0 %v620
        %1026 = vmatpush.msra.mxu0 %v618
        %1027 = vmatpush.msra.mxu0 %v616
        %1028 = vmatpush.msra.mxu0 %v614
        %1029 = vmatpush.msra.mxu0 %v612
        %1030 = vmatpush.msra.mxu0 %v610
        %1031 = vmatpush.msra.mxu0 %v608
        %1032 = vmatpush.msra.mxu0 %v606
        %1033 = vmatpush.msra.mxu0 %v604
        %1034 = vmatpush.msra.mxu0 %v602
        %1035 = vmatpush.msra.mxu0 %v600
        %1036 = vmatpush.msra.mxu0 %v598
        %1037 = vmatmul.f32.gmra.mxu0 %v337
        %v1038 = vpop.f32.mrf.mxu0
        %v1039 = vadd.f32 %v1019, %v1038
        %1040 = vdwg.mxu0
        %1041 = vmatpush.msra.mxu0 %v660
        %1042 = vmatpush.msra.mxu0 %v658
        %1043 = vmatpush.msra.mxu0 %v656
        %1044 = vmatpush.msra.mxu0 %v654
        %1045 = vmatpush.msra.mxu0 %v652
        %1046 = vmatpush.msra.mxu0 %v650
        %1047 = vmatpush.msra.mxu0 %v648
        %1048 = vmatpush.msra.mxu0 %v646
        %1049 = vmatpush.msra.mxu0 %v644
        %1050 = vmatpush.msra.mxu0 %v642
        %1051 = vmatpush.msra.mxu0 %v640
        %1052 = vmatpush.msra.mxu0 %v638
        %1053 = vmatpush.msra.mxu0 %v636
        %1054 = vmatpush.msra.mxu0 %v634
        %1055 = vmatpush.msra.mxu0 %v632
        %1056 = vmatpush.msra.mxu0 %v630
        %1057 = vmatmul.f32.gmra.mxu0 %v338
        %v1058 = vpop.f32.mrf.mxu0
        %v1059 = vadd.f32 %v1039, %v1058
        %1060 = vdwg.mxu0
        %1061 = vmatpush.msra.mxu0 %v370
        %1062 = vmatpush.msra.mxu0 %v368
        %1063 = vmatpush.msra.mxu0 %v366
        %1064 = vmatpush.msra.mxu0 %v364
        %1065 = vmatpush.msra.mxu0 %v362
        %1066 = vmatpush.msra.mxu0 %v360
        %1067 = vmatpush.msra.mxu0 %v358
        %1068 = vmatpush.msra.mxu0 %v356
        %1069 = vmatpush.msra.mxu0 %v354
        %1070 = vmatpush.msra.mxu0 %v352
        %1071 = vmatpush.msra.mxu0 %v350
        %1072 = vmatpush.msra.mxu0 %v348
        %1073 = vmatpush.msra.mxu0 %v346
        %1074 = vmatpush.msra.mxu0 %v344
        %1075 = vmatpush.msra.mxu0 %v342
        %1076 = vmatpush.msra.mxu0 %v340
        %1077 = vmatmul.f32.gmra.mxu0 %v333
        %v1078 = vpop.f32.mrf.mxu0
        %v1079 = vadd.f32 0.0, %v1078
        %1080 = vdwg.mxu0
        %1081 = vmatpush.msra.mxu0 %v402
        %1082 = vmatpush.msra.mxu0 %v400
        %1083 = vmatpush.msra.mxu0 %v398
        %1084 = vmatpush.msra.mxu0 %v396
        %1085 = vmatpush.msra.mxu0 %v394
        %1086 = vmatpush.msra.mxu0 %v392
        %1087 = vmatpush.msra.mxu0 %v390
        %1088 = vmatpush.msra.mxu0 %v388
        %1089 = vmatpush.msra.mxu0 %v386
        %1090 = vmatpush.msra.mxu0 %v384
        %1091 = vmatpush.msra.mxu0 %v382
        %1092 = vmatpush.msra.mxu0 %v380
        %1093 = vmatpush.msra.mxu0 %v378
        %1094 = vmatpush.msra.mxu0 %v376
        %1095 = vmatpush.msra.mxu0 %v374
        %1096 = vmatpush.msra.mxu0 %v372
        %1097 = vmatmul.f32.gmra.mxu0 %v335
        %v1098 = vpop.f32.mrf.mxu0
        %v1099 = vadd.f32 %v1079, %v1098
        %1100 = vdwg.mxu0
        %1101 = vmatpush.msra.mxu0 %v434
        %1102 = vmatpush.msra.mxu0 %v432
        %1103 = vmatpush.msra.mxu0 %v430
        %1104 = vmatpush.msra.mxu0 %v428
        %1105 = vmatpush.msra.mxu0 %v426
        %1106 = vmatpush.msra.mxu0 %v424
        %1107 = vmatpush.msra.mxu0 %v422
        %1108 = vmatpush.msra.mxu0 %v420
        %1109 = vmatpush.msra.mxu0 %v418
        %1110 = vmatpush.msra.mxu0 %v416
        %1111 = vmatpush.msra.mxu0 %v414
        %1112 = vmatpush.msra.mxu0 %v412
        %1113 = vmatpush.msra.mxu0 %v410
        %1114 = vmatpush.msra.mxu0 %v408
        %1115 = vmatpush.msra.mxu0 %v406
        %1116 = vmatpush.msra.mxu0 %v404
        %1117 = vmatmul.f32.gmra.mxu0 %v337
        %v1118 = vpop.f32.mrf.mxu0
        %v1119 = vadd.f32 %v1099, %v1118
        %1120 = vdwg.mxu0
        %1121 = vmatpush.msra.mxu0 %v466
        %1122 = vmatpush.msra.mxu0 %v464
        %1123 = vmatpush.msra.mxu0 %v462
        %1124 = vmatpush.msra.mxu0 %v460
        %1125 = vmatpush.msra.mxu0 %v458
        %1126 = vmatpush.msra.mxu0 %v456
        %1127 = vmatpush.msra.mxu0 %v454
        %1128 = vmatpush.msra.mxu0 %v452
        %1129 = vmatpush.msra.mxu0 %v450
        %1130 = vmatpush.msra.mxu0 %v448
        %1131 = vmatpush.msra.mxu0 %v446
        %1132 = vmatpush.msra.mxu0 %v444
        %1133 = vmatpush.msra.mxu0 %v442
        %1134 = vmatpush.msra.mxu0 %v440
        %1135 = vmatpush.msra.mxu0 %v438
        %1136 = vmatpush.msra.mxu0 %v436
        %1137 = vmatmul.f32.gmra.mxu0 %v338
        %v1138 = vpop.f32.mrf.mxu0
        %v1139 = vadd.f32 %v1119, %v1138
        %1140 = vdwg.mxu0
        %1141 = vmatpush.msra.mxu0 %v498
        %1142 = vmatpush.msra.mxu0 %v496
        %1143 = vmatpush.msra.mxu0 %v494
        %1144 = vmatpush.msra.mxu0 %v492
        %1145 = vmatpush.msra.mxu0 %v490
        %1146 = vmatpush.msra.mxu0 %v488
        %1147 = vmatpush.msra.mxu0 %v486
        %1148 = vmatpush.msra.mxu0 %v484
        %1149 = vmatpush.msra.mxu0 %v482
        %1150 = vmatpush.msra.mxu0 %v480
        %1151 = vmatpush.msra.mxu0 %v478
        %1152 = vmatpush.msra.mxu0 %v476
        %1153 = vmatpush.msra.mxu0 %v474
        %1154 = vmatpush.msra.mxu0 %v472
        %1155 = vmatpush.msra.mxu0 %v470
        %1156 = vmatpush.msra.mxu0 %v468
        %1157 = vmatmul.f32.gmra.mxu0 %v339
        %v1158 = vpop.f32.mrf.mxu0
        %v1159 = vadd.f32 %v1139, %v1158
        %1160 = vdwg.mxu0
        %1161 = vmatpush.msra.mxu0 %v371
        %1162 = vmatpush.msra.mxu0 %v369
        %1163 = vmatpush.msra.mxu0 %v367
        %1164 = vmatpush.msra.mxu0 %v365
        %1165 = vmatpush.msra.mxu0 %v363
        %1166 = vmatpush.msra.mxu0 %v361
        %1167 = vmatpush.msra.mxu0 %v359
        %1168 = vmatpush.msra.mxu0 %v357
        %1169 = vmatpush.msra.mxu0 %v355
        %1170 = vmatpush.msra.mxu0 %v353
        %1171 = vmatpush.msra.mxu0 %v351
        %1172 = vmatpush.msra.mxu0 %v349
        %1173 = vmatpush.msra.mxu0 %v347
        %1174 = vmatpush.msra.mxu0 %v345
        %1175 = vmatpush.msra.mxu0 %v343
        %1176 = vmatpush.msra.mxu0 %v341
        %1177 = vmatmul.f32.gmra.mxu0 %v333
        %v1178 = vpop.f32.mrf.mxu0
        %v1179 = vadd.f32 0.0, %v1178
        %1180 = vdwg.mxu0
        %1181 = vmatpush.msra.mxu0 %v403
        %1182 = vmatpush.msra.mxu0 %v401
        %1183 = vmatpush.msra.mxu0 %v399
        %1184 = vmatpush.msra.mxu0 %v397
        %1185 = vmatpush.msra.mxu0 %v395
        %1186 = vmatpush.msra.mxu0 %v393
        %1187 = vmatpush.msra.mxu0 %v391
        %1188 = vmatpush.msra.mxu0 %v389
        %1189 = vmatpush.msra.mxu0 %v387
        %1190 = vmatpush.msra.mxu0 %v385
        %1191 = vmatpush.msra.mxu0 %v383
        %1192 = vmatpush.msra.mxu0 %v381
        %1193 = vmatpush.msra.mxu0 %v379
        %1194 = vmatpush.msra.mxu0 %v377
        %1195 = vmatpush.msra.mxu0 %v375
        %1196 = vmatpush.msra.mxu0 %v373
        %1197 = vmatmul.f32.gmra.mxu0 %v335
        %v1198 = vpop.f32.mrf.mxu0
        %v1199 = vadd.f32 %v1179, %v1198
        %1200 = vdwg.mxu0
        %1201 = vmatpush.msra.mxu0 %v435
        %1202 = vmatpush.msra.mxu0 %v433
        %1203 = vmatpush.msra.mxu0 %v431
        %1204 = vmatpush.msra.mxu0 %v429
        %1205 = vmatpush.msra.mxu0 %v427
        %1206 = vmatpush.msra.mxu0 %v425
        %1207 = vmatpush.msra.mxu0 %v423
        %1208 = vmatpush.msra.mxu0 %v421
        %1209 = vmatpush.msra.mxu0 %v419
        %1210 = vmatpush.msra.mxu0 %v417
        %1211 = vmatpush.msra.mxu0 %v415
        %1212 = vmatpush.msra.mxu0 %v413
        %1213 = vmatpush.msra.mxu0 %v411
        %1214 = vmatpush.msra.mxu0 %v409
        %1215 = vmatpush.msra.mxu0 %v407
        %1216 = vmatpush.msra.mxu0 %v405
        %1217 = vmatmul.f32.gmra.mxu0 %v337
        %v1218 = vpop.f32.mrf.mxu0
        %v1219 = vadd.f32 %v1199, %v1218
        %1220 = vdwg.mxu0
        %1221 = vmatpush.msra.mxu0 %v467
        %1222 = vmatpush.msra.mxu0 %v465
        %1223 = vmatpush.msra.mxu0 %v463
        %1224 = vmatpush.msra.mxu0 %v461
        %1225 = vmatpush.msra.mxu0 %v459
        %1226 = vmatpush.msra.mxu0 %v457
        %1227 = vmatpush.msra.mxu0 %v455
        %1228 = vmatpush.msra.mxu0 %v453
        %1229 = vmatpush.msra.mxu0 %v451
        %1230 = vmatpush.msra.mxu0 %v449
        %1231 = vmatpush.msra.mxu0 %v447
        %1232 = vmatpush.msra.mxu0 %v445
        %1233 = vmatpush.msra.mxu0 %v443
        %1234 = vmatpush.msra.mxu0 %v441
        %1235 = vmatpush.msra.mxu0 %v439
        %1236 = vmatpush.msra.mxu0 %v437
        %1237 = vmatmul.f32.gmra.mxu0 %v338
        %v1238 = vpop.f32.mrf.mxu0
        %v1239 = vadd.f32 %v1219, %v1238
        %1240 = vdwg.mxu0
        %1241 = vmatpush.msra.mxu0 %v499
        %1242 = vmatpush.msra.mxu0 %v497
        %1243 = vmatpush.msra.mxu0 %v495
        %1244 = vmatpush.msra.mxu0 %v493
        %1245 = vmatpush.msra.mxu0 %v491
        %1246 = vmatpush.msra.mxu0 %v489
        %1247 = vmatpush.msra.mxu0 %v487
        %1248 = vmatpush.msra.mxu0 %v485
        %1249 = vmatpush.msra.mxu0 %v483
        %1250 = vmatpush.msra.mxu0 %v481
        %1251 = vmatpush.msra.mxu0 %v479
        %1252 = vmatpush.msra.mxu0 %v477
        %1253 = vmatpush.msra.mxu0 %v475
        %1254 = vmatpush.msra.mxu0 %v473
        %1255 = vmatpush.msra.mxu0 %v471
        %1256 = vmatpush.msra.mxu0 %v469
        %1257 = vmatmul.f32.gmra.mxu0 %v339
        %v1258 = vpop.f32.mrf.mxu0
        %v1259 = vadd.f32 %v1239, %v1258
        %1260 = vdwg.mxu0
        %1261 = vmatpush.msra.mxu0 %v531
        %1262 = vmatpush.msra.mxu0 %v529
        %1263 = vmatpush.msra.mxu0 %v527
        %1264 = vmatpush.msra.mxu0 %v525
        %1265 = vmatpush.msra.mxu0 %v523
        %1266 = vmatpush.msra.mxu0 %v521
        %1267 = vmatpush.msra.mxu0 %v519
        %1268 = vmatpush.msra.mxu0 %v517
        %1269 = vmatpush.msra.mxu0 %v515
        %1270 = vmatpush.msra.mxu0 %v513
        %1271 = vmatpush.msra.mxu0 %v511
        %1272 = vmatpush.msra.mxu0 %v509
        %1273 = vmatpush.msra.mxu0 %v507
        %1274 = vmatpush.msra.mxu0 %v505
        %1275 = vmatpush.msra.mxu0 %v503
        %1276 = vmatpush.msra.mxu0 %v501
        %1277 = vmatmul.f32.gmra.mxu0 %v333
        %v1278 = vpop.f32.mrf.mxu0
        %v1279 = vadd.f32 0.0, %v1278
        %1280 = vdwg.mxu0
        %1281 = vmatpush.msra.mxu0 %v563
        %1282 = vmatpush.msra.mxu0 %v561
        %1283 = vmatpush.msra.mxu0 %v559
        %1284 = vmatpush.msra.mxu0 %v557
        %1285 = vmatpush.msra.mxu0 %v555
        %1286 = vmatpush.msra.mxu0 %v553
        %1287 = vmatpush.msra.mxu0 %v551
        %1288 = vmatpush.msra.mxu0 %v549
        %1289 = vmatpush.msra.mxu0 %v547
        %1290 = vmatpush.msra.mxu0 %v545
        %1291 = vmatpush.msra.mxu0 %v543
        %1292 = vmatpush.msra.mxu0 %v541
        %1293 = vmatpush.msra.mxu0 %v539
        %1294 = vmatpush.msra.mxu0 %v537
        %1295 = vmatpush.msra.mxu0 %v535
        %1296 = vmatpush.msra.mxu0 %v533
        %1297 = vmatmul.f32.gmra.mxu0 %v335
        %v1298 = vpop.f32.mrf.mxu0
        %v1299 = vadd.f32 %v1279, %v1298
        %1300 = vdwg.mxu0
        %1301 = vmatpush.msra.mxu0 %v595
        %1302 = vmatpush.msra.mxu0 %v593
        %1303 = vmatpush.msra.mxu0 %v591
        %1304 = vmatpush.msra.mxu0 %v589
        %1305 = vmatpush.msra.mxu0 %v587
        %1306 = vmatpush.msra.mxu0 %v585
        %1307 = vmatpush.msra.mxu0 %v583
        %1308 = vmatpush.msra.mxu0 %v581
        %1309 = vmatpush.msra.mxu0 %v579
        %1310 = vmatpush.msra.mxu0 %v577
        %1311 = vmatpush.msra.mxu0 %v575
        %1312 = vmatpush.msra.mxu0 %v573
        %1313 = vmatpush.msra.mxu0 %v571
        %1314 = vmatpush.msra.mxu0 %v569
        %1315 = vmatpush.msra.mxu0 %v567
        %1316 = vmatpush.msra.mxu0 %v565
        %1317 = vmatmul.f32.gmra.mxu0 %v337
        %v1318 = vpop.f32.mrf.mxu0
        %v1319 = vadd.f32 %v1299, %v1318
        %1320 = vdwg.mxu0
        %1321 = vmatpush.msra.mxu0 %v627
        %1322 = vmatpush.msra.mxu0 %v625
        %1323 = vmatpush.msra.mxu0 %v623
        %1324 = vmatpush.msra.mxu0 %v621
        %1325 = vmatpush.msra.mxu0 %v619
        %1326 = vmatpush.msra.mxu0 %v617
        %1327 = vmatpush.msra.mxu0 %v615
        %1328 = vmatpush.msra.mxu0 %v613
        %1329 = vmatpush.msra.mxu0 %v611
        %1330 = vmatpush.msra.mxu0 %v609
        %1331 = vmatpush.msra.mxu0 %v607
        %1332 = vmatpush.msra.mxu0 %v605
        %1333 = vmatpush.msra.mxu0 %v603
        %1334 = vmatpush.msra.mxu0 %v601
        %1335 = vmatpush.msra.mxu0 %v599
        %1336 = vmatpush.msra.mxu0 %v597
        %1337 = vmatmul.f32.gmra.mxu0 %v338
        %v1338 = vpop.f32.mrf.mxu0
        %v1339 = vadd.f32 %v1319, %v1338
        %1340 = vdwg.mxu0
        %1341 = vmatpush.msra.mxu0 %v659
        %1342 = vmatpush.msra.mxu0 %v657
        %1343 = vmatpush.msra.mxu0 %v655
        %1344 = vmatpush.msra.mxu0 %v653
        %1345 = vmatpush.msra.mxu0 %v651
        %1346 = vmatpush.msra.mxu0 %v649
        %1347 = vmatpush.msra.mxu0 %v647
        %1348 = vmatpush.msra.mxu0 %v645
        %1349 = vmatpush.msra.mxu0 %v643
        %1350 = vmatpush.msra.mxu0 %v641
        %1351 = vmatpush.msra.mxu0 %v639
        %1352 = vmatpush.msra.mxu0 %v637
        %1353 = vmatpush.msra.mxu0 %v635
        %1354 = vmatpush.msra.mxu0 %v633
        %1355 = vmatpush.msra.mxu0 %v631
        %1356 = vmatpush.msra.mxu0 %v629
        %1357 = vmatmul.f32.gmra.mxu0 %v339
        %v1358 = vpop.f32.mrf.mxu0
        %v1359 = vadd.f32 %v1339, %v1358
        %1360 = vdwg.mxu0
        %1361 = vmatpush.msra.mxu0 %v532
        %1362 = vmatpush.msra.mxu0 %v530
        %1363 = vmatpush.msra.mxu0 %v528
        %1364 = vmatpush.msra.mxu0 %v526
        %1365 = vmatpush.msra.mxu0 %v524
        %1366 = vmatpush.msra.mxu0 %v522
        %1367 = vmatpush.msra.mxu0 %v520
        %1368 = vmatpush.msra.mxu0 %v518
        %1369 = vmatpush.msra.mxu0 %v516
        %1370 = vmatpush.msra.mxu0 %v514
        %1371 = vmatpush.msra.mxu0 %v512
        %1372 = vmatpush.msra.mxu0 %v510
        %1373 = vmatpush.msra.mxu0 %v508
        %1374 = vmatpush.msra.mxu0 %v506
        %1375 = vmatpush.msra.mxu0 %v504
        %1376 = vmatpush.msra.mxu0 %v502
        %1377 = vmatmul.f32.gmra.mxu0 %v333
        %v1378 = vpop.f32.mrf.mxu0
        %v1379 = vadd.f32 0.0, %v1378
        %1380 = vdwg.mxu0
        %1381 = vmatpush.msra.mxu0 %v564
        %1382 = vmatpush.msra.mxu0 %v562
        %1383 = vmatpush.msra.mxu0 %v560
        %1384 = vmatpush.msra.mxu0 %v558
        %1385 = vmatpush.msra.mxu0 %v556
        %1386 = vmatpush.msra.mxu0 %v554
        %1387 = vmatpush.msra.mxu0 %v552
        %1388 = vmatpush.msra.mxu0 %v550
        %1389 = vmatpush.msra.mxu0 %v548
        %1390 = vmatpush.msra.mxu0 %v546
        %1391 = vmatpush.msra.mxu0 %v544
        %1392 = vmatpush.msra.mxu0 %v542
        %1393 = vmatpush.msra.mxu0 %v540
        %1394 = vmatpush.msra.mxu0 %v538
        %1395 = vmatpush.msra.mxu0 %v536
        %1396 = vmatpush.msra.mxu0 %v534
        %1397 = vmatmul.f32.gmra.mxu0 %v335
        %v1398 = vpop.f32.mrf.mxu0
        %v1399 = vadd.f32 %v1379, %v1398
        %1400 = vdwg.mxu0
        %1401 = vmatpush.msra.mxu0 %v596
        %1402 = vmatpush.msra.mxu0 %v594
        %1403 = vmatpush.msra.mxu0 %v592
        %1404 = vmatpush.msra.mxu0 %v590
        %1405 = vmatpush.msra.mxu0 %v588
        %1406 = vmatpush.msra.mxu0 %v586
        %1407 = vmatpush.msra.mxu0 %v584
        %1408 = vmatpush.msra.mxu0 %v582
        %1409 = vmatpush.msra.mxu0 %v580
        %1410 = vmatpush.msra.mxu0 %v578
        %1411 = vmatpush.msra.mxu0 %v576
        %1412 = vmatpush.msra.mxu0 %v574
        %1413 = vmatpush.msra.mxu0 %v572
        %1414 = vmatpush.msra.mxu0 %v570
        %1415 = vmatpush.msra.mxu0 %v568
        %1416 = vmatpush.msra.mxu0 %v566
        %1417 = vmatmul.f32.gmra.mxu0 %v337
        %v1418 = vpop.f32.mrf.mxu0
        %v1419 = vadd.f32 %v1399, %v1418
        %1420 = vdwg.mxu0
        %1421 = vmatpush.msra.mxu0 %v628
        %1422 = vmatpush.msra.mxu0 %v626
        %1423 = vmatpush.msra.mxu0 %v624
        %1424 = vmatpush.msra.mxu0 %v622
        %1425 = vmatpush.msra.mxu0 %v620
        %1426 = vmatpush.msra.mxu0 %v618
        %1427 = vmatpush.msra.mxu0 %v616
        %1428 = vmatpush.msra.mxu0 %v614
        %1429 = vmatpush.msra.mxu0 %v612
        %1430 = vmatpush.msra.mxu0 %v610
        %1431 = vmatpush.msra.mxu0 %v608
        %1432 = vmatpush.msra.mxu0 %v606
        %1433 = vmatpush.msra.mxu0 %v604
        %1434 = vmatpush.msra.mxu0 %v602
        %1435 = vmatpush.msra.mxu0 %v600
        %1436 = vmatpush.msra.mxu0 %v598
        %1437 = vmatmul.f32.gmra.mxu0 %v338
        %v1438 = vpop.f32.mrf.mxu0
        %v1439 = vadd.f32 %v1419, %v1438
        %1440 = vdwg.mxu0
        %1441 = vmatpush.msra.mxu0 %v660
        %1442 = vmatpush.msra.mxu0 %v658
        %1443 = vmatpush.msra.mxu0 %v656
        %1444 = vmatpush.msra.mxu0 %v654
        %1445 = vmatpush.msra.mxu0 %v652
        %1446 = vmatpush.msra.mxu0 %v650
        %1447 = vmatpush.msra.mxu0 %v648
        %1448 = vmatpush.msra.mxu0 %v646
        %1449 = vmatpush.msra.mxu0 %v644
        %1450 = vmatpush.msra.mxu0 %v642
        %1451 = vmatpush.msra.mxu0 %v640
        %1452 = vmatpush.msra.mxu0 %v638
        %1453 = vmatpush.msra.mxu0 %v636
        %1454 = vmatpush.msra.mxu0 %v634
        %1455 = vmatpush.msra.mxu0 %v632
        %1456 = vmatpush.msra.mxu0 %v630
        %1457 = vmatmul.f32.gmra.mxu0 %v339
        %v1458 = vpop.f32.mrf.mxu0
        %v1459 = vadd.f32 %v1439, %v1458
        %1460 = vdwg.mxu0
        %v1461 = vmax.f32 %v759, %v959
        %v1462 = vmax.f32 %v859, %v1059
        %v1463 = vmax.f32 %v1159, %v1359
        %v1464 = vmax.f32 %v1259, %v1459
        %v1465 = vmax.f32 %v1461, %v1463
        %v1466 = vmax.f32 %v1462, %v1464
        %v1468 = vperm.slane %v330, 0
        %v1469 = vperm.slane %v330, 1
        %v1472 = vadd.f32 %v1465, %v1468
        %v1473 = vadd.f32 %v1466, %v1469
        %v1474 = vmax.f32 %v1472, 0.0
        %v1475 = vmax.f32 %v1473, 0.0
        %1476 = vst [vmem:[#allocation2] sm:$0x3f] %v1474
        %1477 = vst [vmem:[#allocation2 + $0x8] sm:$0x3f] %v1475
        %v1478 = vld [vmem:[%s2] sm:$0x3]
        %v1479 = vld [vmem:[%s334] sm:$0x3f]
        %v1480 = vld [vmem:[%s336] sm:$0x3f]
        %v1481 = vld [vmem:[%s329 + $0x1] sm:$0x3f]
        %v1482 = vld [vmem:[%s332 + $0x1] sm:$0x3f]
        %v1483 = vld [vmem:[%s334 + $0x1] sm:$0x3f]
        %v1484 = vld [vmem:[%s336 + $0x1] sm:$0x3f]
        %v1485 = vld [vmem:[%s1] sm:$0xff]
        %v1486 = vld [vmem:[%s1 + $0x8] sm:$0xff]
        %v1487 = vld [vmem:[%s1 + $0x10] sm:$0xff]
        %v1488 = vld [vmem:[%s1 + $0x18] sm:$0xff]
        %v1489 = vld [vmem:[%s1 + $0x20] sm:$0xff]
        %v1490 = vld [vmem:[%s1 + $0x28] sm:$0xff]
        %v1491 = vld [vmem:[%s1 + $0x30] sm:$0xff]
        %v1492 = vld [vmem:[%s1 + $0x38] sm:$0xff]
        %v1493 = vld [vmem:[%s1 + $0x40] sm:$0xff]
        %v1494 = vld [vmem:[%s1 + $0x48] sm:$0xff]
        %v1495 = vld [vmem:[%s1 + $0x50] sm:$0xff]
        %v1496 = vld [vmem:[%s1 + $0x58] sm:$0xff]
        %v1497 = vld [vmem:[%s1 + $0x60] sm:$0xff]
        %v1498 = vld [vmem:[%s1 + $0x68] sm:$0xff]
        %v1499 = vld [vmem:[%s1 + $0x70] sm:$0xff]
        %v1500 = vld [vmem:[%s1 + $0x78] sm:$0xff]
        %v1501 = vld [vmem:[%s1 + $0x80] sm:$0xff]
        %v1502 = vld [vmem:[%s1 + $0x88] sm:$0xff]
        %v1503 = vld [vmem:[%s1 + $0x90] sm:$0xff]
        %v1504 = vld [vmem:[%s1 + $0x98] sm:$0xff]
        %v1505 = vld [vmem:[%s1 + $0xa0] sm:$0xff]
        %v1506 = vld [vmem:[%s1 + $0xa8] sm:$0xff]
        %v1507 = vld [vmem:[%s1 + $0xb0] sm:$0xff]
        %v1508 = vld [vmem:[%s1 + $0xb8] sm:$0xff]
        %v1509 = vld [vmem:[%s1 + $0xc0] sm:$0xff]
        %v1510 = vld [vmem:[%s1 + $0xc8] sm:$0xff]
        %v1511 = vld [vmem:[%s1 + $0xd0] sm:$0xff]
        %v1512 = vld [vmem:[%s1 + $0xd8] sm:$0xff]
        %v1513 = vld [vmem:[%s1 + $0xe0] sm:$0xff]
        %v1514 = vld [vmem:[%s1 + $0xe8] sm:$0xff]
        %v1515 = vld [vmem:[%s1 + $0xf0] sm:$0xff]
        %v1516 = vld [vmem:[%s1 + $0xf8] sm:$0xff]
        %v1517 = vld [vmem:[%s1 + $0x100] sm:$0xff]
        %v1518 = vld [vmem:[%s1 + $0x108] sm:$0xff]
        %v1519 = vld [vmem:[%s1 + $0x110] sm:$0xff]
        %v1520 = vld [vmem:[%s1 + $0x118] sm:$0xff]
        %v1521 = vld [vmem:[%s1 + $0x120] sm:$0xff]
        %v1522 = vld [vmem:[%s1 + $0x128] sm:$0xff]
        %v1523 = vld [vmem:[%s1 + $0x130] sm:$0xff]
        %v1524 = vld [vmem:[%s1 + $0x138] sm:$0xff]
        %v1525 = vld [vmem:[%s1 + $0x140] sm:$0xff]
        %v1526 = vld [vmem:[%s1 + $0x148] sm:$0xff]
        %v1527 = vld [vmem:[%s1 + $0x150] sm:$0xff]
        %v1528 = vld [vmem:[%s1 + $0x158] sm:$0xff]
        %v1529 = vld [vmem:[%s1 + $0x160] sm:$0xff]
        %v1530 = vld [vmem:[%s1 + $0x168] sm:$0xff]
        %v1531 = vld [vmem:[%s1 + $0x170] sm:$0xff]
        %v1532 = vld [vmem:[%s1 + $0x178] sm:$0xff]
        %v1533 = vld [vmem:[%s1 + $0x180] sm:$0xff]
        %v1534 = vld [vmem:[%s1 + $0x188] sm:$0xff]
        %v1535 = vld [vmem:[%s1 + $0x190] sm:$0xff]
        %v1536 = vld [vmem:[%s1 + $0x198] sm:$0xff]
        %v1537 = vld [vmem:[%s1 + $0x1a0] sm:$0xff]
        %v1538 = vld [vmem:[%s1 + $0x1a8] sm:$0xff]
        %v1539 = vld [vmem:[%s1 + $0x1b0] sm:$0xff]
        %v1540 = vld [vmem:[%s1 + $0x1b8] sm:$0xff]
        %v1541 = vld [vmem:[%s1 + $0x1c0] sm:$0xff]
        %v1542 = vld [vmem:[%s1 + $0x1c8] sm:$0xff]
        %v1543 = vld [vmem:[%s1 + $0x1d0] sm:$0xff]
        %v1544 = vld [vmem:[%s1 + $0x1d8] sm:$0xff]
        %v1545 = vld [vmem:[%s1 + $0x1e0] sm:$0xff]
        %v1546 = vld [vmem:[%s1 + $0x1e8] sm:$0xff]
        %v1547 = vld [vmem:[%s1 + $0x1f0] sm:$0xff]
        %v1548 = vld [vmem:[%s1 + $0x1f8] sm:$0xff]
        %v1549 = vld [vmem:[%s1 + $0x200] sm:$0xff]
        %v1550 = vld [vmem:[%s1 + $0x208] sm:$0xff]
        %v1551 = vld [vmem:[%s1 + $0x210] sm:$0xff]
        %v1552 = vld [vmem:[%s1 + $0x218] sm:$0xff]
        %v1553 = vld [vmem:[%s1 + $0x220] sm:$0xff]
        %v1554 = vld [vmem:[%s1 + $0x228] sm:$0xff]
        %v1555 = vld [vmem:[%s1 + $0x230] sm:$0xff]
        %v1556 = vld [vmem:[%s1 + $0x238] sm:$0xff]
        %v1557 = vld [vmem:[%s1 + $0x240] sm:$0xff]
        %v1558 = vld [vmem:[%s1 + $0x248] sm:$0xff]
        %v1559 = vld [vmem:[%s1 + $0x250] sm:$0xff]
        %v1560 = vld [vmem:[%s1 + $0x258] sm:$0xff]
        %v1561 = vld [vmem:[%s1 + $0x260] sm:$0xff]
        %v1562 = vld [vmem:[%s1 + $0x268] sm:$0xff]
        %v1563 = vld [vmem:[%s1 + $0x270] sm:$0xff]
        %v1564 = vld [vmem:[%s1 + $0x278] sm:$0xff]
        %v1565 = vld [vmem:[%s1 + $0x280] sm:$0xff]
        %v1566 = vld [vmem:[%s1 + $0x288] sm:$0xff]
        %v1567 = vld [vmem:[%s1 + $0x290] sm:$0xff]
        %v1568 = vld [vmem:[%s1 + $0x298] sm:$0xff]
        %v1569 = vld [vmem:[%s1 + $0x2a0] sm:$0xff]
        %v1570 = vld [vmem:[%s1 + $0x2a8] sm:$0xff]
        %v1571 = vld [vmem:[%s1 + $0x2b0] sm:$0xff]
        %v1572 = vld [vmem:[%s1 + $0x2b8] sm:$0xff]
        %v1573 = vld [vmem:[%s1 + $0x2c0] sm:$0xff]
        %v1574 = vld [vmem:[%s1 + $0x2c8] sm:$0xff]
        %v1575 = vld [vmem:[%s1 + $0x2d0] sm:$0xff]
        %v1576 = vld [vmem:[%s1 + $0x2d8] sm:$0xff]
        %v1577 = vld [vmem:[%s1 + $0x2e0] sm:$0xff]
        %v1578 = vld [vmem:[%s1 + $0x2e8] sm:$0xff]
        %v1579 = vld [vmem:[%s1 + $0x2f0] sm:$0xff]
        %v1580 = vld [vmem:[%s1 + $0x2f8] sm:$0xff]
        %v1581 = vld [vmem:[%s1 + $0x300] sm:$0xff]
        %v1582 = vld [vmem:[%s1 + $0x308] sm:$0xff]
        %v1583 = vld [vmem:[%s1 + $0x310] sm:$0xff]
        %v1584 = vld [vmem:[%s1 + $0x318] sm:$0xff]
        %v1585 = vld [vmem:[%s1 + $0x320] sm:$0xff]
        %v1586 = vld [vmem:[%s1 + $0x328] sm:$0xff]
        %v1587 = vld [vmem:[%s1 + $0x330] sm:$0xff]
        %v1588 = vld [vmem:[%s1 + $0x338] sm:$0xff]
        %v1589 = vld [vmem:[%s1 + $0x340] sm:$0xff]
        %v1590 = vld [vmem:[%s1 + $0x348] sm:$0xff]
        %v1591 = vld [vmem:[%s1 + $0x350] sm:$0xff]
        %v1592 = vld [vmem:[%s1 + $0x358] sm:$0xff]
        %v1593 = vld [vmem:[%s1 + $0x360] sm:$0xff]
        %v1594 = vld [vmem:[%s1 + $0x368] sm:$0xff]
        %v1595 = vld [vmem:[%s1 + $0x370] sm:$0xff]
        %v1596 = vld [vmem:[%s1 + $0x378] sm:$0xff]
        %v1597 = vld [vmem:[%s1 + $0x380] sm:$0xff]
        %v1598 = vld [vmem:[%s1 + $0x388] sm:$0xff]
        %v1599 = vld [vmem:[%s1 + $0x390] sm:$0xff]
        %v1600 = vld [vmem:[%s1 + $0x398] sm:$0xff]
        %v1601 = vld [vmem:[%s1 + $0x3a0] sm:$0xff]
        %v1602 = vld [vmem:[%s1 + $0x3a8] sm:$0xff]
        %v1603 = vld [vmem:[%s1 + $0x3b0] sm:$0xff]
        %v1604 = vld [vmem:[%s1 + $0x3b8] sm:$0xff]
        %v1605 = vld [vmem:[%s1 + $0x3c0] sm:$0xff]
        %v1606 = vld [vmem:[%s1 + $0x3c8] sm:$0xff]
        %v1607 = vld [vmem:[%s1 + $0x3d0] sm:$0xff]
        %v1608 = vld [vmem:[%s1 + $0x3d8] sm:$0xff]
        %v1609 = vld [vmem:[%s1 + $0x3e0] sm:$0xff]
        %v1610 = vld [vmem:[%s1 + $0x3e8] sm:$0xff]
        %v1611 = vld [vmem:[%s1 + $0x3f0] sm:$0xff]
        %v1612 = vld [vmem:[%s1 + $0x3f8] sm:$0xff]
        %v1613 = vld [vmem:[%s1 + $0x400] sm:$0xff]
        %v1614 = vld [vmem:[%s1 + $0x408] sm:$0xff]
        %v1615 = vld [vmem:[%s1 + $0x410] sm:$0xff]
        %v1616 = vld [vmem:[%s1 + $0x418] sm:$0xff]
        %v1617 = vld [vmem:[%s1 + $0x420] sm:$0xff]
        %v1618 = vld [vmem:[%s1 + $0x428] sm:$0xff]
        %v1619 = vld [vmem:[%s1 + $0x430] sm:$0xff]
        %v1620 = vld [vmem:[%s1 + $0x438] sm:$0xff]
        %v1621 = vld [vmem:[%s1 + $0x440] sm:$0xff]
        %v1622 = vld [vmem:[%s1 + $0x448] sm:$0xff]
        %v1623 = vld [vmem:[%s1 + $0x450] sm:$0xff]
        %v1624 = vld [vmem:[%s1 + $0x458] sm:$0xff]
        %v1625 = vld [vmem:[%s1 + $0x460] sm:$0xff]
        %v1626 = vld [vmem:[%s1 + $0x468] sm:$0xff]
        %v1627 = vld [vmem:[%s1 + $0x470] sm:$0xff]
        %v1628 = vld [vmem:[%s1 + $0x478] sm:$0xff]
        %v1629 = vld [vmem:[%s1 + $0x480] sm:$0xff]
        %v1630 = vld [vmem:[%s1 + $0x488] sm:$0xff]
        %v1631 = vld [vmem:[%s1 + $0x490] sm:$0xff]
        %v1632 = vld [vmem:[%s1 + $0x498] sm:$0xff]
        %v1633 = vld [vmem:[%s1 + $0x4a0] sm:$0xff]
        %v1634 = vld [vmem:[%s1 + $0x4a8] sm:$0xff]
        %v1635 = vld [vmem:[%s1 + $0x4b0] sm:$0xff]
        %v1636 = vld [vmem:[%s1 + $0x4b8] sm:$0xff]
        %v1637 = vld [vmem:[%s1 + $0x4c0] sm:$0xff]
        %v1638 = vld [vmem:[%s1 + $0x4c8] sm:$0xff]
        %v1639 = vld [vmem:[%s1 + $0x4d0] sm:$0xff]
        %v1640 = vld [vmem:[%s1 + $0x4d8] sm:$0xff]
        %v1641 = vld [vmem:[%s1 + $0x4e0] sm:$0xff]
        %v1642 = vld [vmem:[%s1 + $0x4e8] sm:$0xff]
        %v1643 = vld [vmem:[%s1 + $0x4f0] sm:$0xff]
        %v1644 = vld [vmem:[%s1 + $0x4f8] sm:$0xff]
        %v1645 = vld [vmem:[%s500] sm:$0xff]
        %v1646 = vld [vmem:[%s500 + $0x8] sm:$0xff]
        %v1647 = vld [vmem:[%s500 + $0x10] sm:$0xff]
        %v1648 = vld [vmem:[%s500 + $0x18] sm:$0xff]
        %v1649 = vld [vmem:[%s500 + $0x20] sm:$0xff]
        %v1650 = vld [vmem:[%s500 + $0x28] sm:$0xff]
        %v1651 = vld [vmem:[%s500 + $0x30] sm:$0xff]
        %v1652 = vld [vmem:[%s500 + $0x38] sm:$0xff]
        %v1653 = vld [vmem:[%s500 + $0x40] sm:$0xff]
        %v1654 = vld [vmem:[%s500 + $0x48] sm:$0xff]
        %v1655 = vld [vmem:[%s500 + $0x50] sm:$0xff]
        %v1656 = vld [vmem:[%s500 + $0x58] sm:$0xff]
        %v1657 = vld [vmem:[%s500 + $0x60] sm:$0xff]
        %v1658 = vld [vmem:[%s500 + $0x68] sm:$0xff]
        %v1659 = vld [vmem:[%s500 + $0x70] sm:$0xff]
        %v1660 = vld [vmem:[%s500 + $0x78] sm:$0xff]
        %v1661 = vld [vmem:[%s500 + $0x80] sm:$0xff]
        %v1662 = vld [vmem:[%s500 + $0x88] sm:$0xff]
        %v1663 = vld [vmem:[%s500 + $0x90] sm:$0xff]
        %v1664 = vld [vmem:[%s500 + $0x98] sm:$0xff]
        %v1665 = vld [vmem:[%s500 + $0xa0] sm:$0xff]
        %v1666 = vld [vmem:[%s500 + $0xa8] sm:$0xff]
        %v1667 = vld [vmem:[%s500 + $0xb0] sm:$0xff]
        %v1668 = vld [vmem:[%s500 + $0xb8] sm:$0xff]
        %v1669 = vld [vmem:[%s500 + $0xc0] sm:$0xff]
        %v1670 = vld [vmem:[%s500 + $0xc8] sm:$0xff]
        %v1671 = vld [vmem:[%s500 + $0xd0] sm:$0xff]
        %v1672 = vld [vmem:[%s500 + $0xd8] sm:$0xff]
        %v1673 = vld [vmem:[%s500 + $0xe0] sm:$0xff]
        %v1674 = vld [vmem:[%s500 + $0xe8] sm:$0xff]
        %v1675 = vld [vmem:[%s500 + $0xf0] sm:$0xff]
        %v1676 = vld [vmem:[%s500 + $0xf8] sm:$0xff]
        %v1677 = vld [vmem:[%s500 + $0x100] sm:$0xff]
        %v1678 = vld [vmem:[%s500 + $0x108] sm:$0xff]
        %v1679 = vld [vmem:[%s500 + $0x110] sm:$0xff]
        %v1680 = vld [vmem:[%s500 + $0x118] sm:$0xff]
        %v1681 = vld [vmem:[%s500 + $0x120] sm:$0xff]
        %v1682 = vld [vmem:[%s500 + $0x128] sm:$0xff]
        %v1683 = vld [vmem:[%s500 + $0x130] sm:$0xff]
        %v1684 = vld [vmem:[%s500 + $0x138] sm:$0xff]
        %v1685 = vld [vmem:[%s500 + $0x140] sm:$0xff]
        %v1686 = vld [vmem:[%s500 + $0x148] sm:$0xff]
        %v1687 = vld [vmem:[%s500 + $0x150] sm:$0xff]
        %v1688 = vld [vmem:[%s500 + $0x158] sm:$0xff]
        %v1689 = vld [vmem:[%s500 + $0x160] sm:$0xff]
        %v1690 = vld [vmem:[%s500 + $0x168] sm:$0xff]
        %v1691 = vld [vmem:[%s500 + $0x170] sm:$0xff]
        %v1692 = vld [vmem:[%s500 + $0x178] sm:$0xff]
        %v1693 = vld [vmem:[%s500 + $0x180] sm:$0xff]
        %v1694 = vld [vmem:[%s500 + $0x188] sm:$0xff]
        %v1695 = vld [vmem:[%s500 + $0x190] sm:$0xff]
        %v1696 = vld [vmem:[%s500 + $0x198] sm:$0xff]
        %v1697 = vld [vmem:[%s500 + $0x1a0] sm:$0xff]
        %v1698 = vld [vmem:[%s500 + $0x1a8] sm:$0xff]
        %v1699 = vld [vmem:[%s500 + $0x1b0] sm:$0xff]
        %v1700 = vld [vmem:[%s500 + $0x1b8] sm:$0xff]
        %v1701 = vld [vmem:[%s500 + $0x1c0] sm:$0xff]
        %v1702 = vld [vmem:[%s500 + $0x1c8] sm:$0xff]
        %v1703 = vld [vmem:[%s500 + $0x1d0] sm:$0xff]
        %v1704 = vld [vmem:[%s500 + $0x1d8] sm:$0xff]
        %v1705 = vld [vmem:[%s500 + $0x1e0] sm:$0xff]
        %v1706 = vld [vmem:[%s500 + $0x1e8] sm:$0xff]
        %v1707 = vld [vmem:[%s500 + $0x1f0] sm:$0xff]
        %v1708 = vld [vmem:[%s500 + $0x1f8] sm:$0xff]
        %v1709 = vld [vmem:[%s500 + $0x200] sm:$0xff]
        %v1710 = vld [vmem:[%s500 + $0x208] sm:$0xff]
        %v1711 = vld [vmem:[%s500 + $0x210] sm:$0xff]
        %v1712 = vld [vmem:[%s500 + $0x218] sm:$0xff]
        %v1713 = vld [vmem:[%s500 + $0x220] sm:$0xff]
        %v1714 = vld [vmem:[%s500 + $0x228] sm:$0xff]
        %v1715 = vld [vmem:[%s500 + $0x230] sm:$0xff]
        %v1716 = vld [vmem:[%s500 + $0x238] sm:$0xff]
        %v1717 = vld [vmem:[%s500 + $0x240] sm:$0xff]
        %v1718 = vld [vmem:[%s500 + $0x248] sm:$0xff]
        %v1719 = vld [vmem:[%s500 + $0x250] sm:$0xff]
        %v1720 = vld [vmem:[%s500 + $0x258] sm:$0xff]
        %v1721 = vld [vmem:[%s500 + $0x260] sm:$0xff]
        %v1722 = vld [vmem:[%s500 + $0x268] sm:$0xff]
        %v1723 = vld [vmem:[%s500 + $0x270] sm:$0xff]
        %v1724 = vld [vmem:[%s500 + $0x278] sm:$0xff]
        %v1725 = vld [vmem:[%s500 + $0x280] sm:$0xff]
        %v1726 = vld [vmem:[%s500 + $0x288] sm:$0xff]
        %v1727 = vld [vmem:[%s500 + $0x290] sm:$0xff]
        %v1728 = vld [vmem:[%s500 + $0x298] sm:$0xff]
        %v1729 = vld [vmem:[%s500 + $0x2a0] sm:$0xff]
        %v1730 = vld [vmem:[%s500 + $0x2a8] sm:$0xff]
        %v1731 = vld [vmem:[%s500 + $0x2b0] sm:$0xff]
        %v1732 = vld [vmem:[%s500 + $0x2b8] sm:$0xff]
        %v1733 = vld [vmem:[%s500 + $0x2c0] sm:$0xff]
        %v1734 = vld [vmem:[%s500 + $0x2c8] sm:$0xff]
        %v1735 = vld [vmem:[%s500 + $0x2d0] sm:$0xff]
        %v1736 = vld [vmem:[%s500 + $0x2d8] sm:$0xff]
        %v1737 = vld [vmem:[%s500 + $0x2e0] sm:$0xff]
        %v1738 = vld [vmem:[%s500 + $0x2e8] sm:$0xff]
        %v1739 = vld [vmem:[%s500 + $0x2f0] sm:$0xff]
        %v1740 = vld [vmem:[%s500 + $0x2f8] sm:$0xff]
        %v1741 = vld [vmem:[%s500 + $0x300] sm:$0xff]
        %v1742 = vld [vmem:[%s500 + $0x308] sm:$0xff]
        %v1743 = vld [vmem:[%s500 + $0x310] sm:$0xff]
        %v1744 = vld [vmem:[%s500 + $0x318] sm:$0xff]
        %v1745 = vld [vmem:[%s500 + $0x320] sm:$0xff]
        %v1746 = vld [vmem:[%s500 + $0x328] sm:$0xff]
        %v1747 = vld [vmem:[%s500 + $0x330] sm:$0xff]
        %v1748 = vld [vmem:[%s500 + $0x338] sm:$0xff]
        %v1749 = vld [vmem:[%s500 + $0x340] sm:$0xff]
        %v1750 = vld [vmem:[%s500 + $0x348] sm:$0xff]
        %v1751 = vld [vmem:[%s500 + $0x350] sm:$0xff]
        %v1752 = vld [vmem:[%s500 + $0x358] sm:$0xff]
        %v1753 = vld [vmem:[%s500 + $0x360] sm:$0xff]
        %v1754 = vld [vmem:[%s500 + $0x368] sm:$0xff]
        %v1755 = vld [vmem:[%s500 + $0x370] sm:$0xff]
        %v1756 = vld [vmem:[%s500 + $0x378] sm:$0xff]
        %v1757 = vld [vmem:[%s500 + $0x380] sm:$0xff]
        %v1758 = vld [vmem:[%s500 + $0x388] sm:$0xff]
        %v1759 = vld [vmem:[%s500 + $0x390] sm:$0xff]
        %v1760 = vld [vmem:[%s500 + $0x398] sm:$0xff]
        %v1761 = vld [vmem:[%s500 + $0x3a0] sm:$0xff]
        %v1762 = vld [vmem:[%s500 + $0x3a8] sm:$0xff]
        %v1763 = vld [vmem:[%s500 + $0x3b0] sm:$0xff]
        %v1764 = vld [vmem:[%s500 + $0x3b8] sm:$0xff]
        %v1765 = vld [vmem:[%s500 + $0x3c0] sm:$0xff]
        %v1766 = vld [vmem:[%s500 + $0x3c8] sm:$0xff]
        %v1767 = vld [vmem:[%s500 + $0x3d0] sm:$0xff]
        %v1768 = vld [vmem:[%s500 + $0x3d8] sm:$0xff]
        %v1769 = vld [vmem:[%s500 + $0x3e0] sm:$0xff]
        %v1770 = vld [vmem:[%s500 + $0x3e8] sm:$0xff]
        %v1771 = vld [vmem:[%s500 + $0x3f0] sm:$0xff]
        %v1772 = vld [vmem:[%s500 + $0x3f8] sm:$0xff]
        %v1773 = vld [vmem:[%s500 + $0x400] sm:$0xff]
        %v1774 = vld [vmem:[%s500 + $0x408] sm:$0xff]
        %v1775 = vld [vmem:[%s500 + $0x410] sm:$0xff]
        %v1776 = vld [vmem:[%s500 + $0x418] sm:$0xff]
        %v1777 = vld [vmem:[%s500 + $0x420] sm:$0xff]
        %v1778 = vld [vmem:[%s500 + $0x428] sm:$0xff]
        %v1779 = vld [vmem:[%s500 + $0x430] sm:$0xff]
        %v1780 = vld [vmem:[%s500 + $0x438] sm:$0xff]
        %v1781 = vld [vmem:[%s500 + $0x440] sm:$0xff]
        %v1782 = vld [vmem:[%s500 + $0x448] sm:$0xff]
        %v1783 = vld [vmem:[%s500 + $0x450] sm:$0xff]
        %v1784 = vld [vmem:[%s500 + $0x458] sm:$0xff]
        %v1785 = vld [vmem:[%s500 + $0x460] sm:$0xff]
        %v1786 = vld [vmem:[%s500 + $0x468] sm:$0xff]
        %v1787 = vld [vmem:[%s500 + $0x470] sm:$0xff]
        %v1788 = vld [vmem:[%s500 + $0x478] sm:$0xff]
        %v1789 = vld [vmem:[%s500 + $0x480] sm:$0xff]
        %v1790 = vld [vmem:[%s500 + $0x488] sm:$0xff]
        %v1791 = vld [vmem:[%s500 + $0x490] sm:$0xff]
        %v1792 = vld [vmem:[%s500 + $0x498] sm:$0xff]
        %v1793 = vld [vmem:[%s500 + $0x4a0] sm:$0xff]
        %v1794 = vld [vmem:[%s500 + $0x4a8] sm:$0xff]
        %v1795 = vld [vmem:[%s500 + $0x4b0] sm:$0xff]
        %v1796 = vld [vmem:[%s500 + $0x4b8] sm:$0xff]
        %v1797 = vld [vmem:[%s500 + $0x4c0] sm:$0xff]
        %v1798 = vld [vmem:[%s500 + $0x4c8] sm:$0xff]
        %v1799 = vld [vmem:[%s500 + $0x4d0] sm:$0xff]
        %v1800 = vld [vmem:[%s500 + $0x4d8] sm:$0xff]
        %v1801 = vld [vmem:[%s500 + $0x4e0] sm:$0xff]
        %v1802 = vld [vmem:[%s500 + $0x4e8] sm:$0xff]
        %v1803 = vld [vmem:[%s500 + $0x4f0] sm:$0xff]
        %v1804 = vld [vmem:[%s500 + $0x4f8] sm:$0xff]
        %1805 = vmatpush.msra.mxu0 %v1515
        %1806 = vmatpush.msra.mxu0 %v1513
        %1807 = vmatpush.msra.mxu0 %v1511
        %1808 = vmatpush.msra.mxu0 %v1509
        %1809 = vmatpush.msra.mxu0 %v1507
        %1810 = vmatpush.msra.mxu0 %v1505
        %1811 = vmatpush.msra.mxu0 %v1503
        %1812 = vmatpush.msra.mxu0 %v1501
        %1813 = vmatpush.msra.mxu0 %v1499
        %1814 = vmatpush.msra.mxu0 %v1497
        %1815 = vmatpush.msra.mxu0 %v1495
        %1816 = vmatpush.msra.mxu0 %v1493
        %1817 = vmatpush.msra.mxu0 %v1491
        %1818 = vmatpush.msra.mxu0 %v1489
        %1819 = vmatpush.msra.mxu0 %v1487
        %1820 = vmatpush.msra.mxu0 %v1485
        %1821 = vmatmul.f32.gmra.mxu0 %v1479
        %v1822 = vpop.f32.mrf.mxu0
        %v1823 = vadd.f32 0.0, %v1822
        %1824 = vdwg.mxu0
        %1825 = vmatpush.msra.mxu0 %v1547
        %1826 = vmatpush.msra.mxu0 %v1545
        %1827 = vmatpush.msra.mxu0 %v1543
        %1828 = vmatpush.msra.mxu0 %v1541
        %1829 = vmatpush.msra.mxu0 %v1539
        %1830 = vmatpush.msra.mxu0 %v1537
        %1831 = vmatpush.msra.mxu0 %v1535
        %1832 = vmatpush.msra.mxu0 %v1533
        %1833 = vmatpush.msra.mxu0 %v1531
        %1834 = vmatpush.msra.mxu0 %v1529
        %1835 = vmatpush.msra.mxu0 %v1527
        %1836 = vmatpush.msra.mxu0 %v1525
        %1837 = vmatpush.msra.mxu0 %v1523
        %1838 = vmatpush.msra.mxu0 %v1521
        %1839 = vmatpush.msra.mxu0 %v1519
        %1840 = vmatpush.msra.mxu0 %v1517
        %1841 = vmatmul.f32.gmra.mxu0 %v1480
        %v1842 = vpop.f32.mrf.mxu0
        %v1843 = vadd.f32 %v1823, %v1842
        %1844 = vdwg.mxu0
        %1845 = vmatpush.msra.mxu0 %v1579
        %1846 = vmatpush.msra.mxu0 %v1577
        %1847 = vmatpush.msra.mxu0 %v1575
        %1848 = vmatpush.msra.mxu0 %v1573
        %1849 = vmatpush.msra.mxu0 %v1571
        %1850 = vmatpush.msra.mxu0 %v1569
        %1851 = vmatpush.msra.mxu0 %v1567
        %1852 = vmatpush.msra.mxu0 %v1565
        %1853 = vmatpush.msra.mxu0 %v1563
        %1854 = vmatpush.msra.mxu0 %v1561
        %1855 = vmatpush.msra.mxu0 %v1559
        %1856 = vmatpush.msra.mxu0 %v1557
        %1857 = vmatpush.msra.mxu0 %v1555
        %1858 = vmatpush.msra.mxu0 %v1553
        %1859 = vmatpush.msra.mxu0 %v1551
        %1860 = vmatpush.msra.mxu0 %v1549
        %1861 = vmatmul.f32.gmra.mxu0 %v1481
        %v1862 = vpop.f32.mrf.mxu0
        %v1863 = vadd.f32 %v1843, %v1862
        %1864 = vdwg.mxu0
        %1865 = vmatpush.msra.mxu0 %v1611
        %1866 = vmatpush.msra.mxu0 %v1609
        %1867 = vmatpush.msra.mxu0 %v1607
        %1868 = vmatpush.msra.mxu0 %v1605
        %1869 = vmatpush.msra.mxu0 %v1603
        %1870 = vmatpush.msra.mxu0 %v1601
        %1871 = vmatpush.msra.mxu0 %v1599
        %1872 = vmatpush.msra.mxu0 %v1597
        %1873 = vmatpush.msra.mxu0 %v1595
        %1874 = vmatpush.msra.mxu0 %v1593
        %1875 = vmatpush.msra.mxu0 %v1591
        %1876 = vmatpush.msra.mxu0 %v1589
        %1877 = vmatpush.msra.mxu0 %v1587
        %1878 = vmatpush.msra.mxu0 %v1585
        %1879 = vmatpush.msra.mxu0 %v1583
        %1880 = vmatpush.msra.mxu0 %v1581
        %1881 = vmatmul.f32.gmra.mxu0 %v1482
        %v1882 = vpop.f32.mrf.mxu0
        %v1883 = vadd.f32 %v1863, %v1882
        %1884 = vdwg.mxu0
        %1885 = vmatpush.msra.mxu0 %v1643
        %1886 = vmatpush.msra.mxu0 %v1641
        %1887 = vmatpush.msra.mxu0 %v1639
        %1888 = vmatpush.msra.mxu0 %v1637
        %1889 = vmatpush.msra.mxu0 %v1635
        %1890 = vmatpush.msra.mxu0 %v1633
        %1891 = vmatpush.msra.mxu0 %v1631
        %1892 = vmatpush.msra.mxu0 %v1629
        %1893 = vmatpush.msra.mxu0 %v1627
        %1894 = vmatpush.msra.mxu0 %v1625
        %1895 = vmatpush.msra.mxu0 %v1623
        %1896 = vmatpush.msra.mxu0 %v1621
        %1897 = vmatpush.msra.mxu0 %v1619
        %1898 = vmatpush.msra.mxu0 %v1617
        %1899 = vmatpush.msra.mxu0 %v1615
        %1900 = vmatpush.msra.mxu0 %v1613
        %1901 = vmatmul.f32.gmra.mxu0 %v1483
        %v1902 = vpop.f32.mrf.mxu0
        %v1903 = vadd.f32 %v1883, %v1902
        %1904 = vdwg.mxu0
        %1905 = vmatpush.msra.mxu0 %v1516
        %1906 = vmatpush.msra.mxu0 %v1514
        %1907 = vmatpush.msra.mxu0 %v1512
        %1908 = vmatpush.msra.mxu0 %v1510
        %1909 = vmatpush.msra.mxu0 %v1508
        %1910 = vmatpush.msra.mxu0 %v1506
        %1911 = vmatpush.msra.mxu0 %v1504
        %1912 = vmatpush.msra.mxu0 %v1502
        %1913 = vmatpush.msra.mxu0 %v1500
        %1914 = vmatpush.msra.mxu0 %v1498
        %1915 = vmatpush.msra.mxu0 %v1496
        %1916 = vmatpush.msra.mxu0 %v1494
        %1917 = vmatpush.msra.mxu0 %v1492
        %1918 = vmatpush.msra.mxu0 %v1490
        %1919 = vmatpush.msra.mxu0 %v1488
        %1920 = vmatpush.msra.mxu0 %v1486
        %1921 = vmatmul.f32.gmra.mxu0 %v1479
        %v1922 = vpop.f32.mrf.mxu0
        %v1923 = vadd.f32 0.0, %v1922
        %1924 = vdwg.mxu0
        %1925 = vmatpush.msra.mxu0 %v1548
        %1926 = vmatpush.msra.mxu0 %v1546
        %1927 = vmatpush.msra.mxu0 %v1544
        %1928 = vmatpush.msra.mxu0 %v1542
        %1929 = vmatpush.msra.mxu0 %v1540
        %1930 = vmatpush.msra.mxu0 %v1538
        %1931 = vmatpush.msra.mxu0 %v1536
        %1932 = vmatpush.msra.mxu0 %v1534
        %1933 = vmatpush.msra.mxu0 %v1532
        %1934 = vmatpush.msra.mxu0 %v1530
        %1935 = vmatpush.msra.mxu0 %v1528
        %1936 = vmatpush.msra.mxu0 %v1526
        %1937 = vmatpush.msra.mxu0 %v1524
        %1938 = vmatpush.msra.mxu0 %v1522
        %1939 = vmatpush.msra.mxu0 %v1520
        %1940 = vmatpush.msra.mxu0 %v1518
        %1941 = vmatmul.f32.gmra.mxu0 %v1480
        %v1942 = vpop.f32.mrf.mxu0
        %v1943 = vadd.f32 %v1923, %v1942
        %1944 = vdwg.mxu0
        %1945 = vmatpush.msra.mxu0 %v1580
        %1946 = vmatpush.msra.mxu0 %v1578
        %1947 = vmatpush.msra.mxu0 %v1576
        %1948 = vmatpush.msra.mxu0 %v1574
        %1949 = vmatpush.msra.mxu0 %v1572
        %1950 = vmatpush.msra.mxu0 %v1570
        %1951 = vmatpush.msra.mxu0 %v1568
        %1952 = vmatpush.msra.mxu0 %v1566
        %1953 = vmatpush.msra.mxu0 %v1564
        %1954 = vmatpush.msra.mxu0 %v1562
        %1955 = vmatpush.msra.mxu0 %v1560
        %1956 = vmatpush.msra.mxu0 %v1558
        %1957 = vmatpush.msra.mxu0 %v1556
        %1958 = vmatpush.msra.mxu0 %v1554
        %1959 = vmatpush.msra.mxu0 %v1552
        %1960 = vmatpush.msra.mxu0 %v1550
        %1961 = vmatmul.f32.gmra.mxu0 %v1481
        %v1962 = vpop.f32.mrf.mxu0
        %v1963 = vadd.f32 %v1943, %v1962
        %1964 = vdwg.mxu0
        %1965 = vmatpush.msra.mxu0 %v1612
        %1966 = vmatpush.msra.mxu0 %v1610
        %1967 = vmatpush.msra.mxu0 %v1608
        %1968 = vmatpush.msra.mxu0 %v1606
        %1969 = vmatpush.msra.mxu0 %v1604
        %1970 = vmatpush.msra.mxu0 %v1602
        %1971 = vmatpush.msra.mxu0 %v1600
        %1972 = vmatpush.msra.mxu0 %v1598
        %1973 = vmatpush.msra.mxu0 %v1596
        %1974 = vmatpush.msra.mxu0 %v1594
        %1975 = vmatpush.msra.mxu0 %v1592
        %1976 = vmatpush.msra.mxu0 %v1590
        %1977 = vmatpush.msra.mxu0 %v1588
        %1978 = vmatpush.msra.mxu0 %v1586
        %1979 = vmatpush.msra.mxu0 %v1584
        %1980 = vmatpush.msra.mxu0 %v1582
        %1981 = vmatmul.f32.gmra.mxu0 %v1482
        %v1982 = vpop.f32.mrf.mxu0
        %v1983 = vadd.f32 %v1963, %v1982
        %1984 = vdwg.mxu0
        %1985 = vmatpush.msra.mxu0 %v1644
        %1986 = vmatpush.msra.mxu0 %v1642
        %1987 = vmatpush.msra.mxu0 %v1640
        %1988 = vmatpush.msra.mxu0 %v1638
        %1989 = vmatpush.msra.mxu0 %v1636
        %1990 = vmatpush.msra.mxu0 %v1634
        %1991 = vmatpush.msra.mxu0 %v1632
        %1992 = vmatpush.msra.mxu0 %v1630
        %1993 = vmatpush.msra.mxu0 %v1628
        %1994 = vmatpush.msra.mxu0 %v1626
        %1995 = vmatpush.msra.mxu0 %v1624
        %1996 = vmatpush.msra.mxu0 %v1622
        %1997 = vmatpush.msra.mxu0 %v1620
        %1998 = vmatpush.msra.mxu0 %v1618
        %1999 = vmatpush.msra.mxu0 %v1616
        %2000 = vmatpush.msra.mxu0 %v1614
        %2001 = vmatmul.f32.gmra.mxu0 %v1483
        %v2002 = vpop.f32.mrf.mxu0
        %v2003 = vadd.f32 %v1983, %v2002
        %2004 = vdwg.mxu0
        %2005 = vmatpush.msra.mxu0 %v1675
        %2006 = vmatpush.msra.mxu0 %v1673
        %2007 = vmatpush.msra.mxu0 %v1671
        %2008 = vmatpush.msra.mxu0 %v1669
        %2009 = vmatpush.msra.mxu0 %v1667
        %2010 = vmatpush.msra.mxu0 %v1665
        %2011 = vmatpush.msra.mxu0 %v1663
        %2012 = vmatpush.msra.mxu0 %v1661
        %2013 = vmatpush.msra.mxu0 %v1659
        %2014 = vmatpush.msra.mxu0 %v1657
        %2015 = vmatpush.msra.mxu0 %v1655
        %2016 = vmatpush.msra.mxu0 %v1653
        %2017 = vmatpush.msra.mxu0 %v1651
        %2018 = vmatpush.msra.mxu0 %v1649
        %2019 = vmatpush.msra.mxu0 %v1647
        %2020 = vmatpush.msra.mxu0 %v1645
        %2021 = vmatmul.f32.gmra.mxu0 %v1479
        %v2022 = vpop.f32.mrf.mxu0
        %v2023 = vadd.f32 0.0, %v2022
        %2024 = vdwg.mxu0
        %2025 = vmatpush.msra.mxu0 %v1707
        %2026 = vmatpush.msra.mxu0 %v1705
        %2027 = vmatpush.msra.mxu0 %v1703
        %2028 = vmatpush.msra.mxu0 %v1701
        %2029 = vmatpush.msra.mxu0 %v1699
        %2030 = vmatpush.msra.mxu0 %v1697
        %2031 = vmatpush.msra.mxu0 %v1695
        %2032 = vmatpush.msra.mxu0 %v1693
        %2033 = vmatpush.msra.mxu0 %v1691
        %2034 = vmatpush.msra.mxu0 %v1689
        %2035 = vmatpush.msra.mxu0 %v1687
        %2036 = vmatpush.msra.mxu0 %v1685
        %2037 = vmatpush.msra.mxu0 %v1683
        %2038 = vmatpush.msra.mxu0 %v1681
        %2039 = vmatpush.msra.mxu0 %v1679
        %2040 = vmatpush.msra.mxu0 %v1677
        %2041 = vmatmul.f32.gmra.mxu0 %v1480
        %v2042 = vpop.f32.mrf.mxu0
        %v2043 = vadd.f32 %v2023, %v2042
        %2044 = vdwg.mxu0
        %2045 = vmatpush.msra.mxu0 %v1739
        %2046 = vmatpush.msra.mxu0 %v1737
        %2047 = vmatpush.msra.mxu0 %v1735
        %2048 = vmatpush.msra.mxu0 %v1733
        %2049 = vmatpush.msra.mxu0 %v1731
        %2050 = vmatpush.msra.mxu0 %v1729
        %2051 = vmatpush.msra.mxu0 %v1727
        %2052 = vmatpush.msra.mxu0 %v1725
        %2053 = vmatpush.msra.mxu0 %v1723
        %2054 = vmatpush.msra.mxu0 %v1721
        %2055 = vmatpush.msra.mxu0 %v1719
        %2056 = vmatpush.msra.mxu0 %v1717
        %2057 = vmatpush.msra.mxu0 %v1715
        %2058 = vmatpush.msra.mxu0 %v1713
        %2059 = vmatpush.msra.mxu0 %v1711
        %2060 = vmatpush.msra.mxu0 %v1709
        %2061 = vmatmul.f32.gmra.mxu0 %v1481
        %v2062 = vpop.f32.mrf.mxu0
        %v2063 = vadd.f32 %v2043, %v2062
        %2064 = vdwg.mxu0
        %2065 = vmatpush.msra.mxu0 %v1771
        %2066 = vmatpush.msra.mxu0 %v1769
        %2067 = vmatpush.msra.mxu0 %v1767
        %2068 = vmatpush.msra.mxu0 %v1765
        %2069 = vmatpush.msra.mxu0 %v1763
        %2070 = vmatpush.msra.mxu0 %v1761
        %2071 = vmatpush.msra.mxu0 %v1759
        %2072 = vmatpush.msra.mxu0 %v1757
        %2073 = vmatpush.msra.mxu0 %v1755
        %2074 = vmatpush.msra.mxu0 %v1753
        %2075 = vmatpush.msra.mxu0 %v1751
        %2076 = vmatpush.msra.mxu0 %v1749
        %2077 = vmatpush.msra.mxu0 %v1747
        %2078 = vmatpush.msra.mxu0 %v1745
        %2079 = vmatpush.msra.mxu0 %v1743
        %2080 = vmatpush.msra.mxu0 %v1741
        %2081 = vmatmul.f32.gmra.mxu0 %v1482
        %v2082 = vpop.f32.mrf.mxu0
        %v2083 = vadd.f32 %v2063, %v2082
        %2084 = vdwg.mxu0
        %2085 = vmatpush.msra.mxu0 %v1803
        %2086 = vmatpush.msra.mxu0 %v1801
        %2087 = vmatpush.msra.mxu0 %v1799
        %2088 = vmatpush.msra.mxu0 %v1797
        %2089 = vmatpush.msra.mxu0 %v1795
        %2090 = vmatpush.msra.mxu0 %v1793
        %2091 = vmatpush.msra.mxu0 %v1791
        %2092 = vmatpush.msra.mxu0 %v1789
        %2093 = vmatpush.msra.mxu0 %v1787
        %2094 = vmatpush.msra.mxu0 %v1785
        %2095 = vmatpush.msra.mxu0 %v1783
        %2096 = vmatpush.msra.mxu0 %v1781
        %2097 = vmatpush.msra.mxu0 %v1779
        %2098 = vmatpush.msra.mxu0 %v1777
        %2099 = vmatpush.msra.mxu0 %v1775
        %2100 = vmatpush.msra.mxu0 %v1773
        %2101 = vmatmul.f32.gmra.mxu0 %v1483
        %v2102 = vpop.f32.mrf.mxu0
        %v2103 = vadd.f32 %v2083, %v2102
        %2104 = vdwg.mxu0
        %2105 = vmatpush.msra.mxu0 %v1676
        %2106 = vmatpush.msra.mxu0 %v1674
        %2107 = vmatpush.msra.mxu0 %v1672
        %2108 = vmatpush.msra.mxu0 %v1670
        %2109 = vmatpush.msra.mxu0 %v1668
        %2110 = vmatpush.msra.mxu0 %v1666
        %2111 = vmatpush.msra.mxu0 %v1664
        %2112 = vmatpush.msra.mxu0 %v1662
        %2113 = vmatpush.msra.mxu0 %v1660
        %2114 = vmatpush.msra.mxu0 %v1658
        %2115 = vmatpush.msra.mxu0 %v1656
        %2116 = vmatpush.msra.mxu0 %v1654
        %2117 = vmatpush.msra.mxu0 %v1652
        %2118 = vmatpush.msra.mxu0 %v1650
        %2119 = vmatpush.msra.mxu0 %v1648
        %2120 = vmatpush.msra.mxu0 %v1646
        %2121 = vmatmul.f32.gmra.mxu0 %v1479
        %v2122 = vpop.f32.mrf.mxu0
        %v2123 = vadd.f32 0.0, %v2122
        %2124 = vdwg.mxu0
        %2125 = vmatpush.msra.mxu0 %v1708
        %2126 = vmatpush.msra.mxu0 %v1706
        %2127 = vmatpush.msra.mxu0 %v1704
        %2128 = vmatpush.msra.mxu0 %v1702
        %2129 = vmatpush.msra.mxu0 %v1700
        %2130 = vmatpush.msra.mxu0 %v1698
        %2131 = vmatpush.msra.mxu0 %v1696
        %2132 = vmatpush.msra.mxu0 %v1694
        %2133 = vmatpush.msra.mxu0 %v1692
        %2134 = vmatpush.msra.mxu0 %v1690
        %2135 = vmatpush.msra.mxu0 %v1688
        %2136 = vmatpush.msra.mxu0 %v1686
        %2137 = vmatpush.msra.mxu0 %v1684
        %2138 = vmatpush.msra.mxu0 %v1682
        %2139 = vmatpush.msra.mxu0 %v1680
        %2140 = vmatpush.msra.mxu0 %v1678
        %2141 = vmatmul.f32.gmra.mxu0 %v1480
        %v2142 = vpop.f32.mrf.mxu0
        %v2143 = vadd.f32 %v2123, %v2142
        %2144 = vdwg.mxu0
        %2145 = vmatpush.msra.mxu0 %v1740
        %2146 = vmatpush.msra.mxu0 %v1738
        %2147 = vmatpush.msra.mxu0 %v1736
        %2148 = vmatpush.msra.mxu0 %v1734
        %2149 = vmatpush.msra.mxu0 %v1732
        %2150 = vmatpush.msra.mxu0 %v1730
        %2151 = vmatpush.msra.mxu0 %v1728
        %2152 = vmatpush.msra.mxu0 %v1726
        %2153 = vmatpush.msra.mxu0 %v1724
        %2154 = vmatpush.msra.mxu0 %v1722
        %2155 = vmatpush.msra.mxu0 %v1720
        %2156 = vmatpush.msra.mxu0 %v1718
        %2157 = vmatpush.msra.mxu0 %v1716
        %2158 = vmatpush.msra.mxu0 %v1714
        %2159 = vmatpush.msra.mxu0 %v1712
        %2160 = vmatpush.msra.mxu0 %v1710
        %2161 = vmatmul.f32.gmra.mxu0 %v1481
        %v2162 = vpop.f32.mrf.mxu0
        %v2163 = vadd.f32 %v2143, %v2162
        %2164 = vdwg.mxu0
        %2165 = vmatpush.msra.mxu0 %v1772
        %2166 = vmatpush.msra.mxu0 %v1770
        %2167 = vmatpush.msra.mxu0 %v1768
        %2168 = vmatpush.msra.mxu0 %v1766
        %2169 = vmatpush.msra.mxu0 %v1764
        %2170 = vmatpush.msra.mxu0 %v1762
        %2171 = vmatpush.msra.mxu0 %v1760
        %2172 = vmatpush.msra.mxu0 %v1758
        %2173 = vmatpush.msra.mxu0 %v1756
        %2174 = vmatpush.msra.mxu0 %v1754
        %2175 = vmatpush.msra.mxu0 %v1752
        %2176 = vmatpush.msra.mxu0 %v1750
        %2177 = vmatpush.msra.mxu0 %v1748
        %2178 = vmatpush.msra.mxu0 %v1746
        %2179 = vmatpush.msra.mxu0 %v1744
        %2180 = vmatpush.msra.mxu0 %v1742
        %2181 = vmatmul.f32.gmra.mxu0 %v1482
        %v2182 = vpop.f32.mrf.mxu0
        %v2183 = vadd.f32 %v2163, %v2182
        %2184 = vdwg.mxu0
        %2185 = vmatpush.msra.mxu0 %v1804
        %2186 = vmatpush.msra.mxu0 %v1802
        %2187 = vmatpush.msra.mxu0 %v1800
        %2188 = vmatpush.msra.mxu0 %v1798
        %2189 = vmatpush.msra.mxu0 %v1796
        %2190 = vmatpush.msra.mxu0 %v1794
        %2191 = vmatpush.msra.mxu0 %v1792
        %2192 = vmatpush.msra.mxu0 %v1790
        %2193 = vmatpush.msra.mxu0 %v1788
        %2194 = vmatpush.msra.mxu0 %v1786
        %2195 = vmatpush.msra.mxu0 %v1784
        %2196 = vmatpush.msra.mxu0 %v1782
        %2197 = vmatpush.msra.mxu0 %v1780
        %2198 = vmatpush.msra.mxu0 %v1778
        %2199 = vmatpush.msra.mxu0 %v1776
        %2200 = vmatpush.msra.mxu0 %v1774
        %2201 = vmatmul.f32.gmra.mxu0 %v1483
        %v2202 = vpop.f32.mrf.mxu0
        %v2203 = vadd.f32 %v2183, %v2202
        %2204 = vdwg.mxu0
        %2205 = vmatpush.msra.mxu0 %v1515
        %2206 = vmatpush.msra.mxu0 %v1513
        %2207 = vmatpush.msra.mxu0 %v1511
        %2208 = vmatpush.msra.mxu0 %v1509
        %2209 = vmatpush.msra.mxu0 %v1507
        %2210 = vmatpush.msra.mxu0 %v1505
        %2211 = vmatpush.msra.mxu0 %v1503
        %2212 = vmatpush.msra.mxu0 %v1501
        %2213 = vmatpush.msra.mxu0 %v1499
        %2214 = vmatpush.msra.mxu0 %v1497
        %2215 = vmatpush.msra.mxu0 %v1495
        %2216 = vmatpush.msra.mxu0 %v1493
        %2217 = vmatpush.msra.mxu0 %v1491
        %2218 = vmatpush.msra.mxu0 %v1489
        %2219 = vmatpush.msra.mxu0 %v1487
        %2220 = vmatpush.msra.mxu0 %v1485
        %2221 = vmatmul.f32.gmra.mxu0 %v1480
        %v2222 = vpop.f32.mrf.mxu0
        %v2223 = vadd.f32 0.0, %v2222
        %2224 = vdwg.mxu0
        %2225 = vmatpush.msra.mxu0 %v1547
        %2226 = vmatpush.msra.mxu0 %v1545
        %2227 = vmatpush.msra.mxu0 %v1543
        %2228 = vmatpush.msra.mxu0 %v1541
        %2229 = vmatpush.msra.mxu0 %v1539
        %2230 = vmatpush.msra.mxu0 %v1537
        %2231 = vmatpush.msra.mxu0 %v1535
        %2232 = vmatpush.msra.mxu0 %v1533
        %2233 = vmatpush.msra.mxu0 %v1531
        %2234 = vmatpush.msra.mxu0 %v1529
        %2235 = vmatpush.msra.mxu0 %v1527
        %2236 = vmatpush.msra.mxu0 %v1525
        %2237 = vmatpush.msra.mxu0 %v1523
        %2238 = vmatpush.msra.mxu0 %v1521
        %2239 = vmatpush.msra.mxu0 %v1519
        %2240 = vmatpush.msra.mxu0 %v1517
        %2241 = vmatmul.f32.gmra.mxu0 %v1481
        %v2242 = vpop.f32.mrf.mxu0
        %v2243 = vadd.f32 %v2223, %v2242
        %2244 = vdwg.mxu0
        %2245 = vmatpush.msra.mxu0 %v1579
        %2246 = vmatpush.msra.mxu0 %v1577
        %2247 = vmatpush.msra.mxu0 %v1575
        %2248 = vmatpush.msra.mxu0 %v1573
        %2249 = vmatpush.msra.mxu0 %v1571
        %2250 = vmatpush.msra.mxu0 %v1569
        %2251 = vmatpush.msra.mxu0 %v1567
        %2252 = vmatpush.msra.mxu0 %v1565
        %2253 = vmatpush.msra.mxu0 %v1563
        %2254 = vmatpush.msra.mxu0 %v1561
        %2255 = vmatpush.msra.mxu0 %v1559
        %2256 = vmatpush.msra.mxu0 %v1557
        %2257 = vmatpush.msra.mxu0 %v1555
        %2258 = vmatpush.msra.mxu0 %v1553
        %2259 = vmatpush.msra.mxu0 %v1551
        %2260 = vmatpush.msra.mxu0 %v1549
        %2261 = vmatmul.f32.gmra.mxu0 %v1482
        %v2262 = vpop.f32.mrf.mxu0
        %v2263 = vadd.f32 %v2243, %v2262
        %2264 = vdwg.mxu0
        %2265 = vmatpush.msra.mxu0 %v1611
        %2266 = vmatpush.msra.mxu0 %v1609
        %2267 = vmatpush.msra.mxu0 %v1607
        %2268 = vmatpush.msra.mxu0 %v1605
        %2269 = vmatpush.msra.mxu0 %v1603
        %2270 = vmatpush.msra.mxu0 %v1601
        %2271 = vmatpush.msra.mxu0 %v1599
        %2272 = vmatpush.msra.mxu0 %v1597
        %2273 = vmatpush.msra.mxu0 %v1595
        %2274 = vmatpush.msra.mxu0 %v1593
        %2275 = vmatpush.msra.mxu0 %v1591
        %2276 = vmatpush.msra.mxu0 %v1589
        %2277 = vmatpush.msra.mxu0 %v1587
        %2278 = vmatpush.msra.mxu0 %v1585
        %2279 = vmatpush.msra.mxu0 %v1583
        %2280 = vmatpush.msra.mxu0 %v1581
        %2281 = vmatmul.f32.gmra.mxu0 %v1483
        %v2282 = vpop.f32.mrf.mxu0
        %v2283 = vadd.f32 %v2263, %v2282
        %2284 = vdwg.mxu0
        %2285 = vmatpush.msra.mxu0 %v1643
        %2286 = vmatpush.msra.mxu0 %v1641
        %2287 = vmatpush.msra.mxu0 %v1639
        %2288 = vmatpush.msra.mxu0 %v1637
        %2289 = vmatpush.msra.mxu0 %v1635
        %2290 = vmatpush.msra.mxu0 %v1633
        %2291 = vmatpush.msra.mxu0 %v1631
        %2292 = vmatpush.msra.mxu0 %v1629
        %2293 = vmatpush.msra.mxu0 %v1627
        %2294 = vmatpush.msra.mxu0 %v1625
        %2295 = vmatpush.msra.mxu0 %v1623
        %2296 = vmatpush.msra.mxu0 %v1621
        %2297 = vmatpush.msra.mxu0 %v1619
        %2298 = vmatpush.msra.mxu0 %v1617
        %2299 = vmatpush.msra.mxu0 %v1615
        %2300 = vmatpush.msra.mxu0 %v1613
        %2301 = vmatmul.f32.gmra.mxu0 %v1484
        %v2302 = vpop.f32.mrf.mxu0
        %v2303 = vadd.f32 %v2283, %v2302
        %2304 = vdwg.mxu0
        %2305 = vmatpush.msra.mxu0 %v1516
        %2306 = vmatpush.msra.mxu0 %v1514
        %2307 = vmatpush.msra.mxu0 %v1512
        %2308 = vmatpush.msra.mxu0 %v1510
        %2309 = vmatpush.msra.mxu0 %v1508
        %2310 = vmatpush.msra.mxu0 %v1506
        %2311 = vmatpush.msra.mxu0 %v1504
        %2312 = vmatpush.msra.mxu0 %v1502
        %2313 = vmatpush.msra.mxu0 %v1500
        %2314 = vmatpush.msra.mxu0 %v1498
        %2315 = vmatpush.msra.mxu0 %v1496
        %2316 = vmatpush.msra.mxu0 %v1494
        %2317 = vmatpush.msra.mxu0 %v1492
        %2318 = vmatpush.msra.mxu0 %v1490
        %2319 = vmatpush.msra.mxu0 %v1488
        %2320 = vmatpush.msra.mxu0 %v1486
        %2321 = vmatmul.f32.gmra.mxu0 %v1480
        %v2322 = vpop.f32.mrf.mxu0
        %v2323 = vadd.f32 0.0, %v2322
        %2324 = vdwg.mxu0
        %2325 = vmatpush.msra.mxu0 %v1548
        %2326 = vmatpush.msra.mxu0 %v1546
        %2327 = vmatpush.msra.mxu0 %v1544
        %2328 = vmatpush.msra.mxu0 %v1542
        %2329 = vmatpush.msra.mxu0 %v1540
        %2330 = vmatpush.msra.mxu0 %v1538
        %2331 = vmatpush.msra.mxu0 %v1536
        %2332 = vmatpush.msra.mxu0 %v1534
        %2333 = vmatpush.msra.mxu0 %v1532
        %2334 = vmatpush.msra.mxu0 %v1530
        %2335 = vmatpush.msra.mxu0 %v1528
        %2336 = vmatpush.msra.mxu0 %v1526
        %2337 = vmatpush.msra.mxu0 %v1524
        %2338 = vmatpush.msra.mxu0 %v1522
        %2339 = vmatpush.msra.mxu0 %v1520
        %2340 = vmatpush.msra.mxu0 %v1518
        %2341 = vmatmul.f32.gmra.mxu0 %v1481
        %v2342 = vpop.f32.mrf.mxu0
        %v2343 = vadd.f32 %v2323, %v2342
        %2344 = vdwg.mxu0
        %2345 = vmatpush.msra.mxu0 %v1580
        %2346 = vmatpush.msra.mxu0 %v1578
        %2347 = vmatpush.msra.mxu0 %v1576
        %2348 = vmatpush.msra.mxu0 %v1574
        %2349 = vmatpush.msra.mxu0 %v1572
        %2350 = vmatpush.msra.mxu0 %v1570
        %2351 = vmatpush.msra.mxu0 %v1568
        %2352 = vmatpush.msra.mxu0 %v1566
        %2353 = vmatpush.msra.mxu0 %v1564
        %2354 = vmatpush.msra.mxu0 %v1562
        %2355 = vmatpush.msra.mxu0 %v1560
        %2356 = vmatpush.msra.mxu0 %v1558
        %2357 = vmatpush.msra.mxu0 %v1556
        %2358 = vmatpush.msra.mxu0 %v1554
        %2359 = vmatpush.msra.mxu0 %v1552
        %2360 = vmatpush.msra.mxu0 %v1550
        %2361 = vmatmul.f32.gmra.mxu0 %v1482
        %v2362 = vpop.f32.mrf.mxu0
        %v2363 = vadd.f32 %v2343, %v2362
        %2364 = vdwg.mxu0
        %2365 = vmatpush.msra.mxu0 %v1612
        %2366 = vmatpush.msra.mxu0 %v1610
        %2367 = vmatpush.msra.mxu0 %v1608
        %2368 = vmatpush.msra.mxu0 %v1606
        %2369 = vmatpush.msra.mxu0 %v1604
        %2370 = vmatpush.msra.mxu0 %v1602
        %2371 = vmatpush.msra.mxu0 %v1600
        %2372 = vmatpush.msra.mxu0 %v1598
        %2373 = vmatpush.msra.mxu0 %v1596
        %2374 = vmatpush.msra.mxu0 %v1594
        %2375 = vmatpush.msra.mxu0 %v1592
        %2376 = vmatpush.msra.mxu0 %v1590
        %2377 = vmatpush.msra.mxu0 %v1588
        %2378 = vmatpush.msra.mxu0 %v1586
        %2379 = vmatpush.msra.mxu0 %v1584
        %2380 = vmatpush.msra.mxu0 %v1582
        %2381 = vmatmul.f32.gmra.mxu0 %v1483
        %v2382 = vpop.f32.mrf.mxu0
        %v2383 = vadd.f32 %v2363, %v2382
        %2384 = vdwg.mxu0
        %2385 = vmatpush.msra.mxu0 %v1644
        %2386 = vmatpush.msra.mxu0 %v1642
        %2387 = vmatpush.msra.mxu0 %v1640
        %2388 = vmatpush.msra.mxu0 %v1638
        %2389 = vmatpush.msra.mxu0 %v1636
        %2390 = vmatpush.msra.mxu0 %v1634
        %2391 = vmatpush.msra.mxu0 %v1632
        %2392 = vmatpush.msra.mxu0 %v1630
        %2393 = vmatpush.msra.mxu0 %v1628
        %2394 = vmatpush.msra.mxu0 %v1626
        %2395 = vmatpush.msra.mxu0 %v1624
        %2396 = vmatpush.msra.mxu0 %v1622
        %2397 = vmatpush.msra.mxu0 %v1620
        %2398 = vmatpush.msra.mxu0 %v1618
        %2399 = vmatpush.msra.mxu0 %v1616
        %2400 = vmatpush.msra.mxu0 %v1614
        %2401 = vmatmul.f32.gmra.mxu0 %v1484
        %v2402 = vpop.f32.mrf.mxu0
        %v2403 = vadd.f32 %v2383, %v2402
        %2404 = vdwg.mxu0
        %2405 = vmatpush.msra.mxu0 %v1675
        %2406 = vmatpush.msra.mxu0 %v1673
        %2407 = vmatpush.msra.mxu0 %v1671
        %2408 = vmatpush.msra.mxu0 %v1669
        %2409 = vmatpush.msra.mxu0 %v1667
        %2410 = vmatpush.msra.mxu0 %v1665
        %2411 = vmatpush.msra.mxu0 %v1663
        %2412 = vmatpush.msra.mxu0 %v1661
        %2413 = vmatpush.msra.mxu0 %v1659
        %2414 = vmatpush.msra.mxu0 %v1657
        %2415 = vmatpush.msra.mxu0 %v1655
        %2416 = vmatpush.msra.mxu0 %v1653
        %2417 = vmatpush.msra.mxu0 %v1651
        %2418 = vmatpush.msra.mxu0 %v1649
        %2419 = vmatpush.msra.mxu0 %v1647
        %2420 = vmatpush.msra.mxu0 %v1645
        %2421 = vmatmul.f32.gmra.mxu0 %v1480
        %v2422 = vpop.f32.mrf.mxu0
        %v2423 = vadd.f32 0.0, %v2422
        %2424 = vdwg.mxu0
        %2425 = vmatpush.msra.mxu0 %v1707
        %2426 = vmatpush.msra.mxu0 %v1705
        %2427 = vmatpush.msra.mxu0 %v1703
        %2428 = vmatpush.msra.mxu0 %v1701
        %2429 = vmatpush.msra.mxu0 %v1699
        %2430 = vmatpush.msra.mxu0 %v1697
        %2431 = vmatpush.msra.mxu0 %v1695
        %2432 = vmatpush.msra.mxu0 %v1693
        %2433 = vmatpush.msra.mxu0 %v1691
        %2434 = vmatpush.msra.mxu0 %v1689
        %2435 = vmatpush.msra.mxu0 %v1687
        %2436 = vmatpush.msra.mxu0 %v1685
        %2437 = vmatpush.msra.mxu0 %v1683
        %2438 = vmatpush.msra.mxu0 %v1681
        %2439 = vmatpush.msra.mxu0 %v1679
        %2440 = vmatpush.msra.mxu0 %v1677
        %2441 = vmatmul.f32.gmra.mxu0 %v1481
        %v2442 = vpop.f32.mrf.mxu0
        %v2443 = vadd.f32 %v2423, %v2442
        %2444 = vdwg.mxu0
        %2445 = vmatpush.msra.mxu0 %v1739
        %2446 = vmatpush.msra.mxu0 %v1737
        %2447 = vmatpush.msra.mxu0 %v1735
        %2448 = vmatpush.msra.mxu0 %v1733
        %2449 = vmatpush.msra.mxu0 %v1731
        %2450 = vmatpush.msra.mxu0 %v1729
        %2451 = vmatpush.msra.mxu0 %v1727
        %2452 = vmatpush.msra.mxu0 %v1725
        %2453 = vmatpush.msra.mxu0 %v1723
        %2454 = vmatpush.msra.mxu0 %v1721
        %2455 = vmatpush.msra.mxu0 %v1719
        %2456 = vmatpush.msra.mxu0 %v1717
        %2457 = vmatpush.msra.mxu0 %v1715
        %2458 = vmatpush.msra.mxu0 %v1713
        %2459 = vmatpush.msra.mxu0 %v1711
        %2460 = vmatpush.msra.mxu0 %v1709
        %2461 = vmatmul.f32.gmra.mxu0 %v1482
        %v2462 = vpop.f32.mrf.mxu0
        %v2463 = vadd.f32 %v2443, %v2462
        %2464 = vdwg.mxu0
        %2465 = vmatpush.msra.mxu0 %v1771
        %2466 = vmatpush.msra.mxu0 %v1769
        %2467 = vmatpush.msra.mxu0 %v1767
        %2468 = vmatpush.msra.mxu0 %v1765
        %2469 = vmatpush.msra.mxu0 %v1763
        %2470 = vmatpush.msra.mxu0 %v1761
        %2471 = vmatpush.msra.mxu0 %v1759
        %2472 = vmatpush.msra.mxu0 %v1757
        %2473 = vmatpush.msra.mxu0 %v1755
        %2474 = vmatpush.msra.mxu0 %v1753
        %2475 = vmatpush.msra.mxu0 %v1751
        %2476 = vmatpush.msra.mxu0 %v1749
        %2477 = vmatpush.msra.mxu0 %v1747
        %2478 = vmatpush.msra.mxu0 %v1745
        %2479 = vmatpush.msra.mxu0 %v1743
        %2480 = vmatpush.msra.mxu0 %v1741
        %2481 = vmatmul.f32.gmra.mxu0 %v1483
        %v2482 = vpop.f32.mrf.mxu0
        %v2483 = vadd.f32 %v2463, %v2482
        %2484 = vdwg.mxu0
        %2485 = vmatpush.msra.mxu0 %v1803
        %2486 = vmatpush.msra.mxu0 %v1801
        %2487 = vmatpush.msra.mxu0 %v1799
        %2488 = vmatpush.msra.mxu0 %v1797
        %2489 = vmatpush.msra.mxu0 %v1795
        %2490 = vmatpush.msra.mxu0 %v1793
        %2491 = vmatpush.msra.mxu0 %v1791
        %2492 = vmatpush.msra.mxu0 %v1789
        %2493 = vmatpush.msra.mxu0 %v1787
        %2494 = vmatpush.msra.mxu0 %v1785
        %2495 = vmatpush.msra.mxu0 %v1783
        %2496 = vmatpush.msra.mxu0 %v1781
        %2497 = vmatpush.msra.mxu0 %v1779
        %2498 = vmatpush.msra.mxu0 %v1777
        %2499 = vmatpush.msra.mxu0 %v1775
        %2500 = vmatpush.msra.mxu0 %v1773
        %2501 = vmatmul.f32.gmra.mxu0 %v1484
        %v2502 = vpop.f32.mrf.mxu0
        %v2503 = vadd.f32 %v2483, %v2502
        %2504 = vdwg.mxu0
        %2505 = vmatpush.msra.mxu0 %v1676
        %2506 = vmatpush.msra.mxu0 %v1674
        %2507 = vmatpush.msra.mxu0 %v1672
        %2508 = vmatpush.msra.mxu0 %v1670
        %2509 = vmatpush.msra.mxu0 %v1668
        %2510 = vmatpush.msra.mxu0 %v1666
        %2511 = vmatpush.msra.mxu0 %v1664
        %2512 = vmatpush.msra.mxu0 %v1662
        %2513 = vmatpush.msra.mxu0 %v1660
        %2514 = vmatpush.msra.mxu0 %v1658
        %2515 = vmatpush.msra.mxu0 %v1656
        %2516 = vmatpush.msra.mxu0 %v1654
        %2517 = vmatpush.msra.mxu0 %v1652
        %2518 = vmatpush.msra.mxu0 %v1650
        %2519 = vmatpush.msra.mxu0 %v1648
        %2520 = vmatpush.msra.mxu0 %v1646
        %2521 = vmatmul.f32.gmra.mxu0 %v1480
        %v2522 = vpop.f32.mrf.mxu0
        %v2523 = vadd.f32 0.0, %v2522
        %2524 = vdwg.mxu0
        %2525 = vmatpush.msra.mxu0 %v1708
        %2526 = vmatpush.msra.mxu0 %v1706
        %2527 = vmatpush.msra.mxu0 %v1704
        %2528 = vmatpush.msra.mxu0 %v1702
        %2529 = vmatpush.msra.mxu0 %v1700
        %2530 = vmatpush.msra.mxu0 %v1698
        %2531 = vmatpush.msra.mxu0 %v1696
        %2532 = vmatpush.msra.mxu0 %v1694
        %2533 = vmatpush.msra.mxu0 %v1692
        %2534 = vmatpush.msra.mxu0 %v1690
        %2535 = vmatpush.msra.mxu0 %v1688
        %2536 = vmatpush.msra.mxu0 %v1686
        %2537 = vmatpush.msra.mxu0 %v1684
        %2538 = vmatpush.msra.mxu0 %v1682
        %2539 = vmatpush.msra.mxu0 %v1680
        %2540 = vmatpush.msra.mxu0 %v1678
        %2541 = vmatmul.f32.gmra.mxu0 %v1481
        %v2542 = vpop.f32.mrf.mxu0
        %v2543 = vadd.f32 %v2523, %v2542
        %2544 = vdwg.mxu0
        %2545 = vmatpush.msra.mxu0 %v1740
        %2546 = vmatpush.msra.mxu0 %v1738
        %2547 = vmatpush.msra.mxu0 %v1736
        %2548 = vmatpush.msra.mxu0 %v1734
        %2549 = vmatpush.msra.mxu0 %v1732
        %2550 = vmatpush.msra.mxu0 %v1730
        %2551 = vmatpush.msra.mxu0 %v1728
        %2552 = vmatpush.msra.mxu0 %v1726
        %2553 = vmatpush.msra.mxu0 %v1724
        %2554 = vmatpush.msra.mxu0 %v1722
        %2555 = vmatpush.msra.mxu0 %v1720
        %2556 = vmatpush.msra.mxu0 %v1718
        %2557 = vmatpush.msra.mxu0 %v1716
        %2558 = vmatpush.msra.mxu0 %v1714
        %2559 = vmatpush.msra.mxu0 %v1712
        %2560 = vmatpush.msra.mxu0 %v1710
        %2561 = vmatmul.f32.gmra.mxu0 %v1482
        %v2562 = vpop.f32.mrf.mxu0
        %v2563 = vadd.f32 %v2543, %v2562
        %2564 = vdwg.mxu0
        %2565 = vmatpush.msra.mxu0 %v1772
        %2566 = vmatpush.msra.mxu0 %v1770
        %2567 = vmatpush.msra.mxu0 %v1768
        %2568 = vmatpush.msra.mxu0 %v1766
        %2569 = vmatpush.msra.mxu0 %v1764
        %2570 = vmatpush.msra.mxu0 %v1762
        %2571 = vmatpush.msra.mxu0 %v1760
        %2572 = vmatpush.msra.mxu0 %v1758
        %2573 = vmatpush.msra.mxu0 %v1756
        %2574 = vmatpush.msra.mxu0 %v1754
        %2575 = vmatpush.msra.mxu0 %v1752
        %2576 = vmatpush.msra.mxu0 %v1750
        %2577 = vmatpush.msra.mxu0 %v1748
        %2578 = vmatpush.msra.mxu0 %v1746
        %2579 = vmatpush.msra.mxu0 %v1744
        %2580 = vmatpush.msra.mxu0 %v1742
        %2581 = vmatmul.f32.gmra.mxu0 %v1483
        %v2582 = vpop.f32.mrf.mxu0
        %v2583 = vadd.f32 %v2563, %v2582
        %2584 = vdwg.mxu0
        %2585 = vmatpush.msra.mxu0 %v1804
        %2586 = vmatpush.msra.mxu0 %v1802
        %2587 = vmatpush.msra.mxu0 %v1800
        %2588 = vmatpush.msra.mxu0 %v1798
        %2589 = vmatpush.msra.mxu0 %v1796
        %2590 = vmatpush.msra.mxu0 %v1794
        %2591 = vmatpush.msra.mxu0 %v1792
        %2592 = vmatpush.msra.mxu0 %v1790
        %2593 = vmatpush.msra.mxu0 %v1788
        %2594 = vmatpush.msra.mxu0 %v1786
        %2595 = vmatpush.msra.mxu0 %v1784
        %2596 = vmatpush.msra.mxu0 %v1782
        %2597 = vmatpush.msra.mxu0 %v1780
        %2598 = vmatpush.msra.mxu0 %v1778
        %2599 = vmatpush.msra.mxu0 %v1776
        %2600 = vmatpush.msra.mxu0 %v1774
        %2601 = vmatmul.f32.gmra.mxu0 %v1484
        %v2602 = vpop.f32.mrf.mxu0
        %v2603 = vadd.f32 %v2583, %v2602
        %2604 = vdwg.mxu0
        %v2605 = vmax.f32 %v1903, %v2103
        %v2606 = vmax.f32 %v2003, %v2203
        %v2607 = vmax.f32 %v2303, %v2503
        %v2608 = vmax.f32 %v2403, %v2603
        %v2609 = vmax.f32 %v2605, %v2607
        %v2610 = vmax.f32 %v2606, %v2608
        %v2612 = vperm.slane %v1478, 0
        %v2613 = vperm.slane %v1478, 1
        %v2616 = vadd.f32 %v2609, %v2612
        %v2617 = vadd.f32 %v2610, %v2613
        %v2618 = vmax.f32 %v2616, 0.0
        %v2619 = vmax.f32 %v2617, 0.0
        %s2620 = scalar_lea.vmem [#allocation2], 16
        %2621 = vst [vmem:[%s2620] sm:$0x3f] %v2618
        %2622 = vst [vmem:[%s2620 + $0x8] sm:$0x3f] %v2619
        %v2623 = vld [vmem:[%s4] sm:$0x1]
        %v2624 = vld [vmem:[#allocation2] sm:$0xf]
        %v2625 = vld [vmem:[#allocation2 + $0x8] sm:$0xf]
        %v2626 = vld [vmem:[%s2620] sm:$0xf]
        %v2627 = vld [vmem:[%s2620 + $0x8] sm:$0xf]
        %v2628 = vld [vmem:[#allocation2] sm:$0x1e]
        %v2629 = vld [vmem:[#allocation2 + $0x8] sm:$0x1e]
        %v2630 = vld [vmem:[%s2620] sm:$0x1e]
        %v2631 = vld [vmem:[%s2620 + $0x8] sm:$0x1e]
        %v2632 = vld [vmem:[#allocation2] sm:$0x3c]
        %v2633 = vld [vmem:[#allocation2 + $0x8] sm:$0x3c]
        %v2636 = vrot.slane %v2628, 1
        %v2637 = vrot.slane %v2629, 1
        %v2642 = vrot.slane %v2630, 1
        %v2643 = vrot.slane %v2631, 1
        %v2648 = vrot.slane %v2632, 2
        %v2649 = vrot.slane %v2633, 2
        %v2652 = vld [vmem:[%s2620] sm:$0x3c]
        %v2653 = vld [vmem:[%s2620 + $0x8] sm:$0x3c]
        %v2656 = vrot.slane %v2652, 2
        %v2657 = vrot.slane %v2653, 2
        %v2660 = vld [vmem:[%s3] sm:$0xff]
        %v2661 = vld [vmem:[%s3 + $0x8] sm:$0xff]
        %v2662 = vld [vmem:[%s3 + $0x10] sm:$0xff]
        %v2663 = vld [vmem:[%s3 + $0x18] sm:$0xff]
        %v2664 = vld [vmem:[%s3 + $0x20] sm:$0xff]
        %v2665 = vld [vmem:[%s3 + $0x28] sm:$0xff]
        %v2666 = vld [vmem:[%s3 + $0x30] sm:$0xff]
        %v2667 = vld [vmem:[%s3 + $0x38] sm:$0xff]
        %v2668 = vld [vmem:[%s3 + $0x40] sm:$0xff]
        %v2669 = vld [vmem:[%s3 + $0x48] sm:$0xff]
        %v2670 = vld [vmem:[%s3 + $0x50] sm:$0xff]
        %v2671 = vld [vmem:[%s3 + $0x58] sm:$0xff]
        %v2672 = vld [vmem:[%s3 + $0x60] sm:$0xff]
        %v2673 = vld [vmem:[%s3 + $0x68] sm:$0xff]
        %v2674 = vld [vmem:[%s3 + $0x70] sm:$0xff]
        %v2675 = vld [vmem:[%s3 + $0x78] sm:$0xff]
        %v2676 = vld [vmem:[%s3 + $0x80] sm:$0xff]
        %v2677 = vld [vmem:[%s3 + $0x88] sm:$0xff]
        %v2678 = vld [vmem:[%s3 + $0x90] sm:$0xff]
        %v2679 = vld [vmem:[%s3 + $0x98] sm:$0xff]
        %v2680 = vld [vmem:[%s3 + $0xa0] sm:$0xff]
        %v2681 = vld [vmem:[%s3 + $0xa8] sm:$0xff]
        %v2682 = vld [vmem:[%s3 + $0xb0] sm:$0xff]
        %v2683 = vld [vmem:[%s3 + $0xb8] sm:$0xff]
        %v2684 = vld [vmem:[%s3 + $0xc0] sm:$0xff]
        %v2685 = vld [vmem:[%s3 + $0xc8] sm:$0xff]
        %v2686 = vld [vmem:[%s3 + $0xd0] sm:$0xff]
        %v2687 = vld [vmem:[%s3 + $0xd8] sm:$0xff]
        %v2688 = vld [vmem:[%s3 + $0xe0] sm:$0xff]
        %v2689 = vld [vmem:[%s3 + $0xe8] sm:$0xff]
        %v2690 = vld [vmem:[%s3 + $0xf0] sm:$0xff]
        %v2691 = vld [vmem:[%s3 + $0xf8] sm:$0xff]
        %v2692 = vld [vmem:[%s3 + $0x100] sm:$0xff]
        %v2693 = vld [vmem:[%s3 + $0x108] sm:$0xff]
        %v2694 = vld [vmem:[%s3 + $0x110] sm:$0xff]
        %v2695 = vld [vmem:[%s3 + $0x118] sm:$0xff]
        %v2696 = vld [vmem:[%s3 + $0x120] sm:$0xff]
        %v2697 = vld [vmem:[%s3 + $0x128] sm:$0xff]
        %v2698 = vld [vmem:[%s3 + $0x130] sm:$0xff]
        %v2699 = vld [vmem:[%s3 + $0x138] sm:$0xff]
        %v2700 = vld [vmem:[%s3 + $0x140] sm:$0xff]
        %v2701 = vld [vmem:[%s3 + $0x148] sm:$0xff]
        %v2702 = vld [vmem:[%s3 + $0x150] sm:$0xff]
        %v2703 = vld [vmem:[%s3 + $0x158] sm:$0xff]
        %v2704 = vld [vmem:[%s3 + $0x160] sm:$0xff]
        %v2705 = vld [vmem:[%s3 + $0x168] sm:$0xff]
        %v2706 = vld [vmem:[%s3 + $0x170] sm:$0xff]
        %v2707 = vld [vmem:[%s3 + $0x178] sm:$0xff]
        %v2708 = vld [vmem:[%s3 + $0x180] sm:$0xff]
        %v2709 = vld [vmem:[%s3 + $0x188] sm:$0xff]
        %v2710 = vld [vmem:[%s3 + $0x190] sm:$0xff]
        %v2711 = vld [vmem:[%s3 + $0x198] sm:$0xff]
        %v2712 = vld [vmem:[%s3 + $0x1a0] sm:$0xff]
        %v2713 = vld [vmem:[%s3 + $0x1a8] sm:$0xff]
        %v2714 = vld [vmem:[%s3 + $0x1b0] sm:$0xff]
        %v2715 = vld [vmem:[%s3 + $0x1b8] sm:$0xff]
        %v2716 = vld [vmem:[%s3 + $0x1c0] sm:$0xff]
        %v2717 = vld [vmem:[%s3 + $0x1c8] sm:$0xff]
        %v2718 = vld [vmem:[%s3 + $0x1d0] sm:$0xff]
        %v2719 = vld [vmem:[%s3 + $0x1d8] sm:$0xff]
        %v2720 = vld [vmem:[%s3 + $0x1e0] sm:$0xff]
        %v2721 = vld [vmem:[%s3 + $0x1e8] sm:$0xff]
        %v2722 = vld [vmem:[%s3 + $0x1f0] sm:$0xff]
        %v2723 = vld [vmem:[%s3 + $0x1f8] sm:$0xff]
        %v2724 = vld [vmem:[%s3 + $0x200] sm:$0xff]
        %v2725 = vld [vmem:[%s3 + $0x208] sm:$0xff]
        %v2726 = vld [vmem:[%s3 + $0x210] sm:$0xff]
        %v2727 = vld [vmem:[%s3 + $0x218] sm:$0xff]
        %v2728 = vld [vmem:[%s3 + $0x220] sm:$0xff]
        %v2729 = vld [vmem:[%s3 + $0x228] sm:$0xff]
        %v2730 = vld [vmem:[%s3 + $0x230] sm:$0xff]
        %v2731 = vld [vmem:[%s3 + $0x238] sm:$0xff]
        %v2732 = vld [vmem:[%s3 + $0x240] sm:$0xff]
        %v2733 = vld [vmem:[%s3 + $0x248] sm:$0xff]
        %v2734 = vld [vmem:[%s3 + $0x250] sm:$0xff]
        %v2735 = vld [vmem:[%s3 + $0x258] sm:$0xff]
        %v2736 = vld [vmem:[%s3 + $0x260] sm:$0xff]
        %v2737 = vld [vmem:[%s3 + $0x268] sm:$0xff]
        %v2738 = vld [vmem:[%s3 + $0x270] sm:$0xff]
        %v2739 = vld [vmem:[%s3 + $0x278] sm:$0xff]
        %v2740 = vld [vmem:[%s3 + $0x280] sm:$0xff]
        %v2741 = vld [vmem:[%s3 + $0x288] sm:$0xff]
        %v2742 = vld [vmem:[%s3 + $0x290] sm:$0xff]
        %v2743 = vld [vmem:[%s3 + $0x298] sm:$0xff]
        %v2744 = vld [vmem:[%s3 + $0x2a0] sm:$0xff]
        %v2745 = vld [vmem:[%s3 + $0x2a8] sm:$0xff]
        %v2746 = vld [vmem:[%s3 + $0x2b0] sm:$0xff]
        %v2747 = vld [vmem:[%s3 + $0x2b8] sm:$0xff]
        %v2748 = vld [vmem:[%s3 + $0x2c0] sm:$0xff]
        %v2749 = vld [vmem:[%s3 + $0x2c8] sm:$0xff]
        %v2750 = vld [vmem:[%s3 + $0x2d0] sm:$0xff]
        %v2751 = vld [vmem:[%s3 + $0x2d8] sm:$0xff]
        %v2752 = vld [vmem:[%s3 + $0x2e0] sm:$0xff]
        %v2753 = vld [vmem:[%s3 + $0x2e8] sm:$0xff]
        %v2754 = vld [vmem:[%s3 + $0x2f0] sm:$0xff]
        %v2755 = vld [vmem:[%s3 + $0x2f8] sm:$0xff]
        %v2756 = vld [vmem:[%s3 + $0x300] sm:$0xff]
        %v2757 = vld [vmem:[%s3 + $0x308] sm:$0xff]
        %v2758 = vld [vmem:[%s3 + $0x310] sm:$0xff]
        %v2759 = vld [vmem:[%s3 + $0x318] sm:$0xff]
        %v2760 = vld [vmem:[%s3 + $0x320] sm:$0xff]
        %v2761 = vld [vmem:[%s3 + $0x328] sm:$0xff]
        %v2762 = vld [vmem:[%s3 + $0x330] sm:$0xff]
        %v2763 = vld [vmem:[%s3 + $0x338] sm:$0xff]
        %v2764 = vld [vmem:[%s3 + $0x340] sm:$0xff]
        %v2765 = vld [vmem:[%s3 + $0x348] sm:$0xff]
        %v2766 = vld [vmem:[%s3 + $0x350] sm:$0xff]
        %v2767 = vld [vmem:[%s3 + $0x358] sm:$0xff]
        %v2768 = vld [vmem:[%s3 + $0x360] sm:$0xff]
        %v2769 = vld [vmem:[%s3 + $0x368] sm:$0xff]
        %v2770 = vld [vmem:[%s3 + $0x370] sm:$0xff]
        %v2771 = vld [vmem:[%s3 + $0x378] sm:$0xff]
        %v2772 = vld [vmem:[%s3 + $0x380] sm:$0xff]
        %v2773 = vld [vmem:[%s3 + $0x388] sm:$0xff]
        %v2774 = vld [vmem:[%s3 + $0x390] sm:$0xff]
        %v2775 = vld [vmem:[%s3 + $0x398] sm:$0xff]
        %v2776 = vld [vmem:[%s3 + $0x3a0] sm:$0xff]
        %v2777 = vld [vmem:[%s3 + $0x3a8] sm:$0xff]
        %v2778 = vld [vmem:[%s3 + $0x3b0] sm:$0xff]
        %v2779 = vld [vmem:[%s3 + $0x3b8] sm:$0xff]
        %v2780 = vld [vmem:[%s3 + $0x3c0] sm:$0xff]
        %v2781 = vld [vmem:[%s3 + $0x3c8] sm:$0xff]
        %v2782 = vld [vmem:[%s3 + $0x3d0] sm:$0xff]
        %v2783 = vld [vmem:[%s3 + $0x3d8] sm:$0xff]
        %v2784 = vld [vmem:[%s3 + $0x3e0] sm:$0xff]
        %v2785 = vld [vmem:[%s3 + $0x3e8] sm:$0xff]
        %v2786 = vld [vmem:[%s3 + $0x3f0] sm:$0xff]
        %v2787 = vld [vmem:[%s3 + $0x3f8] sm:$0xff]
        %v2788 = vld [vmem:[%s3 + $0x400] sm:$0xff]
        %v2789 = vld [vmem:[%s3 + $0x408] sm:$0xff]
        %v2790 = vld [vmem:[%s3 + $0x410] sm:$0xff]
        %v2791 = vld [vmem:[%s3 + $0x418] sm:$0xff]
        %v2792 = vld [vmem:[%s3 + $0x420] sm:$0xff]
        %v2793 = vld [vmem:[%s3 + $0x428] sm:$0xff]
        %v2794 = vld [vmem:[%s3 + $0x430] sm:$0xff]
        %v2795 = vld [vmem:[%s3 + $0x438] sm:$0xff]
        %v2796 = vld [vmem:[%s3 + $0x440] sm:$0xff]
        %v2797 = vld [vmem:[%s3 + $0x448] sm:$0xff]
        %v2798 = vld [vmem:[%s3 + $0x450] sm:$0xff]
        %v2799 = vld [vmem:[%s3 + $0x458] sm:$0xff]
        %v2800 = vld [vmem:[%s3 + $0x460] sm:$0xff]
        %v2801 = vld [vmem:[%s3 + $0x468] sm:$0xff]
        %v2802 = vld [vmem:[%s3 + $0x470] sm:$0xff]
        %v2803 = vld [vmem:[%s3 + $0x478] sm:$0xff]
        %v2804 = vld [vmem:[%s3 + $0x480] sm:$0xff]
        %v2805 = vld [vmem:[%s3 + $0x488] sm:$0xff]
        %v2806 = vld [vmem:[%s3 + $0x490] sm:$0xff]
        %v2807 = vld [vmem:[%s3 + $0x498] sm:$0xff]
        %v2808 = vld [vmem:[%s3 + $0x4a0] sm:$0xff]
        %v2809 = vld [vmem:[%s3 + $0x4a8] sm:$0xff]
        %v2810 = vld [vmem:[%s3 + $0x4b0] sm:$0xff]
        %v2811 = vld [vmem:[%s3 + $0x4b8] sm:$0xff]
        %v2812 = vld [vmem:[%s3 + $0x4c0] sm:$0xff]
        %v2813 = vld [vmem:[%s3 + $0x4c8] sm:$0xff]
        %v2814 = vld [vmem:[%s3 + $0x4d0] sm:$0xff]
        %v2815 = vld [vmem:[%s3 + $0x4d8] sm:$0xff]
        %v2816 = vld [vmem:[%s3 + $0x4e0] sm:$0xff]
        %v2817 = vld [vmem:[%s3 + $0x4e8] sm:$0xff]
        %v2818 = vld [vmem:[%s3 + $0x4f0] sm:$0xff]
        %v2819 = vld [vmem:[%s3 + $0x4f8] sm:$0xff]
        %s2820 = scalar_lea.vmem %s3, 1280
        %v2821 = vld [vmem:[%s2820] sm:$0xff]
        %v2822 = vld [vmem:[%s2820 + $0x8] sm:$0xff]
        %v2823 = vld [vmem:[%s2820 + $0x10] sm:$0xff]
        %v2824 = vld [vmem:[%s2820 + $0x18] sm:$0xff]
        %v2825 = vld [vmem:[%s2820 + $0x20] sm:$0xff]
        %v2826 = vld [vmem:[%s2820 + $0x28] sm:$0xff]
        %v2827 = vld [vmem:[%s2820 + $0x30] sm:$0xff]
        %v2828 = vld [vmem:[%s2820 + $0x38] sm:$0xff]
        %v2829 = vld [vmem:[%s2820 + $0x40] sm:$0xff]
        %v2830 = vld [vmem:[%s2820 + $0x48] sm:$0xff]
        %v2831 = vld [vmem:[%s2820 + $0x50] sm:$0xff]
        %v2832 = vld [vmem:[%s2820 + $0x58] sm:$0xff]
        %v2833 = vld [vmem:[%s2820 + $0x60] sm:$0xff]
        %v2834 = vld [vmem:[%s2820 + $0x68] sm:$0xff]
        %v2835 = vld [vmem:[%s2820 + $0x70] sm:$0xff]
        %v2836 = vld [vmem:[%s2820 + $0x78] sm:$0xff]
        %v2837 = vld [vmem:[%s2820 + $0x80] sm:$0xff]
        %v2838 = vld [vmem:[%s2820 + $0x88] sm:$0xff]
        %v2839 = vld [vmem:[%s2820 + $0x90] sm:$0xff]
        %v2840 = vld [vmem:[%s2820 + $0x98] sm:$0xff]
        %v2841 = vld [vmem:[%s2820 + $0xa0] sm:$0xff]
        %v2842 = vld [vmem:[%s2820 + $0xa8] sm:$0xff]
        %v2843 = vld [vmem:[%s2820 + $0xb0] sm:$0xff]
        %v2844 = vld [vmem:[%s2820 + $0xb8] sm:$0xff]
        %v2845 = vld [vmem:[%s2820 + $0xc0] sm:$0xff]
        %v2846 = vld [vmem:[%s2820 + $0xc8] sm:$0xff]
        %v2847 = vld [vmem:[%s2820 + $0xd0] sm:$0xff]
        %v2848 = vld [vmem:[%s2820 + $0xd8] sm:$0xff]
        %v2849 = vld [vmem:[%s2820 + $0xe0] sm:$0xff]
        %v2850 = vld [vmem:[%s2820 + $0xe8] sm:$0xff]
        %v2851 = vld [vmem:[%s2820 + $0xf0] sm:$0xff]
        %v2852 = vld [vmem:[%s2820 + $0xf8] sm:$0xff]
        %v2853 = vld [vmem:[%s2820 + $0x100] sm:$0xff]
        %v2854 = vld [vmem:[%s2820 + $0x108] sm:$0xff]
        %v2855 = vld [vmem:[%s2820 + $0x110] sm:$0xff]
        %v2856 = vld [vmem:[%s2820 + $0x118] sm:$0xff]
        %v2857 = vld [vmem:[%s2820 + $0x120] sm:$0xff]
        %v2858 = vld [vmem:[%s2820 + $0x128] sm:$0xff]
        %v2859 = vld [vmem:[%s2820 + $0x130] sm:$0xff]
        %v2860 = vld [vmem:[%s2820 + $0x138] sm:$0xff]
        %v2861 = vld [vmem:[%s2820 + $0x140] sm:$0xff]
        %v2862 = vld [vmem:[%s2820 + $0x148] sm:$0xff]
        %v2863 = vld [vmem:[%s2820 + $0x150] sm:$0xff]
        %v2864 = vld [vmem:[%s2820 + $0x158] sm:$0xff]
        %v2865 = vld [vmem:[%s2820 + $0x160] sm:$0xff]
        %v2866 = vld [vmem:[%s2820 + $0x168] sm:$0xff]
        %v2867 = vld [vmem:[%s2820 + $0x170] sm:$0xff]
        %v2868 = vld [vmem:[%s2820 + $0x178] sm:$0xff]
        %v2869 = vld [vmem:[%s2820 + $0x180] sm:$0xff]
        %v2870 = vld [vmem:[%s2820 + $0x188] sm:$0xff]
        %v2871 = vld [vmem:[%s2820 + $0x190] sm:$0xff]
        %v2872 = vld [vmem:[%s2820 + $0x198] sm:$0xff]
        %v2873 = vld [vmem:[%s2820 + $0x1a0] sm:$0xff]
        %v2874 = vld [vmem:[%s2820 + $0x1a8] sm:$0xff]
        %v2875 = vld [vmem:[%s2820 + $0x1b0] sm:$0xff]
        %v2876 = vld [vmem:[%s2820 + $0x1b8] sm:$0xff]
        %v2877 = vld [vmem:[%s2820 + $0x1c0] sm:$0xff]
        %v2878 = vld [vmem:[%s2820 + $0x1c8] sm:$0xff]
        %v2879 = vld [vmem:[%s2820 + $0x1d0] sm:$0xff]
        %v2880 = vld [vmem:[%s2820 + $0x1d8] sm:$0xff]
        %v2881 = vld [vmem:[%s2820 + $0x1e0] sm:$0xff]
        %v2882 = vld [vmem:[%s2820 + $0x1e8] sm:$0xff]
        %v2883 = vld [vmem:[%s2820 + $0x1f0] sm:$0xff]
        %v2884 = vld [vmem:[%s2820 + $0x1f8] sm:$0xff]
        %v2885 = vld [vmem:[%s2820 + $0x200] sm:$0xff]
        %v2886 = vld [vmem:[%s2820 + $0x208] sm:$0xff]
        %v2887 = vld [vmem:[%s2820 + $0x210] sm:$0xff]
        %v2888 = vld [vmem:[%s2820 + $0x218] sm:$0xff]
        %v2889 = vld [vmem:[%s2820 + $0x220] sm:$0xff]
        %v2890 = vld [vmem:[%s2820 + $0x228] sm:$0xff]
        %v2891 = vld [vmem:[%s2820 + $0x230] sm:$0xff]
        %v2892 = vld [vmem:[%s2820 + $0x238] sm:$0xff]
        %v2893 = vld [vmem:[%s2820 + $0x240] sm:$0xff]
        %v2894 = vld [vmem:[%s2820 + $0x248] sm:$0xff]
        %v2895 = vld [vmem:[%s2820 + $0x250] sm:$0xff]
        %v2896 = vld [vmem:[%s2820 + $0x258] sm:$0xff]
        %v2897 = vld [vmem:[%s2820 + $0x260] sm:$0xff]
        %v2898 = vld [vmem:[%s2820 + $0x268] sm:$0xff]
        %v2899 = vld [vmem:[%s2820 + $0x270] sm:$0xff]
        %v2900 = vld [vmem:[%s2820 + $0x278] sm:$0xff]
        %v2901 = vld [vmem:[%s2820 + $0x280] sm:$0xff]
        %v2902 = vld [vmem:[%s2820 + $0x288] sm:$0xff]
        %v2903 = vld [vmem:[%s2820 + $0x290] sm:$0xff]
        %v2904 = vld [vmem:[%s2820 + $0x298] sm:$0xff]
        %v2905 = vld [vmem:[%s2820 + $0x2a0] sm:$0xff]
        %v2906 = vld [vmem:[%s2820 + $0x2a8] sm:$0xff]
        %v2907 = vld [vmem:[%s2820 + $0x2b0] sm:$0xff]
        %v2908 = vld [vmem:[%s2820 + $0x2b8] sm:$0xff]
        %v2909 = vld [vmem:[%s2820 + $0x2c0] sm:$0xff]
        %v2910 = vld [vmem:[%s2820 + $0x2c8] sm:$0xff]
        %v2911 = vld [vmem:[%s2820 + $0x2d0] sm:$0xff]
        %v2912 = vld [vmem:[%s2820 + $0x2d8] sm:$0xff]
        %v2913 = vld [vmem:[%s2820 + $0x2e0] sm:$0xff]
        %v2914 = vld [vmem:[%s2820 + $0x2e8] sm:$0xff]
        %v2915 = vld [vmem:[%s2820 + $0x2f0] sm:$0xff]
        %v2916 = vld [vmem:[%s2820 + $0x2f8] sm:$0xff]
        %v2917 = vld [vmem:[%s2820 + $0x300] sm:$0xff]
        %v2918 = vld [vmem:[%s2820 + $0x308] sm:$0xff]
        %v2919 = vld [vmem:[%s2820 + $0x310] sm:$0xff]
        %v2920 = vld [vmem:[%s2820 + $0x318] sm:$0xff]
        %v2921 = vld [vmem:[%s2820 + $0x320] sm:$0xff]
        %v2922 = vld [vmem:[%s2820 + $0x328] sm:$0xff]
        %v2923 = vld [vmem:[%s2820 + $0x330] sm:$0xff]
        %v2924 = vld [vmem:[%s2820 + $0x338] sm:$0xff]
        %v2925 = vld [vmem:[%s2820 + $0x340] sm:$0xff]
        %v2926 = vld [vmem:[%s2820 + $0x348] sm:$0xff]
        %v2927 = vld [vmem:[%s2820 + $0x350] sm:$0xff]
        %v2928 = vld [vmem:[%s2820 + $0x358] sm:$0xff]
        %v2929 = vld [vmem:[%s2820 + $0x360] sm:$0xff]
        %v2930 = vld [vmem:[%s2820 + $0x368] sm:$0xff]
        %v2931 = vld [vmem:[%s2820 + $0x370] sm:$0xff]
        %v2932 = vld [vmem:[%s2820 + $0x378] sm:$0xff]
        %v2933 = vld [vmem:[%s2820 + $0x380] sm:$0xff]
        %v2934 = vld [vmem:[%s2820 + $0x388] sm:$0xff]
        %v2935 = vld [vmem:[%s2820 + $0x390] sm:$0xff]
        %v2936 = vld [vmem:[%s2820 + $0x398] sm:$0xff]
        %v2937 = vld [vmem:[%s2820 + $0x3a0] sm:$0xff]
        %v2938 = vld [vmem:[%s2820 + $0x3a8] sm:$0xff]
        %v2939 = vld [vmem:[%s2820 + $0x3b0] sm:$0xff]
        %v2940 = vld [vmem:[%s2820 + $0x3b8] sm:$0xff]
        %v2941 = vld [vmem:[%s2820 + $0x3c0] sm:$0xff]
        %v2942 = vld [vmem:[%s2820 + $0x3c8] sm:$0xff]
        %v2943 = vld [vmem:[%s2820 + $0x3d0] sm:$0xff]
        %v2944 = vld [vmem:[%s2820 + $0x3d8] sm:$0xff]
        %v2945 = vld [vmem:[%s2820 + $0x3e0] sm:$0xff]
        %v2946 = vld [vmem:[%s2820 + $0x3e8] sm:$0xff]
        %v2947 = vld [vmem:[%s2820 + $0x3f0] sm:$0xff]
        %v2948 = vld [vmem:[%s2820 + $0x3f8] sm:$0xff]
        %v2949 = vld [vmem:[%s2820 + $0x400] sm:$0xff]
        %v2950 = vld [vmem:[%s2820 + $0x408] sm:$0xff]
        %v2951 = vld [vmem:[%s2820 + $0x410] sm:$0xff]
        %v2952 = vld [vmem:[%s2820 + $0x418] sm:$0xff]
        %v2953 = vld [vmem:[%s2820 + $0x420] sm:$0xff]
        %v2954 = vld [vmem:[%s2820 + $0x428] sm:$0xff]
        %v2955 = vld [vmem:[%s2820 + $0x430] sm:$0xff]
        %v2956 = vld [vmem:[%s2820 + $0x438] sm:$0xff]
        %v2957 = vld [vmem:[%s2820 + $0x440] sm:$0xff]
        %v2958 = vld [vmem:[%s2820 + $0x448] sm:$0xff]
        %v2959 = vld [vmem:[%s2820 + $0x450] sm:$0xff]
        %v2960 = vld [vmem:[%s2820 + $0x458] sm:$0xff]
        %v2961 = vld [vmem:[%s2820 + $0x460] sm:$0xff]
        %v2962 = vld [vmem:[%s2820 + $0x468] sm:$0xff]
        %v2963 = vld [vmem:[%s2820 + $0x470] sm:$0xff]
        %v2964 = vld [vmem:[%s2820 + $0x478] sm:$0xff]
        %v2965 = vld [vmem:[%s2820 + $0x480] sm:$0xff]
        %v2966 = vld [vmem:[%s2820 + $0x488] sm:$0xff]
        %v2967 = vld [vmem:[%s2820 + $0x490] sm:$0xff]
        %v2968 = vld [vmem:[%s2820 + $0x498] sm:$0xff]
        %v2969 = vld [vmem:[%s2820 + $0x4a0] sm:$0xff]
        %v2970 = vld [vmem:[%s2820 + $0x4a8] sm:$0xff]
        %v2971 = vld [vmem:[%s2820 + $0x4b0] sm:$0xff]
        %v2972 = vld [vmem:[%s2820 + $0x4b8] sm:$0xff]
        %v2973 = vld [vmem:[%s2820 + $0x4c0] sm:$0xff]
        %v2974 = vld [vmem:[%s2820 + $0x4c8] sm:$0xff]
        %v2975 = vld [vmem:[%s2820 + $0x4d0] sm:$0xff]
        %v2976 = vld [vmem:[%s2820 + $0x4d8] sm:$0xff]
        %v2977 = vld [vmem:[%s2820 + $0x4e0] sm:$0xff]
        %v2978 = vld [vmem:[%s2820 + $0x4e8] sm:$0xff]
        %v2979 = vld [vmem:[%s2820 + $0x4f0] sm:$0xff]
        %v2980 = vld [vmem:[%s2820 + $0x4f8] sm:$0xff]
        %2981 = vmatpush.msra.mxu0 %v2675
        %2982 = vmatpush.msra.mxu0 %v2674
        %2983 = vmatpush.msra.mxu0 %v2673
        %2984 = vmatpush.msra.mxu0 %v2672
        %2985 = vmatpush.msra.mxu0 %v2671
        %2986 = vmatpush.msra.mxu0 %v2670
        %2987 = vmatpush.msra.mxu0 %v2669
        %2988 = vmatpush.msra.mxu0 %v2668
        %2989 = vmatpush.msra.mxu0 %v2667
        %2990 = vmatpush.msra.mxu0 %v2666
        %2991 = vmatpush.msra.mxu0 %v2665
        %2992 = vmatpush.msra.mxu0 %v2664
        %2993 = vmatpush.msra.mxu0 %v2663
        %2994 = vmatpush.msra.mxu0 %v2662
        %2995 = vmatpush.msra.mxu0 %v2661
        %2996 = vmatpush.msra.mxu0 %v2660
        %2997 = vmatmul.f32.gmra.mxu0 %v2624
        %v2998 = vpop.f32.mrf.mxu0
        %v2999 = vadd.f32 0.0, %v2998
        %3000 = vdwg.mxu0
        %3001 = vmatpush.msra.mxu0 %v2691
        %3002 = vmatpush.msra.mxu0 %v2690
        %3003 = vmatpush.msra.mxu0 %v2689
        %3004 = vmatpush.msra.mxu0 %v2688
        %3005 = vmatpush.msra.mxu0 %v2687
        %3006 = vmatpush.msra.mxu0 %v2686
        %3007 = vmatpush.msra.mxu0 %v2685
        %3008 = vmatpush.msra.mxu0 %v2684
        %3009 = vmatpush.msra.mxu0 %v2683
        %3010 = vmatpush.msra.mxu0 %v2682
        %3011 = vmatpush.msra.mxu0 %v2681
        %3012 = vmatpush.msra.mxu0 %v2680
        %3013 = vmatpush.msra.mxu0 %v2679
        %3014 = vmatpush.msra.mxu0 %v2678
        %3015 = vmatpush.msra.mxu0 %v2677
        %3016 = vmatpush.msra.mxu0 %v2676
        %3017 = vmatmul.f32.gmra.mxu0 %v2625
        %v3018 = vpop.f32.mrf.mxu0
        %v3019 = vadd.f32 %v2999, %v3018
        %3020 = vdwg.mxu0
        %3021 = vmatpush.msra.mxu0 %v2707
        %3022 = vmatpush.msra.mxu0 %v2706
        %3023 = vmatpush.msra.mxu0 %v2705
        %3024 = vmatpush.msra.mxu0 %v2704
        %3025 = vmatpush.msra.mxu0 %v2703
        %3026 = vmatpush.msra.mxu0 %v2702
        %3027 = vmatpush.msra.mxu0 %v2701
        %3028 = vmatpush.msra.mxu0 %v2700
        %3029 = vmatpush.msra.mxu0 %v2699
        %3030 = vmatpush.msra.mxu0 %v2698
        %3031 = vmatpush.msra.mxu0 %v2697
        %3032 = vmatpush.msra.mxu0 %v2696
        %3033 = vmatpush.msra.mxu0 %v2695
        %3034 = vmatpush.msra.mxu0 %v2694
        %3035 = vmatpush.msra.mxu0 %v2693
        %3036 = vmatpush.msra.mxu0 %v2692
        %3037 = vmatmul.f32.gmra.mxu0 %v2626
        %v3038 = vpop.f32.mrf.mxu0
        %v3039 = vadd.f32 %v3019, %v3038
        %3040 = vdwg.mxu0
        %3041 = vmatpush.msra.mxu0 %v2723
        %3042 = vmatpush.msra.mxu0 %v2722
        %3043 = vmatpush.msra.mxu0 %v2721
        %3044 = vmatpush.msra.mxu0 %v2720
        %3045 = vmatpush.msra.mxu0 %v2719
        %3046 = vmatpush.msra.mxu0 %v2718
        %3047 = vmatpush.msra.mxu0 %v2717
        %3048 = vmatpush.msra.mxu0 %v2716
        %3049 = vmatpush.msra.mxu0 %v2715
        %3050 = vmatpush.msra.mxu0 %v2714
        %3051 = vmatpush.msra.mxu0 %v2713
        %3052 = vmatpush.msra.mxu0 %v2712
        %3053 = vmatpush.msra.mxu0 %v2711
        %3054 = vmatpush.msra.mxu0 %v2710
        %3055 = vmatpush.msra.mxu0 %v2709
        %3056 = vmatpush.msra.mxu0 %v2708
        %3057 = vmatmul.f32.gmra.mxu0 %v2627
        %v3058 = vpop.f32.mrf.mxu0
        %v3059 = vadd.f32 %v3039, %v3058
        %3060 = vdwg.mxu0
        %3061 = vmatpush.msra.mxu0 %v2739
        %3062 = vmatpush.msra.mxu0 %v2738
        %3063 = vmatpush.msra.mxu0 %v2737
        %3064 = vmatpush.msra.mxu0 %v2736
        %3065 = vmatpush.msra.mxu0 %v2735
        %3066 = vmatpush.msra.mxu0 %v2734
        %3067 = vmatpush.msra.mxu0 %v2733
        %3068 = vmatpush.msra.mxu0 %v2732
        %3069 = vmatpush.msra.mxu0 %v2731
        %3070 = vmatpush.msra.mxu0 %v2730
        %3071 = vmatpush.msra.mxu0 %v2729
        %3072 = vmatpush.msra.mxu0 %v2728
        %3073 = vmatpush.msra.mxu0 %v2727
        %3074 = vmatpush.msra.mxu0 %v2726
        %3075 = vmatpush.msra.mxu0 %v2725
        %3076 = vmatpush.msra.mxu0 %v2724
        %3077 = vmatmul.f32.gmra.mxu0 %v2636
        %v3078 = vpop.f32.mrf.mxu0
        %v3079 = vadd.f32 %v3059, %v3078
        %3080 = vdwg.mxu0
        %3081 = vmatpush.msra.mxu0 %v2755
        %3082 = vmatpush.msra.mxu0 %v2754
        %3083 = vmatpush.msra.mxu0 %v2753
        %3084 = vmatpush.msra.mxu0 %v2752
        %3085 = vmatpush.msra.mxu0 %v2751
        %3086 = vmatpush.msra.mxu0 %v2750
        %3087 = vmatpush.msra.mxu0 %v2749
        %3088 = vmatpush.msra.mxu0 %v2748
        %3089 = vmatpush.msra.mxu0 %v2747
        %3090 = vmatpush.msra.mxu0 %v2746
        %3091 = vmatpush.msra.mxu0 %v2745
        %3092 = vmatpush.msra.mxu0 %v2744
        %3093 = vmatpush.msra.mxu0 %v2743
        %3094 = vmatpush.msra.mxu0 %v2742
        %3095 = vmatpush.msra.mxu0 %v2741
        %3096 = vmatpush.msra.mxu0 %v2740
        %3097 = vmatmul.f32.gmra.mxu0 %v2637
        %v3098 = vpop.f32.mrf.mxu0
        %v3099 = vadd.f32 %v3079, %v3098
        %3100 = vdwg.mxu0
        %3101 = vmatpush.msra.mxu0 %v2771
        %3102 = vmatpush.msra.mxu0 %v2770
        %3103 = vmatpush.msra.mxu0 %v2769
        %3104 = vmatpush.msra.mxu0 %v2768
        %3105 = vmatpush.msra.mxu0 %v2767
        %3106 = vmatpush.msra.mxu0 %v2766
        %3107 = vmatpush.msra.mxu0 %v2765
        %3108 = vmatpush.msra.mxu0 %v2764
        %3109 = vmatpush.msra.mxu0 %v2763
        %3110 = vmatpush.msra.mxu0 %v2762
        %3111 = vmatpush.msra.mxu0 %v2761
        %3112 = vmatpush.msra.mxu0 %v2760
        %3113 = vmatpush.msra.mxu0 %v2759
        %3114 = vmatpush.msra.mxu0 %v2758
        %3115 = vmatpush.msra.mxu0 %v2757
        %3116 = vmatpush.msra.mxu0 %v2756
        %3117 = vmatmul.f32.gmra.mxu0 %v2642
        %v3118 = vpop.f32.mrf.mxu0
        %v3119 = vadd.f32 %v3099, %v3118
        %3120 = vdwg.mxu0
        %3121 = vmatpush.msra.mxu0 %v2787
        %3122 = vmatpush.msra.mxu0 %v2786
        %3123 = vmatpush.msra.mxu0 %v2785
        %3124 = vmatpush.msra.mxu0 %v2784
        %3125 = vmatpush.msra.mxu0 %v2783
        %3126 = vmatpush.msra.mxu0 %v2782
        %3127 = vmatpush.msra.mxu0 %v2781
        %3128 = vmatpush.msra.mxu0 %v2780
        %3129 = vmatpush.msra.mxu0 %v2779
        %3130 = vmatpush.msra.mxu0 %v2778
        %3131 = vmatpush.msra.mxu0 %v2777
        %3132 = vmatpush.msra.mxu0 %v2776
        %3133 = vmatpush.msra.mxu0 %v2775
        %3134 = vmatpush.msra.mxu0 %v2774
        %3135 = vmatpush.msra.mxu0 %v2773
        %3136 = vmatpush.msra.mxu0 %v2772
        %3137 = vmatmul.f32.gmra.mxu0 %v2643
        %v3138 = vpop.f32.mrf.mxu0
        %v3139 = vadd.f32 %v3119, %v3138
        %3140 = vdwg.mxu0
        %3141 = vmatpush.msra.mxu0 %v2803
        %3142 = vmatpush.msra.mxu0 %v2802
        %3143 = vmatpush.msra.mxu0 %v2801
        %3144 = vmatpush.msra.mxu0 %v2800
        %3145 = vmatpush.msra.mxu0 %v2799
        %3146 = vmatpush.msra.mxu0 %v2798
        %3147 = vmatpush.msra.mxu0 %v2797
        %3148 = vmatpush.msra.mxu0 %v2796
        %3149 = vmatpush.msra.mxu0 %v2795
        %3150 = vmatpush.msra.mxu0 %v2794
        %3151 = vmatpush.msra.mxu0 %v2793
        %3152 = vmatpush.msra.mxu0 %v2792
        %3153 = vmatpush.msra.mxu0 %v2791
        %3154 = vmatpush.msra.mxu0 %v2790
        %3155 = vmatpush.msra.mxu0 %v2789
        %3156 = vmatpush.msra.mxu0 %v2788
        %3157 = vmatmul.f32.gmra.mxu0 %v2648
        %v3158 = vpop.f32.mrf.mxu0
        %v3159 = vadd.f32 %v3139, %v3158
        %3160 = vdwg.mxu0
        %3161 = vmatpush.msra.mxu0 %v2819
        %3162 = vmatpush.msra.mxu0 %v2818
        %3163 = vmatpush.msra.mxu0 %v2817
        %3164 = vmatpush.msra.mxu0 %v2816
        %3165 = vmatpush.msra.mxu0 %v2815
        %3166 = vmatpush.msra.mxu0 %v2814
        %3167 = vmatpush.msra.mxu0 %v2813
        %3168 = vmatpush.msra.mxu0 %v2812
        %3169 = vmatpush.msra.mxu0 %v2811
        %3170 = vmatpush.msra.mxu0 %v2810
        %3171 = vmatpush.msra.mxu0 %v2809
        %3172 = vmatpush.msra.mxu0 %v2808
        %3173 = vmatpush.msra.mxu0 %v2807
        %3174 = vmatpush.msra.mxu0 %v2806
        %3175 = vmatpush.msra.mxu0 %v2805
        %3176 = vmatpush.msra.mxu0 %v2804
        %3177 = vmatmul.f32.gmra.mxu0 %v2649
        %v3178 = vpop.f32.mrf.mxu0
        %v3179 = vadd.f32 %v3159, %v3178
        %3180 = vdwg.mxu0
        %3181 = vmatpush.msra.mxu0 %v2836
        %3182 = vmatpush.msra.mxu0 %v2835
        %3183 = vmatpush.msra.mxu0 %v2834
        %3184 = vmatpush.msra.mxu0 %v2833
        %3185 = vmatpush.msra.mxu0 %v2832
        %3186 = vmatpush.msra.mxu0 %v2831
        %3187 = vmatpush.msra.mxu0 %v2830
        %3188 = vmatpush.msra.mxu0 %v2829
        %3189 = vmatpush.msra.mxu0 %v2828
        %3190 = vmatpush.msra.mxu0 %v2827
        %3191 = vmatpush.msra.mxu0 %v2826
        %3192 = vmatpush.msra.mxu0 %v2825
        %3193 = vmatpush.msra.mxu0 %v2824
        %3194 = vmatpush.msra.mxu0 %v2823
        %3195 = vmatpush.msra.mxu0 %v2822
        %3196 = vmatpush.msra.mxu0 %v2821
        %3197 = vmatmul.f32.gmra.mxu0 %v2624
        %v3198 = vpop.f32.mrf.mxu0
        %v3199 = vadd.f32 0.0, %v3198
        %3200 = vdwg.mxu0
        %3201 = vmatpush.msra.mxu0 %v2852
        %3202 = vmatpush.msra.mxu0 %v2851
        %3203 = vmatpush.msra.mxu0 %v2850
        %3204 = vmatpush.msra.mxu0 %v2849
        %3205 = vmatpush.msra.mxu0 %v2848
        %3206 = vmatpush.msra.mxu0 %v2847
        %3207 = vmatpush.msra.mxu0 %v2846
        %3208 = vmatpush.msra.mxu0 %v2845
        %3209 = vmatpush.msra.mxu0 %v2844
        %3210 = vmatpush.msra.mxu0 %v2843
        %3211 = vmatpush.msra.mxu0 %v2842
        %3212 = vmatpush.msra.mxu0 %v2841
        %3213 = vmatpush.msra.mxu0 %v2840
        %3214 = vmatpush.msra.mxu0 %v2839
        %3215 = vmatpush.msra.mxu0 %v2838
        %3216 = vmatpush.msra.mxu0 %v2837
        %3217 = vmatmul.f32.gmra.mxu0 %v2625
        %v3218 = vpop.f32.mrf.mxu0
        %v3219 = vadd.f32 %v3199, %v3218
        %3220 = vdwg.mxu0
        %3221 = vmatpush.msra.mxu0 %v2868
        %3222 = vmatpush.msra.mxu0 %v2867
        %3223 = vmatpush.msra.mxu0 %v2866
        %3224 = vmatpush.msra.mxu0 %v2865
        %3225 = vmatpush.msra.mxu0 %v2864
        %3226 = vmatpush.msra.mxu0 %v2863
        %3227 = vmatpush.msra.mxu0 %v2862
        %3228 = vmatpush.msra.mxu0 %v2861
        %3229 = vmatpush.msra.mxu0 %v2860
        %3230 = vmatpush.msra.mxu0 %v2859
        %3231 = vmatpush.msra.mxu0 %v2858
        %3232 = vmatpush.msra.mxu0 %v2857
        %3233 = vmatpush.msra.mxu0 %v2856
        %3234 = vmatpush.msra.mxu0 %v2855
        %3235 = vmatpush.msra.mxu0 %v2854
        %3236 = vmatpush.msra.mxu0 %v2853
        %3237 = vmatmul.f32.gmra.mxu0 %v2626
        %v3238 = vpop.f32.mrf.mxu0
        %v3239 = vadd.f32 %v3219, %v3238
        %3240 = vdwg.mxu0
        %3241 = vmatpush.msra.mxu0 %v2884
        %3242 = vmatpush.msra.mxu0 %v2883
        %3243 = vmatpush.msra.mxu0 %v2882
        %3244 = vmatpush.msra.mxu0 %v2881
        %3245 = vmatpush.msra.mxu0 %v2880
        %3246 = vmatpush.msra.mxu0 %v2879
        %3247 = vmatpush.msra.mxu0 %v2878
        %3248 = vmatpush.msra.mxu0 %v2877
        %3249 = vmatpush.msra.mxu0 %v2876
        %3250 = vmatpush.msra.mxu0 %v2875
        %3251 = vmatpush.msra.mxu0 %v2874
        %3252 = vmatpush.msra.mxu0 %v2873
        %3253 = vmatpush.msra.mxu0 %v2872
        %3254 = vmatpush.msra.mxu0 %v2871
        %3255 = vmatpush.msra.mxu0 %v2870
        %3256 = vmatpush.msra.mxu0 %v2869
        %3257 = vmatmul.f32.gmra.mxu0 %v2627
        %v3258 = vpop.f32.mrf.mxu0
        %v3259 = vadd.f32 %v3239, %v3258
        %3260 = vdwg.mxu0
        %3261 = vmatpush.msra.mxu0 %v2900
        %3262 = vmatpush.msra.mxu0 %v2899
        %3263 = vmatpush.msra.mxu0 %v2898
        %3264 = vmatpush.msra.mxu0 %v2897
        %3265 = vmatpush.msra.mxu0 %v2896
        %3266 = vmatpush.msra.mxu0 %v2895
        %3267 = vmatpush.msra.mxu0 %v2894
        %3268 = vmatpush.msra.mxu0 %v2893
        %3269 = vmatpush.msra.mxu0 %v2892
        %3270 = vmatpush.msra.mxu0 %v2891
        %3271 = vmatpush.msra.mxu0 %v2890
        %3272 = vmatpush.msra.mxu0 %v2889
        %3273 = vmatpush.msra.mxu0 %v2888
        %3274 = vmatpush.msra.mxu0 %v2887
        %3275 = vmatpush.msra.mxu0 %v2886
        %3276 = vmatpush.msra.mxu0 %v2885
        %3277 = vmatmul.f32.gmra.mxu0 %v2636
        %v3278 = vpop.f32.mrf.mxu0
        %v3279 = vadd.f32 %v3259, %v3278
        %3280 = vdwg.mxu0
        %3281 = vmatpush.msra.mxu0 %v2916
        %3282 = vmatpush.msra.mxu0 %v2915
        %3283 = vmatpush.msra.mxu0 %v2914
        %3284 = vmatpush.msra.mxu0 %v2913
        %3285 = vmatpush.msra.mxu0 %v2912
        %3286 = vmatpush.msra.mxu0 %v2911
        %3287 = vmatpush.msra.mxu0 %v2910
        %3288 = vmatpush.msra.mxu0 %v2909
        %3289 = vmatpush.msra.mxu0 %v2908
        %3290 = vmatpush.msra.mxu0 %v2907
        %3291 = vmatpush.msra.mxu0 %v2906
        %3292 = vmatpush.msra.mxu0 %v2905
        %3293 = vmatpush.msra.mxu0 %v2904
        %3294 = vmatpush.msra.mxu0 %v2903
        %3295 = vmatpush.msra.mxu0 %v2902
        %3296 = vmatpush.msra.mxu0 %v2901
        %3297 = vmatmul.f32.gmra.mxu0 %v2637
        %v3298 = vpop.f32.mrf.mxu0
        %v3299 = vadd.f32 %v3279, %v3298
        %3300 = vdwg.mxu0
        %3301 = vmatpush.msra.mxu0 %v2932
        %3302 = vmatpush.msra.mxu0 %v2931
        %3303 = vmatpush.msra.mxu0 %v2930
        %3304 = vmatpush.msra.mxu0 %v2929
        %3305 = vmatpush.msra.mxu0 %v2928
        %3306 = vmatpush.msra.mxu0 %v2927
        %3307 = vmatpush.msra.mxu0 %v2926
        %3308 = vmatpush.msra.mxu0 %v2925
        %3309 = vmatpush.msra.mxu0 %v2924
        %3310 = vmatpush.msra.mxu0 %v2923
        %3311 = vmatpush.msra.mxu0 %v2922
        %3312 = vmatpush.msra.mxu0 %v2921
        %3313 = vmatpush.msra.mxu0 %v2920
        %3314 = vmatpush.msra.mxu0 %v2919
        %3315 = vmatpush.msra.mxu0 %v2918
        %3316 = vmatpush.msra.mxu0 %v2917
        %3317 = vmatmul.f32.gmra.mxu0 %v2642
        %v3318 = vpop.f32.mrf.mxu0
        %v3319 = vadd.f32 %v3299, %v3318
        %3320 = vdwg.mxu0
        %3321 = vmatpush.msra.mxu0 %v2948
        %3322 = vmatpush.msra.mxu0 %v2947
        %3323 = vmatpush.msra.mxu0 %v2946
        %3324 = vmatpush.msra.mxu0 %v2945
        %3325 = vmatpush.msra.mxu0 %v2944
        %3326 = vmatpush.msra.mxu0 %v2943
        %3327 = vmatpush.msra.mxu0 %v2942
        %3328 = vmatpush.msra.mxu0 %v2941
        %3329 = vmatpush.msra.mxu0 %v2940
        %3330 = vmatpush.msra.mxu0 %v2939
        %3331 = vmatpush.msra.mxu0 %v2938
        %3332 = vmatpush.msra.mxu0 %v2937
        %3333 = vmatpush.msra.mxu0 %v2936
        %3334 = vmatpush.msra.mxu0 %v2935
        %3335 = vmatpush.msra.mxu0 %v2934
        %3336 = vmatpush.msra.mxu0 %v2933
        %3337 = vmatmul.f32.gmra.mxu0 %v2643
        %v3338 = vpop.f32.mrf.mxu0
        %v3339 = vadd.f32 %v3319, %v3338
        %3340 = vdwg.mxu0
        %3341 = vmatpush.msra.mxu0 %v2964
        %3342 = vmatpush.msra.mxu0 %v2963
        %3343 = vmatpush.msra.mxu0 %v2962
        %3344 = vmatpush.msra.mxu0 %v2961
        %3345 = vmatpush.msra.mxu0 %v2960
        %3346 = vmatpush.msra.mxu0 %v2959
        %3347 = vmatpush.msra.mxu0 %v2958
        %3348 = vmatpush.msra.mxu0 %v2957
        %3349 = vmatpush.msra.mxu0 %v2956
        %3350 = vmatpush.msra.mxu0 %v2955
        %3351 = vmatpush.msra.mxu0 %v2954
        %3352 = vmatpush.msra.mxu0 %v2953
        %3353 = vmatpush.msra.mxu0 %v2952
        %3354 = vmatpush.msra.mxu0 %v2951
        %3355 = vmatpush.msra.mxu0 %v2950
        %3356 = vmatpush.msra.mxu0 %v2949
        %3357 = vmatmul.f32.gmra.mxu0 %v2648
        %v3358 = vpop.f32.mrf.mxu0
        %v3359 = vadd.f32 %v3339, %v3358
        %3360 = vdwg.mxu0
        %3361 = vmatpush.msra.mxu0 %v2980
        %3362 = vmatpush.msra.mxu0 %v2979
        %3363 = vmatpush.msra.mxu0 %v2978
        %3364 = vmatpush.msra.mxu0 %v2977
        %3365 = vmatpush.msra.mxu0 %v2976
        %3366 = vmatpush.msra.mxu0 %v2975
        %3367 = vmatpush.msra.mxu0 %v2974
        %3368 = vmatpush.msra.mxu0 %v2973
        %3369 = vmatpush.msra.mxu0 %v2972
        %3370 = vmatpush.msra.mxu0 %v2971
        %3371 = vmatpush.msra.mxu0 %v2970
        %3372 = vmatpush.msra.mxu0 %v2969
        %3373 = vmatpush.msra.mxu0 %v2968
        %3374 = vmatpush.msra.mxu0 %v2967
        %3375 = vmatpush.msra.mxu0 %v2966
        %3376 = vmatpush.msra.mxu0 %v2965
        %3377 = vmatmul.f32.gmra.mxu0 %v2649
        %v3378 = vpop.f32.mrf.mxu0
        %v3379 = vadd.f32 %v3359, %v3378
        %3380 = vdwg.mxu0
        %3381 = vmatpush.msra.mxu0 %v2675
        %3382 = vmatpush.msra.mxu0 %v2674
        %3383 = vmatpush.msra.mxu0 %v2673
        %3384 = vmatpush.msra.mxu0 %v2672
        %3385 = vmatpush.msra.mxu0 %v2671
        %3386 = vmatpush.msra.mxu0 %v2670
        %3387 = vmatpush.msra.mxu0 %v2669
        %3388 = vmatpush.msra.mxu0 %v2668
        %3389 = vmatpush.msra.mxu0 %v2667
        %3390 = vmatpush.msra.mxu0 %v2666
        %3391 = vmatpush.msra.mxu0 %v2665
        %3392 = vmatpush.msra.mxu0 %v2664
        %3393 = vmatpush.msra.mxu0 %v2663
        %3394 = vmatpush.msra.mxu0 %v2662
        %3395 = vmatpush.msra.mxu0 %v2661
        %3396 = vmatpush.msra.mxu0 %v2660
        %3397 = vmatmul.f32.gmra.mxu0 %v2626
        %v3398 = vpop.f32.mrf.mxu0
        %v3399 = vadd.f32 0.0, %v3398
        %3400 = vdwg.mxu0
        %3401 = vmatpush.msra.mxu0 %v2691
        %3402 = vmatpush.msra.mxu0 %v2690
        %3403 = vmatpush.msra.mxu0 %v2689
        %3404 = vmatpush.msra.mxu0 %v2688
        %3405 = vmatpush.msra.mxu0 %v2687
        %3406 = vmatpush.msra.mxu0 %v2686
        %3407 = vmatpush.msra.mxu0 %v2685
        %3408 = vmatpush.msra.mxu0 %v2684
        %3409 = vmatpush.msra.mxu0 %v2683
        %3410 = vmatpush.msra.mxu0 %v2682
        %3411 = vmatpush.msra.mxu0 %v2681
        %3412 = vmatpush.msra.mxu0 %v2680
        %3413 = vmatpush.msra.mxu0 %v2679
        %3414 = vmatpush.msra.mxu0 %v2678
        %3415 = vmatpush.msra.mxu0 %v2677
        %3416 = vmatpush.msra.mxu0 %v2676
        %3417 = vmatmul.f32.gmra.mxu0 %v2627
        %v3418 = vpop.f32.mrf.mxu0
        %v3419 = vadd.f32 %v3399, %v3418
        %3420 = vdwg.mxu0
        %3421 = vmatpush.msra.mxu0 %v2707
        %3422 = vmatpush.msra.mxu0 %v2706
        %3423 = vmatpush.msra.mxu0 %v2705
        %3424 = vmatpush.msra.mxu0 %v2704
        %3425 = vmatpush.msra.mxu0 %v2703
        %3426 = vmatpush.msra.mxu0 %v2702
        %3427 = vmatpush.msra.mxu0 %v2701
        %3428 = vmatpush.msra.mxu0 %v2700
        %3429 = vmatpush.msra.mxu0 %v2699
        %3430 = vmatpush.msra.mxu0 %v2698
        %3431 = vmatpush.msra.mxu0 %v2697
        %3432 = vmatpush.msra.mxu0 %v2696
        %3433 = vmatpush.msra.mxu0 %v2695
        %3434 = vmatpush.msra.mxu0 %v2694
        %3435 = vmatpush.msra.mxu0 %v2693
        %3436 = vmatpush.msra.mxu0 %v2692
        %3437 = vmatmul.f32.gmra.mxu0 %v2636
        %v3438 = vpop.f32.mrf.mxu0
        %v3439 = vadd.f32 %v3419, %v3438
        %3440 = vdwg.mxu0
        %3441 = vmatpush.msra.mxu0 %v2723
        %3442 = vmatpush.msra.mxu0 %v2722
        %3443 = vmatpush.msra.mxu0 %v2721
        %3444 = vmatpush.msra.mxu0 %v2720
        %3445 = vmatpush.msra.mxu0 %v2719
        %3446 = vmatpush.msra.mxu0 %v2718
        %3447 = vmatpush.msra.mxu0 %v2717
        %3448 = vmatpush.msra.mxu0 %v2716
        %3449 = vmatpush.msra.mxu0 %v2715
        %3450 = vmatpush.msra.mxu0 %v2714
        %3451 = vmatpush.msra.mxu0 %v2713
        %3452 = vmatpush.msra.mxu0 %v2712
        %3453 = vmatpush.msra.mxu0 %v2711
        %3454 = vmatpush.msra.mxu0 %v2710
        %3455 = vmatpush.msra.mxu0 %v2709
        %3456 = vmatpush.msra.mxu0 %v2708
        %3457 = vmatmul.f32.gmra.mxu0 %v2637
        %v3458 = vpop.f32.mrf.mxu0
        %v3459 = vadd.f32 %v3439, %v3458
        %3460 = vdwg.mxu0
        %3461 = vmatpush.msra.mxu0 %v2739
        %3462 = vmatpush.msra.mxu0 %v2738
        %3463 = vmatpush.msra.mxu0 %v2737
        %3464 = vmatpush.msra.mxu0 %v2736
        %3465 = vmatpush.msra.mxu0 %v2735
        %3466 = vmatpush.msra.mxu0 %v2734
        %3467 = vmatpush.msra.mxu0 %v2733
        %3468 = vmatpush.msra.mxu0 %v2732
        %3469 = vmatpush.msra.mxu0 %v2731
        %3470 = vmatpush.msra.mxu0 %v2730
        %3471 = vmatpush.msra.mxu0 %v2729
        %3472 = vmatpush.msra.mxu0 %v2728
        %3473 = vmatpush.msra.mxu0 %v2727
        %3474 = vmatpush.msra.mxu0 %v2726
        %3475 = vmatpush.msra.mxu0 %v2725
        %3476 = vmatpush.msra.mxu0 %v2724
        %3477 = vmatmul.f32.gmra.mxu0 %v2642
        %v3478 = vpop.f32.mrf.mxu0
        %v3479 = vadd.f32 %v3459, %v3478
        %3480 = vdwg.mxu0
        %3481 = vmatpush.msra.mxu0 %v2755
        %3482 = vmatpush.msra.mxu0 %v2754
        %3483 = vmatpush.msra.mxu0 %v2753
        %3484 = vmatpush.msra.mxu0 %v2752
        %3485 = vmatpush.msra.mxu0 %v2751
        %3486 = vmatpush.msra.mxu0 %v2750
        %3487 = vmatpush.msra.mxu0 %v2749
        %3488 = vmatpush.msra.mxu0 %v2748
        %3489 = vmatpush.msra.mxu0 %v2747
        %3490 = vmatpush.msra.mxu0 %v2746
        %3491 = vmatpush.msra.mxu0 %v2745
        %3492 = vmatpush.msra.mxu0 %v2744
        %3493 = vmatpush.msra.mxu0 %v2743
        %3494 = vmatpush.msra.mxu0 %v2742
        %3495 = vmatpush.msra.mxu0 %v2741
        %3496 = vmatpush.msra.mxu0 %v2740
        %3497 = vmatmul.f32.gmra.mxu0 %v2643
        %v3498 = vpop.f32.mrf.mxu0
        %v3499 = vadd.f32 %v3479, %v3498
        %3500 = vdwg.mxu0
        %3501 = vmatpush.msra.mxu0 %v2771
        %3502 = vmatpush.msra.mxu0 %v2770
        %3503 = vmatpush.msra.mxu0 %v2769
        %3504 = vmatpush.msra.mxu0 %v2768
        %3505 = vmatpush.msra.mxu0 %v2767
        %3506 = vmatpush.msra.mxu0 %v2766
        %3507 = vmatpush.msra.mxu0 %v2765
        %3508 = vmatpush.msra.mxu0 %v2764
        %3509 = vmatpush.msra.mxu0 %v2763
        %3510 = vmatpush.msra.mxu0 %v2762
        %3511 = vmatpush.msra.mxu0 %v2761
        %3512 = vmatpush.msra.mxu0 %v2760
        %3513 = vmatpush.msra.mxu0 %v2759
        %3514 = vmatpush.msra.mxu0 %v2758
        %3515 = vmatpush.msra.mxu0 %v2757
        %3516 = vmatpush.msra.mxu0 %v2756
        %3517 = vmatmul.f32.gmra.mxu0 %v2648
        %v3518 = vpop.f32.mrf.mxu0
        %v3519 = vadd.f32 %v3499, %v3518
        %3520 = vdwg.mxu0
        %3521 = vmatpush.msra.mxu0 %v2787
        %3522 = vmatpush.msra.mxu0 %v2786
        %3523 = vmatpush.msra.mxu0 %v2785
        %3524 = vmatpush.msra.mxu0 %v2784
        %3525 = vmatpush.msra.mxu0 %v2783
        %3526 = vmatpush.msra.mxu0 %v2782
        %3527 = vmatpush.msra.mxu0 %v2781
        %3528 = vmatpush.msra.mxu0 %v2780
        %3529 = vmatpush.msra.mxu0 %v2779
        %3530 = vmatpush.msra.mxu0 %v2778
        %3531 = vmatpush.msra.mxu0 %v2777
        %3532 = vmatpush.msra.mxu0 %v2776
        %3533 = vmatpush.msra.mxu0 %v2775
        %3534 = vmatpush.msra.mxu0 %v2774
        %3535 = vmatpush.msra.mxu0 %v2773
        %3536 = vmatpush.msra.mxu0 %v2772
        %3537 = vmatmul.f32.gmra.mxu0 %v2649
        %v3538 = vpop.f32.mrf.mxu0
        %v3539 = vadd.f32 %v3519, %v3538
        %3540 = vdwg.mxu0
        %3541 = vmatpush.msra.mxu0 %v2803
        %3542 = vmatpush.msra.mxu0 %v2802
        %3543 = vmatpush.msra.mxu0 %v2801
        %3544 = vmatpush.msra.mxu0 %v2800
        %3545 = vmatpush.msra.mxu0 %v2799
        %3546 = vmatpush.msra.mxu0 %v2798
        %3547 = vmatpush.msra.mxu0 %v2797
        %3548 = vmatpush.msra.mxu0 %v2796
        %3549 = vmatpush.msra.mxu0 %v2795
        %3550 = vmatpush.msra.mxu0 %v2794
        %3551 = vmatpush.msra.mxu0 %v2793
        %3552 = vmatpush.msra.mxu0 %v2792
        %3553 = vmatpush.msra.mxu0 %v2791
        %3554 = vmatpush.msra.mxu0 %v2790
        %3555 = vmatpush.msra.mxu0 %v2789
        %3556 = vmatpush.msra.mxu0 %v2788
        %3557 = vmatmul.f32.gmra.mxu0 %v2656
        %v3558 = vpop.f32.mrf.mxu0
        %v3559 = vadd.f32 %v3539, %v3558
        %3560 = vdwg.mxu0
        %3561 = vmatpush.msra.mxu0 %v2819
        %3562 = vmatpush.msra.mxu0 %v2818
        %3563 = vmatpush.msra.mxu0 %v2817
        %3564 = vmatpush.msra.mxu0 %v2816
        %3565 = vmatpush.msra.mxu0 %v2815
        %3566 = vmatpush.msra.mxu0 %v2814
        %3567 = vmatpush.msra.mxu0 %v2813
        %3568 = vmatpush.msra.mxu0 %v2812
        %3569 = vmatpush.msra.mxu0 %v2811
        %3570 = vmatpush.msra.mxu0 %v2810
        %3571 = vmatpush.msra.mxu0 %v2809
        %3572 = vmatpush.msra.mxu0 %v2808
        %3573 = vmatpush.msra.mxu0 %v2807
        %3574 = vmatpush.msra.mxu0 %v2806
        %3575 = vmatpush.msra.mxu0 %v2805
        %3576 = vmatpush.msra.mxu0 %v2804
        %3577 = vmatmul.f32.gmra.mxu0 %v2657
        %v3578 = vpop.f32.mrf.mxu0
        %v3579 = vadd.f32 %v3559, %v3578
        %3580 = vdwg.mxu0
        %3581 = vmatpush.msra.mxu0 %v2836
        %3582 = vmatpush.msra.mxu0 %v2835
        %3583 = vmatpush.msra.mxu0 %v2834
        %3584 = vmatpush.msra.mxu0 %v2833
        %3585 = vmatpush.msra.mxu0 %v2832
        %3586 = vmatpush.msra.mxu0 %v2831
        %3587 = vmatpush.msra.mxu0 %v2830
        %3588 = vmatpush.msra.mxu0 %v2829
        %3589 = vmatpush.msra.mxu0 %v2828
        %3590 = vmatpush.msra.mxu0 %v2827
        %3591 = vmatpush.msra.mxu0 %v2826
        %3592 = vmatpush.msra.mxu0 %v2825
        %3593 = vmatpush.msra.mxu0 %v2824
        %3594 = vmatpush.msra.mxu0 %v2823
        %3595 = vmatpush.msra.mxu0 %v2822
        %3596 = vmatpush.msra.mxu0 %v2821
        %3597 = vmatmul.f32.gmra.mxu0 %v2626
        %v3598 = vpop.f32.mrf.mxu0
        %v3599 = vadd.f32 0.0, %v3598
        %3600 = vdwg.mxu0
        %3601 = vmatpush.msra.mxu0 %v2852
        %3602 = vmatpush.msra.mxu0 %v2851
        %3603 = vmatpush.msra.mxu0 %v2850
        %3604 = vmatpush.msra.mxu0 %v2849
        %3605 = vmatpush.msra.mxu0 %v2848
        %3606 = vmatpush.msra.mxu0 %v2847
        %3607 = vmatpush.msra.mxu0 %v2846
        %3608 = vmatpush.msra.mxu0 %v2845
        %3609 = vmatpush.msra.mxu0 %v2844
        %3610 = vmatpush.msra.mxu0 %v2843
        %3611 = vmatpush.msra.mxu0 %v2842
        %3612 = vmatpush.msra.mxu0 %v2841
        %3613 = vmatpush.msra.mxu0 %v2840
        %3614 = vmatpush.msra.mxu0 %v2839
        %3615 = vmatpush.msra.mxu0 %v2838
        %3616 = vmatpush.msra.mxu0 %v2837
        %3617 = vmatmul.f32.gmra.mxu0 %v2627
        %v3618 = vpop.f32.mrf.mxu0
        %v3619 = vadd.f32 %v3599, %v3618
        %3620 = vdwg.mxu0
        %3621 = vmatpush.msra.mxu0 %v2868
        %3622 = vmatpush.msra.mxu0 %v2867
        %3623 = vmatpush.msra.mxu0 %v2866
        %3624 = vmatpush.msra.mxu0 %v2865
        %3625 = vmatpush.msra.mxu0 %v2864
        %3626 = vmatpush.msra.mxu0 %v2863
        %3627 = vmatpush.msra.mxu0 %v2862
        %3628 = vmatpush.msra.mxu0 %v2861
        %3629 = vmatpush.msra.mxu0 %v2860
        %3630 = vmatpush.msra.mxu0 %v2859
        %3631 = vmatpush.msra.mxu0 %v2858
        %3632 = vmatpush.msra.mxu0 %v2857
        %3633 = vmatpush.msra.mxu0 %v2856
        %3634 = vmatpush.msra.mxu0 %v2855
        %3635 = vmatpush.msra.mxu0 %v2854
        %3636 = vmatpush.msra.mxu0 %v2853
        %3637 = vmatmul.f32.gmra.mxu0 %v2636
        %v3638 = vpop.f32.mrf.mxu0
        %v3639 = vadd.f32 %v3619, %v3638
        %3640 = vdwg.mxu0
        %3641 = vmatpush.msra.mxu0 %v2884
        %3642 = vmatpush.msra.mxu0 %v2883
        %3643 = vmatpush.msra.mxu0 %v2882
        %3644 = vmatpush.msra.mxu0 %v2881
        %3645 = vmatpush.msra.mxu0 %v2880
        %3646 = vmatpush.msra.mxu0 %v2879
        %3647 = vmatpush.msra.mxu0 %v2878
        %3648 = vmatpush.msra.mxu0 %v2877
        %3649 = vmatpush.msra.mxu0 %v2876
        %3650 = vmatpush.msra.mxu0 %v2875
        %3651 = vmatpush.msra.mxu0 %v2874
        %3652 = vmatpush.msra.mxu0 %v2873
        %3653 = vmatpush.msra.mxu0 %v2872
        %3654 = vmatpush.msra.mxu0 %v2871
        %3655 = vmatpush.msra.mxu0 %v2870
        %3656 = vmatpush.msra.mxu0 %v2869
        %3657 = vmatmul.f32.gmra.mxu0 %v2637
        %v3658 = vpop.f32.mrf.mxu0
        %v3659 = vadd.f32 %v3639, %v3658
        %3660 = vdwg.mxu0
        %3661 = vmatpush.msra.mxu0 %v2900
        %3662 = vmatpush.msra.mxu0 %v2899
        %3663 = vmatpush.msra.mxu0 %v2898
        %3664 = vmatpush.msra.mxu0 %v2897
        %3665 = vmatpush.msra.mxu0 %v2896
        %3666 = vmatpush.msra.mxu0 %v2895
        %3667 = vmatpush.msra.mxu0 %v2894
        %3668 = vmatpush.msra.mxu0 %v2893
        %3669 = vmatpush.msra.mxu0 %v2892
        %3670 = vmatpush.msra.mxu0 %v2891
        %3671 = vmatpush.msra.mxu0 %v2890
        %3672 = vmatpush.msra.mxu0 %v2889
        %3673 = vmatpush.msra.mxu0 %v2888
        %3674 = vmatpush.msra.mxu0 %v2887
        %3675 = vmatpush.msra.mxu0 %v2886
        %3676 = vmatpush.msra.mxu0 %v2885
        %3677 = vmatmul.f32.gmra.mxu0 %v2642
        %v3678 = vpop.f32.mrf.mxu0
        %v3679 = vadd.f32 %v3659, %v3678
        %3680 = vdwg.mxu0
        %3681 = vmatpush.msra.mxu0 %v2916
        %3682 = vmatpush.msra.mxu0 %v2915
        %3683 = vmatpush.msra.mxu0 %v2914
        %3684 = vmatpush.msra.mxu0 %v2913
        %3685 = vmatpush.msra.mxu0 %v2912
        %3686 = vmatpush.msra.mxu0 %v2911
        %3687 = vmatpush.msra.mxu0 %v2910
        %3688 = vmatpush.msra.mxu0 %v2909
        %3689 = vmatpush.msra.mxu0 %v2908
        %3690 = vmatpush.msra.mxu0 %v2907
        %3691 = vmatpush.msra.mxu0 %v2906
        %3692 = vmatpush.msra.mxu0 %v2905
        %3693 = vmatpush.msra.mxu0 %v2904
        %3694 = vmatpush.msra.mxu0 %v2903
        %3695 = vmatpush.msra.mxu0 %v2902
        %3696 = vmatpush.msra.mxu0 %v2901
        %3697 = vmatmul.f32.gmra.mxu0 %v2643
        %v3698 = vpop.f32.mrf.mxu0
        %v3699 = vadd.f32 %v3679, %v3698
        %3700 = vdwg.mxu0
        %3701 = vmatpush.msra.mxu0 %v2932
        %3702 = vmatpush.msra.mxu0 %v2931
        %3703 = vmatpush.msra.mxu0 %v2930
        %3704 = vmatpush.msra.mxu0 %v2929
        %3705 = vmatpush.msra.mxu0 %v2928
        %3706 = vmatpush.msra.mxu0 %v2927
        %3707 = vmatpush.msra.mxu0 %v2926
        %3708 = vmatpush.msra.mxu0 %v2925
        %3709 = vmatpush.msra.mxu0 %v2924
        %3710 = vmatpush.msra.mxu0 %v2923
        %3711 = vmatpush.msra.mxu0 %v2922
        %3712 = vmatpush.msra.mxu0 %v2921
        %3713 = vmatpush.msra.mxu0 %v2920
        %3714 = vmatpush.msra.mxu0 %v2919
        %3715 = vmatpush.msra.mxu0 %v2918
        %3716 = vmatpush.msra.mxu0 %v2917
        %3717 = vmatmul.f32.gmra.mxu0 %v2648
        %v3718 = vpop.f32.mrf.mxu0
        %v3719 = vadd.f32 %v3699, %v3718
        %3720 = vdwg.mxu0
        %3721 = vmatpush.msra.mxu0 %v2948
        %3722 = vmatpush.msra.mxu0 %v2947
        %3723 = vmatpush.msra.mxu0 %v2946
        %3724 = vmatpush.msra.mxu0 %v2945
        %3725 = vmatpush.msra.mxu0 %v2944
        %3726 = vmatpush.msra.mxu0 %v2943
        %3727 = vmatpush.msra.mxu0 %v2942
        %3728 = vmatpush.msra.mxu0 %v2941
        %3729 = vmatpush.msra.mxu0 %v2940
        %3730 = vmatpush.msra.mxu0 %v2939
        %3731 = vmatpush.msra.mxu0 %v2938
        %3732 = vmatpush.msra.mxu0 %v2937
        %3733 = vmatpush.msra.mxu0 %v2936
        %3734 = vmatpush.msra.mxu0 %v2935
        %3735 = vmatpush.msra.mxu0 %v2934
        %3736 = vmatpush.msra.mxu0 %v2933
        %3737 = vmatmul.f32.gmra.mxu0 %v2649
        %v3738 = vpop.f32.mrf.mxu0
        %v3739 = vadd.f32 %v3719, %v3738
        %3740 = vdwg.mxu0
        %3741 = vmatpush.msra.mxu0 %v2964
        %3742 = vmatpush.msra.mxu0 %v2963
        %3743 = vmatpush.msra.mxu0 %v2962
        %3744 = vmatpush.msra.mxu0 %v2961
        %3745 = vmatpush.msra.mxu0 %v2960
        %3746 = vmatpush.msra.mxu0 %v2959
        %3747 = vmatpush.msra.mxu0 %v2958
        %3748 = vmatpush.msra.mxu0 %v2957
        %3749 = vmatpush.msra.mxu0 %v2956
        %3750 = vmatpush.msra.mxu0 %v2955
        %3751 = vmatpush.msra.mxu0 %v2954
        %3752 = vmatpush.msra.mxu0 %v2953
        %3753 = vmatpush.msra.mxu0 %v2952
        %3754 = vmatpush.msra.mxu0 %v2951
        %3755 = vmatpush.msra.mxu0 %v2950
        %3756 = vmatpush.msra.mxu0 %v2949
        %3757 = vmatmul.f32.gmra.mxu0 %v2656
        %v3758 = vpop.f32.mrf.mxu0
        %v3759 = vadd.f32 %v3739, %v3758
        %3760 = vdwg.mxu0
        %3761 = vmatpush.msra.mxu0 %v2980
        %3762 = vmatpush.msra.mxu0 %v2979
        %3763 = vmatpush.msra.mxu0 %v2978
        %3764 = vmatpush.msra.mxu0 %v2977
        %3765 = vmatpush.msra.mxu0 %v2976
        %3766 = vmatpush.msra.mxu0 %v2975
        %3767 = vmatpush.msra.mxu0 %v2974
        %3768 = vmatpush.msra.mxu0 %v2973
        %3769 = vmatpush.msra.mxu0 %v2972
        %3770 = vmatpush.msra.mxu0 %v2971
        %3771 = vmatpush.msra.mxu0 %v2970
        %3772 = vmatpush.msra.mxu0 %v2969
        %3773 = vmatpush.msra.mxu0 %v2968
        %3774 = vmatpush.msra.mxu0 %v2967
        %3775 = vmatpush.msra.mxu0 %v2966
        %3776 = vmatpush.msra.mxu0 %v2965
        %3777 = vmatmul.f32.gmra.mxu0 %v2657
        %v3778 = vpop.f32.mrf.mxu0
        %v3779 = vadd.f32 %v3759, %v3778
        %3780 = vdwg.mxu0
        %v3781 = vmax.f32 %v3179, %v3379
        %v3782 = vmax.f32 %v3579, %v3779
        %v3783 = vmax.f32 %v3781, %v3782
        %v3785 = vperm.slane %v2623, 0
        %v3787 = vadd.f32 %v3783, %v3785
        %v3788 = vmax.f32 %v3787, 0.0
        %v3790 = vrot.slane %v3788, 1
        %v3792 = vrot.slane %v3788, 2
        %v3794 = vrot.slane %v3788, 3
        %v3796 = vld [vmem:[%s5] sm:$0xff]
        %v3797 = vld [vmem:[%s5 + $0x8] sm:$0xff]
        %v3798 = vld [vmem:[%s5 + $0x10] sm:$0xff]
        %v3799 = vld [vmem:[%s5 + $0x18] sm:$0xff]
        %v3800 = vld [vmem:[%s5 + $0x20] sm:$0xff]
        %v3801 = vld [vmem:[%s5 + $0x28] sm:$0xff]
        %v3802 = vld [vmem:[%s5 + $0x30] sm:$0xff]
        %v3803 = vld [vmem:[%s5 + $0x38] sm:$0xff]
        %v3804 = vld [vmem:[%s5 + $0x40] sm:$0xff]
        %v3805 = vld [vmem:[%s5 + $0x48] sm:$0xff]
        %v3806 = vld [vmem:[%s5 + $0x50] sm:$0xff]
        %v3807 = vld [vmem:[%s5 + $0x58] sm:$0xff]
        %v3808 = vld [vmem:[%s5 + $0x60] sm:$0xff]
        %v3809 = vld [vmem:[%s5 + $0x68] sm:$0xff]
        %v3810 = vld [vmem:[%s5 + $0x70] sm:$0xff]
        %v3811 = vld [vmem:[%s5 + $0x78] sm:$0xff]
        %v3812 = vld [vmem:[%s5 + $0x80] sm:$0xff]
        %v3813 = vld [vmem:[%s5 + $0x88] sm:$0xff]
        %v3814 = vld [vmem:[%s5 + $0x90] sm:$0xff]
        %v3815 = vld [vmem:[%s5 + $0x98] sm:$0xff]
        %v3816 = vld [vmem:[%s5 + $0xa0] sm:$0xff]
        %v3817 = vld [vmem:[%s5 + $0xa8] sm:$0xff]
        %v3818 = vld [vmem:[%s5 + $0xb0] sm:$0xff]
        %v3819 = vld [vmem:[%s5 + $0xb8] sm:$0xff]
        %v3820 = vld [vmem:[%s5 + $0xc0] sm:$0xff]
        %v3821 = vld [vmem:[%s5 + $0xc8] sm:$0xff]
        %v3822 = vld [vmem:[%s5 + $0xd0] sm:$0xff]
        %v3823 = vld [vmem:[%s5 + $0xd8] sm:$0xff]
        %v3824 = vld [vmem:[%s5 + $0xe0] sm:$0xff]
        %v3825 = vld [vmem:[%s5 + $0xe8] sm:$0xff]
        %v3826 = vld [vmem:[%s5 + $0xf0] sm:$0xff]
        %v3827 = vld [vmem:[%s5 + $0xf8] sm:$0xff]
        %v3828 = vld [vmem:[%s5 + $0x100] sm:$0xff]
        %v3829 = vld [vmem:[%s5 + $0x108] sm:$0xff]
        %v3830 = vld [vmem:[%s5 + $0x110] sm:$0xff]
        %v3831 = vld [vmem:[%s5 + $0x118] sm:$0xff]
        %v3832 = vld [vmem:[%s5 + $0x120] sm:$0xff]
        %v3833 = vld [vmem:[%s5 + $0x128] sm:$0xff]
        %v3834 = vld [vmem:[%s5 + $0x130] sm:$0xff]
        %v3835 = vld [vmem:[%s5 + $0x138] sm:$0xff]
        %v3836 = vld [vmem:[%s5 + $0x140] sm:$0xff]
        %v3837 = vld [vmem:[%s5 + $0x148] sm:$0xff]
        %v3838 = vld [vmem:[%s5 + $0x150] sm:$0xff]
        %v3839 = vld [vmem:[%s5 + $0x158] sm:$0xff]
        %v3840 = vld [vmem:[%s5 + $0x160] sm:$0xff]
        %v3841 = vld [vmem:[%s5 + $0x168] sm:$0xff]
        %v3842 = vld [vmem:[%s5 + $0x170] sm:$0xff]
        %v3843 = vld [vmem:[%s5 + $0x178] sm:$0xff]
        %v3844 = vld [vmem:[%s5 + $0x180] sm:$0xff]
        %v3845 = vld [vmem:[%s5 + $0x188] sm:$0xff]
        %v3846 = vld [vmem:[%s5 + $0x190] sm:$0xff]
        %v3847 = vld [vmem:[%s5 + $0x198] sm:$0xff]
        %v3848 = vld [vmem:[%s5 + $0x1a0] sm:$0xff]
        %v3849 = vld [vmem:[%s5 + $0x1a8] sm:$0xff]
        %v3850 = vld [vmem:[%s5 + $0x1b0] sm:$0xff]
        %v3851 = vld [vmem:[%s5 + $0x1b8] sm:$0xff]
        %v3852 = vld [vmem:[%s5 + $0x1c0] sm:$0xff]
        %v3853 = vld [vmem:[%s5 + $0x1c8] sm:$0xff]
        %v3854 = vld [vmem:[%s5 + $0x1d0] sm:$0xff]
        %v3855 = vld [vmem:[%s5 + $0x1d8] sm:$0xff]
        %v3856 = vld [vmem:[%s5 + $0x1e0] sm:$0xff]
        %v3857 = vld [vmem:[%s5 + $0x1e8] sm:$0xff]
        %v3858 = vld [vmem:[%s5 + $0x1f0] sm:$0xff]
        %v3859 = vld [vmem:[%s5 + $0x1f8] sm:$0xff]
        %v3860 = vld [vmem:[%s5 + $0x200] sm:$0xff]
        %v3861 = vld [vmem:[%s5 + $0x208] sm:$0xff]
        %v3862 = vld [vmem:[%s5 + $0x210] sm:$0xff]
        %v3863 = vld [vmem:[%s5 + $0x218] sm:$0xff]
        %v3864 = vld [vmem:[%s5 + $0x220] sm:$0xff]
        %v3865 = vld [vmem:[%s5 + $0x228] sm:$0xff]
        %v3866 = vld [vmem:[%s5 + $0x230] sm:$0xff]
        %v3867 = vld [vmem:[%s5 + $0x238] sm:$0xff]
        %v3868 = vld [vmem:[%s5 + $0x240] sm:$0xff]
        %v3869 = vld [vmem:[%s5 + $0x248] sm:$0xff]
        %v3870 = vld [vmem:[%s5 + $0x250] sm:$0xff]
        %v3871 = vld [vmem:[%s5 + $0x258] sm:$0xff]
        %v3872 = vld [vmem:[%s5 + $0x260] sm:$0xff]
        %v3873 = vld [vmem:[%s5 + $0x268] sm:$0xff]
        %v3874 = vld [vmem:[%s5 + $0x270] sm:$0xff]
        %v3875 = vld [vmem:[%s5 + $0x278] sm:$0xff]
        %v3876 = vld [vmem:[%s5 + $0x280] sm:$0xff]
        %v3877 = vld [vmem:[%s5 + $0x288] sm:$0xff]
        %v3878 = vld [vmem:[%s5 + $0x290] sm:$0xff]
        %v3879 = vld [vmem:[%s5 + $0x298] sm:$0xff]
        %v3880 = vld [vmem:[%s5 + $0x2a0] sm:$0xff]
        %v3881 = vld [vmem:[%s5 + $0x2a8] sm:$0xff]
        %v3882 = vld [vmem:[%s5 + $0x2b0] sm:$0xff]
        %v3883 = vld [vmem:[%s5 + $0x2b8] sm:$0xff]
        %v3884 = vld [vmem:[%s5 + $0x2c0] sm:$0xff]
        %v3885 = vld [vmem:[%s5 + $0x2c8] sm:$0xff]
        %v3886 = vld [vmem:[%s5 + $0x2d0] sm:$0xff]
        %v3887 = vld [vmem:[%s5 + $0x2d8] sm:$0xff]
        %v3888 = vld [vmem:[%s5 + $0x2e0] sm:$0xff]
        %v3889 = vld [vmem:[%s5 + $0x2e8] sm:$0xff]
        %v3890 = vld [vmem:[%s5 + $0x2f0] sm:$0xff]
        %v3891 = vld [vmem:[%s5 + $0x2f8] sm:$0xff]
        %v3892 = vld [vmem:[%s5 + $0x300] sm:$0xff]
        %v3893 = vld [vmem:[%s5 + $0x308] sm:$0xff]
        %v3894 = vld [vmem:[%s5 + $0x310] sm:$0xff]
        %v3895 = vld [vmem:[%s5 + $0x318] sm:$0xff]
        %v3896 = vld [vmem:[%s5 + $0x320] sm:$0xff]
        %v3897 = vld [vmem:[%s5 + $0x328] sm:$0xff]
        %v3898 = vld [vmem:[%s5 + $0x330] sm:$0xff]
        %v3899 = vld [vmem:[%s5 + $0x338] sm:$0xff]
        %v3900 = vld [vmem:[%s5 + $0x340] sm:$0xff]
        %v3901 = vld [vmem:[%s5 + $0x348] sm:$0xff]
        %v3902 = vld [vmem:[%s5 + $0x350] sm:$0xff]
        %v3903 = vld [vmem:[%s5 + $0x358] sm:$0xff]
        %v3904 = vld [vmem:[%s5 + $0x360] sm:$0xff]
        %v3905 = vld [vmem:[%s5 + $0x368] sm:$0xff]
        %v3906 = vld [vmem:[%s5 + $0x370] sm:$0xff]
        %v3907 = vld [vmem:[%s5 + $0x378] sm:$0xff]
        %v3908 = vld [vmem:[%s5 + $0x380] sm:$0xff]
        %v3909 = vld [vmem:[%s5 + $0x388] sm:$0xff]
        %v3910 = vld [vmem:[%s5 + $0x390] sm:$0xff]
        %v3911 = vld [vmem:[%s5 + $0x398] sm:$0xff]
        %v3912 = vld [vmem:[%s5 + $0x3a0] sm:$0xff]
        %v3913 = vld [vmem:[%s5 + $0x3a8] sm:$0xff]
        %v3914 = vld [vmem:[%s5 + $0x3b0] sm:$0xff]
        %v3915 = vld [vmem:[%s5 + $0x3b8] sm:$0xff]
        %v3916 = vld [vmem:[%s5 + $0x3c0] sm:$0xff]
        %v3917 = vld [vmem:[%s5 + $0x3c8] sm:$0xff]
        %v3918 = vld [vmem:[%s5 + $0x3d0] sm:$0xff]
        %v3919 = vld [vmem:[%s5 + $0x3d8] sm:$0xff]
        %v3920 = vld [vmem:[%s5 + $0x3e0] sm:$0xff]
        %v3921 = vld [vmem:[%s5 + $0x3e8] sm:$0xff]
        %v3922 = vld [vmem:[%s5 + $0x3f0] sm:$0xff]
        %v3923 = vld [vmem:[%s5 + $0x3f8] sm:$0xff]
        %v3924 = vld [vmem:[%s5 + $0x400] sm:$0xff]
        %v3925 = vld [vmem:[%s5 + $0x408] sm:$0xff]
        %v3926 = vld [vmem:[%s5 + $0x410] sm:$0xff]
        %v3927 = vld [vmem:[%s5 + $0x418] sm:$0xff]
        %v3928 = vld [vmem:[%s5 + $0x420] sm:$0xff]
        %v3929 = vld [vmem:[%s5 + $0x428] sm:$0xff]
        %v3930 = vld [vmem:[%s5 + $0x430] sm:$0xff]
        %v3931 = vld [vmem:[%s5 + $0x438] sm:$0xff]
        %v3932 = vld [vmem:[%s5 + $0x440] sm:$0xff]
        %v3933 = vld [vmem:[%s5 + $0x448] sm:$0xff]
        %v3934 = vld [vmem:[%s5 + $0x450] sm:$0xff]
        %v3935 = vld [vmem:[%s5 + $0x458] sm:$0xff]
        %v3936 = vld [vmem:[%s5 + $0x460] sm:$0xff]
        %v3937 = vld [vmem:[%s5 + $0x468] sm:$0xff]
        %v3938 = vld [vmem:[%s5 + $0x470] sm:$0xff]
        %v3939 = vld [vmem:[%s5 + $0x478] sm:$0xff]
        %v3940 = vld [vmem:[%s5 + $0x480] sm:$0xff]
        %v3941 = vld [vmem:[%s5 + $0x488] sm:$0xff]
        %v3942 = vld [vmem:[%s5 + $0x490] sm:$0xff]
        %v3943 = vld [vmem:[%s5 + $0x498] sm:$0xff]
        %v3944 = vld [vmem:[%s5 + $0x4a0] sm:$0xff]
        %v3945 = vld [vmem:[%s5 + $0x4a8] sm:$0xff]
        %v3946 = vld [vmem:[%s5 + $0x4b0] sm:$0xff]
        %v3947 = vld [vmem:[%s5 + $0x4b8] sm:$0xff]
        %v3948 = vld [vmem:[%s5 + $0x4c0] sm:$0xff]
        %v3949 = vld [vmem:[%s5 + $0x4c8] sm:$0xff]
        %v3950 = vld [vmem:[%s5 + $0x4d0] sm:$0xff]
        %v3951 = vld [vmem:[%s5 + $0x4d8] sm:$0xff]
        %v3952 = vld [vmem:[%s5 + $0x4e0] sm:$0xff]
        %v3953 = vld [vmem:[%s5 + $0x4e8] sm:$0xff]
        %v3954 = vld [vmem:[%s5 + $0x4f0] sm:$0xff]
        %v3955 = vld [vmem:[%s5 + $0x4f8] sm:$0xff]
        %v3956 = vld [vmem:[%s5 + $0x500] sm:$0xff]
        %v3957 = vld [vmem:[%s5 + $0x508] sm:$0xff]
        %v3958 = vld [vmem:[%s5 + $0x510] sm:$0xff]
        %v3959 = vld [vmem:[%s5 + $0x518] sm:$0xff]
        %v3960 = vld [vmem:[%s5 + $0x520] sm:$0xff]
        %v3961 = vld [vmem:[%s5 + $0x528] sm:$0xff]
        %v3962 = vld [vmem:[%s5 + $0x530] sm:$0xff]
        %v3963 = vld [vmem:[%s5 + $0x538] sm:$0xff]
        %v3964 = vld [vmem:[%s5 + $0x540] sm:$0xff]
        %v3965 = vld [vmem:[%s5 + $0x548] sm:$0xff]
        %v3966 = vld [vmem:[%s5 + $0x550] sm:$0xff]
        %v3967 = vld [vmem:[%s5 + $0x558] sm:$0xff]
        %v3968 = vld [vmem:[%s5 + $0x560] sm:$0xff]
        %v3969 = vld [vmem:[%s5 + $0x568] sm:$0xff]
        %v3970 = vld [vmem:[%s5 + $0x570] sm:$0xff]
        %v3971 = vld [vmem:[%s5 + $0x578] sm:$0xff]
        %v3972 = vld [vmem:[%s5 + $0x580] sm:$0xff]
        %v3973 = vld [vmem:[%s5 + $0x588] sm:$0xff]
        %v3974 = vld [vmem:[%s5 + $0x590] sm:$0xff]
        %v3975 = vld [vmem:[%s5 + $0x598] sm:$0xff]
        %v3976 = vld [vmem:[%s5 + $0x5a0] sm:$0xff]
        %v3977 = vld [vmem:[%s5 + $0x5a8] sm:$0xff]
        %v3978 = vld [vmem:[%s5 + $0x5b0] sm:$0xff]
        %v3979 = vld [vmem:[%s5 + $0x5b8] sm:$0xff]
        %v3980 = vld [vmem:[%s5 + $0x5c0] sm:$0xff]
        %v3981 = vld [vmem:[%s5 + $0x5c8] sm:$0xff]
        %v3982 = vld [vmem:[%s5 + $0x5d0] sm:$0xff]
        %v3983 = vld [vmem:[%s5 + $0x5d8] sm:$0xff]
        %v3984 = vld [vmem:[%s5 + $0x5e0] sm:$0xff]
        %v3985 = vld [vmem:[%s5 + $0x5e8] sm:$0xff]
        %v3986 = vld [vmem:[%s5 + $0x5f0] sm:$0xff]
        %v3987 = vld [vmem:[%s5 + $0x5f8] sm:$0xff]
        %v3988 = vld [vmem:[%s5 + $0x600] sm:$0xff]
        %v3989 = vld [vmem:[%s5 + $0x608] sm:$0xff]
        %v3990 = vld [vmem:[%s5 + $0x610] sm:$0xff]
        %v3991 = vld [vmem:[%s5 + $0x618] sm:$0xff]
        %v3992 = vld [vmem:[%s5 + $0x620] sm:$0xff]
        %v3993 = vld [vmem:[%s5 + $0x628] sm:$0xff]
        %v3994 = vld [vmem:[%s5 + $0x630] sm:$0xff]
        %v3995 = vld [vmem:[%s5 + $0x638] sm:$0xff]
        %v3996 = vld [vmem:[%s5 + $0x640] sm:$0xff]
        %v3997 = vld [vmem:[%s5 + $0x648] sm:$0xff]
        %v3998 = vld [vmem:[%s5 + $0x650] sm:$0xff]
        %v3999 = vld [vmem:[%s5 + $0x658] sm:$0xff]
        %v4000 = vld [vmem:[%s5 + $0x660] sm:$0xff]
        %v4001 = vld [vmem:[%s5 + $0x668] sm:$0xff]
        %v4002 = vld [vmem:[%s5 + $0x670] sm:$0xff]
        %v4003 = vld [vmem:[%s5 + $0x678] sm:$0xff]
        %v4004 = vld [vmem:[%s5 + $0x680] sm:$0xff]
        %v4005 = vld [vmem:[%s5 + $0x688] sm:$0xff]
        %v4006 = vld [vmem:[%s5 + $0x690] sm:$0xff]
        %v4007 = vld [vmem:[%s5 + $0x698] sm:$0xff]
        %v4008 = vld [vmem:[%s5 + $0x6a0] sm:$0xff]
        %v4009 = vld [vmem:[%s5 + $0x6a8] sm:$0xff]
        %v4010 = vld [vmem:[%s5 + $0x6b0] sm:$0xff]
        %v4011 = vld [vmem:[%s5 + $0x6b8] sm:$0xff]
        %v4012 = vld [vmem:[%s5 + $0x6c0] sm:$0xff]
        %v4013 = vld [vmem:[%s5 + $0x6c8] sm:$0xff]
        %v4014 = vld [vmem:[%s5 + $0x6d0] sm:$0xff]
        %v4015 = vld [vmem:[%s5 + $0x6d8] sm:$0xff]
        %v4016 = vld [vmem:[%s5 + $0x6e0] sm:$0xff]
        %v4017 = vld [vmem:[%s5 + $0x6e8] sm:$0xff]
        %v4018 = vld [vmem:[%s5 + $0x6f0] sm:$0xff]
        %v4019 = vld [vmem:[%s5 + $0x6f8] sm:$0xff]
        %v4020 = vld [vmem:[%s5 + $0x700] sm:$0xff]
        %v4021 = vld [vmem:[%s5 + $0x708] sm:$0xff]
        %v4022 = vld [vmem:[%s5 + $0x710] sm:$0xff]
        %v4023 = vld [vmem:[%s5 + $0x718] sm:$0xff]
        %v4024 = vld [vmem:[%s5 + $0x720] sm:$0xff]
        %v4025 = vld [vmem:[%s5 + $0x728] sm:$0xff]
        %v4026 = vld [vmem:[%s5 + $0x730] sm:$0xff]
        %v4027 = vld [vmem:[%s5 + $0x738] sm:$0xff]
        %v4028 = vld [vmem:[%s5 + $0x740] sm:$0xff]
        %v4029 = vld [vmem:[%s5 + $0x748] sm:$0xff]
        %v4030 = vld [vmem:[%s5 + $0x750] sm:$0xff]
        %v4031 = vld [vmem:[%s5 + $0x758] sm:$0xff]
        %v4032 = vld [vmem:[%s5 + $0x760] sm:$0xff]
        %v4033 = vld [vmem:[%s5 + $0x768] sm:$0xff]
        %v4034 = vld [vmem:[%s5 + $0x770] sm:$0xff]
        %v4035 = vld [vmem:[%s5 + $0x778] sm:$0xff]
        %v4036 = vld [vmem:[%s5 + $0x780] sm:$0xff]
        %v4037 = vld [vmem:[%s5 + $0x788] sm:$0xff]
        %v4038 = vld [vmem:[%s5 + $0x790] sm:$0xff]
        %v4039 = vld [vmem:[%s5 + $0x798] sm:$0xff]
        %v4040 = vld [vmem:[%s5 + $0x7a0] sm:$0xff]
        %v4041 = vld [vmem:[%s5 + $0x7a8] sm:$0xff]
        %v4042 = vld [vmem:[%s5 + $0x7b0] sm:$0xff]
        %v4043 = vld [vmem:[%s5 + $0x7b8] sm:$0xff]
        %v4044 = vld [vmem:[%s5 + $0x7c0] sm:$0xff]
        %v4045 = vld [vmem:[%s5 + $0x7c8] sm:$0xff]
        %v4046 = vld [vmem:[%s5 + $0x7d0] sm:$0xff]
        %v4047 = vld [vmem:[%s5 + $0x7d8] sm:$0xff]
        %v4048 = vld [vmem:[%s5 + $0x7e0] sm:$0xff]
        %v4049 = vld [vmem:[%s5 + $0x7e8] sm:$0xff]
        %v4050 = vld [vmem:[%s5 + $0x7f0] sm:$0xff]
        %v4051 = vld [vmem:[%s5 + $0x7f8] sm:$0xff]
        %v4052 = vld [vmem:[%s6] sm:$0xf]
        %v4054 = vperm.slane %v4052, 0
        %v4055 = vperm.slane %v4052, 1
        %v4056 = vperm.slane %v4052, 2
        %v4057 = vperm.slane %v4052, 3
        %4062 = vmatpush.msra.mxu0 %v3856
        %4063 = vmatpush.msra.mxu0 %v3852
        %4064 = vmatpush.msra.mxu0 %v3848
        %4065 = vmatpush.msra.mxu0 %v3844
        %4066 = vmatpush.msra.mxu0 %v3840
        %4067 = vmatpush.msra.mxu0 %v3836
        %4068 = vmatpush.msra.mxu0 %v3832
        %4069 = vmatpush.msra.mxu0 %v3828
        %4070 = vmatpush.msra.mxu0 %v3824
        %4071 = vmatpush.msra.mxu0 %v3820
        %4072 = vmatpush.msra.mxu0 %v3816
        %4073 = vmatpush.msra.mxu0 %v3812
        %4074 = vmatpush.msra.mxu0 %v3808
        %4075 = vmatpush.msra.mxu0 %v3804
        %4076 = vmatpush.msra.mxu0 %v3800
        %4077 = vmatpush.msra.mxu0 %v3796
        %4078 = vmatmul.f32.gmra.mxu0 %v3788
        %v4079 = vpop.f32.mrf.mxu0
        %v4080 = vadd.f32 %v4054, %v4079
        %4081 = vdwg.mxu0
        %4082 = vmatpush.msra.mxu0 %v3920
        %4083 = vmatpush.msra.mxu0 %v3916
        %4084 = vmatpush.msra.mxu0 %v3912
        %4085 = vmatpush.msra.mxu0 %v3908
        %4086 = vmatpush.msra.mxu0 %v3904
        %4087 = vmatpush.msra.mxu0 %v3900
        %4088 = vmatpush.msra.mxu0 %v3896
        %4089 = vmatpush.msra.mxu0 %v3892
        %4090 = vmatpush.msra.mxu0 %v3888
        %4091 = vmatpush.msra.mxu0 %v3884
        %4092 = vmatpush.msra.mxu0 %v3880
        %4093 = vmatpush.msra.mxu0 %v3876
        %4094 = vmatpush.msra.mxu0 %v3872
        %4095 = vmatpush.msra.mxu0 %v3868
        %4096 = vmatpush.msra.mxu0 %v3864
        %4097 = vmatpush.msra.mxu0 %v3860
        %4098 = vmatmul.f32.gmra.mxu0 %v3790
        %v4099 = vpop.f32.mrf.mxu0
        %v4100 = vadd.f32 %v4080, %v4099
        %4101 = vdwg.mxu0
        %4102 = vmatpush.msra.mxu0 %v3984
        %4103 = vmatpush.msra.mxu0 %v3980
        %4104 = vmatpush.msra.mxu0 %v3976
        %4105 = vmatpush.msra.mxu0 %v3972
        %4106 = vmatpush.msra.mxu0 %v3968
        %4107 = vmatpush.msra.mxu0 %v3964
        %4108 = vmatpush.msra.mxu0 %v3960
        %4109 = vmatpush.msra.mxu0 %v3956
        %4110 = vmatpush.msra.mxu0 %v3952
        %4111 = vmatpush.msra.mxu0 %v3948
        %4112 = vmatpush.msra.mxu0 %v3944
        %4113 = vmatpush.msra.mxu0 %v3940
        %4114 = vmatpush.msra.mxu0 %v3936
        %4115 = vmatpush.msra.mxu0 %v3932
        %4116 = vmatpush.msra.mxu0 %v3928
        %4117 = vmatpush.msra.mxu0 %v3924
        %4118 = vmatmul.f32.gmra.mxu0 %v3792
        %v4119 = vpop.f32.mrf.mxu0
        %v4120 = vadd.f32 %v4100, %v4119
        %4121 = vdwg.mxu0
        %4122 = vmatpush.msra.mxu0 %v4048
        %4123 = vmatpush.msra.mxu0 %v4044
        %4124 = vmatpush.msra.mxu0 %v4040
        %4125 = vmatpush.msra.mxu0 %v4036
        %4126 = vmatpush.msra.mxu0 %v4032
        %4127 = vmatpush.msra.mxu0 %v4028
        %4128 = vmatpush.msra.mxu0 %v4024
        %4129 = vmatpush.msra.mxu0 %v4020
        %4130 = vmatpush.msra.mxu0 %v4016
        %4131 = vmatpush.msra.mxu0 %v4012
        %4132 = vmatpush.msra.mxu0 %v4008
        %4133 = vmatpush.msra.mxu0 %v4004
        %4134 = vmatpush.msra.mxu0 %v4000
        %4135 = vmatpush.msra.mxu0 %v3996
        %4136 = vmatpush.msra.mxu0 %v3992
        %4137 = vmatpush.msra.mxu0 %v3988
        %4138 = vmatmul.f32.gmra.mxu0 %v3794
        %v4139 = vpop.f32.mrf.mxu0
        %v4140 = vadd.f32 %v4120, %v4139
        %4141 = vdwg.mxu0
        %4142 = vmatpush.msra.mxu0 %v3857
        %4143 = vmatpush.msra.mxu0 %v3853
        %4144 = vmatpush.msra.mxu0 %v3849
        %4145 = vmatpush.msra.mxu0 %v3845
        %4146 = vmatpush.msra.mxu0 %v3841
        %4147 = vmatpush.msra.mxu0 %v3837
        %4148 = vmatpush.msra.mxu0 %v3833
        %4149 = vmatpush.msra.mxu0 %v3829
        %4150 = vmatpush.msra.mxu0 %v3825
        %4151 = vmatpush.msra.mxu0 %v3821
        %4152 = vmatpush.msra.mxu0 %v3817
        %4153 = vmatpush.msra.mxu0 %v3813
        %4154 = vmatpush.msra.mxu0 %v3809
        %4155 = vmatpush.msra.mxu0 %v3805
        %4156 = vmatpush.msra.mxu0 %v3801
        %4157 = vmatpush.msra.mxu0 %v3797
        %4158 = vmatmul.f32.gmra.mxu0 %v3788
        %v4159 = vpop.f32.mrf.mxu0
        %v4160 = vadd.f32 %v4055, %v4159
        %4161 = vdwg.mxu0
        %4162 = vmatpush.msra.mxu0 %v3921
        %4163 = vmatpush.msra.mxu0 %v3917
        %4164 = vmatpush.msra.mxu0 %v3913
        %4165 = vmatpush.msra.mxu0 %v3909
        %4166 = vmatpush.msra.mxu0 %v3905
        %4167 = vmatpush.msra.mxu0 %v3901
        %4168 = vmatpush.msra.mxu0 %v3897
        %4169 = vmatpush.msra.mxu0 %v3893
        %4170 = vmatpush.msra.mxu0 %v3889
        %4171 = vmatpush.msra.mxu0 %v3885
        %4172 = vmatpush.msra.mxu0 %v3881
        %4173 = vmatpush.msra.mxu0 %v3877
        %4174 = vmatpush.msra.mxu0 %v3873
        %4175 = vmatpush.msra.mxu0 %v3869
        %4176 = vmatpush.msra.mxu0 %v3865
        %4177 = vmatpush.msra.mxu0 %v3861
        %4178 = vmatmul.f32.gmra.mxu0 %v3790
        %v4179 = vpop.f32.mrf.mxu0
        %v4180 = vadd.f32 %v4160, %v4179
        %4181 = vdwg.mxu0
        %4182 = vmatpush.msra.mxu0 %v3985
        %4183 = vmatpush.msra.mxu0 %v3981
        %4184 = vmatpush.msra.mxu0 %v3977
        %4185 = vmatpush.msra.mxu0 %v3973
        %4186 = vmatpush.msra.mxu0 %v3969
        %4187 = vmatpush.msra.mxu0 %v3965
        %4188 = vmatpush.msra.mxu0 %v3961
        %4189 = vmatpush.msra.mxu0 %v3957
        %4190 = vmatpush.msra.mxu0 %v3953
        %4191 = vmatpush.msra.mxu0 %v3949
        %4192 = vmatpush.msra.mxu0 %v3945
        %4193 = vmatpush.msra.mxu0 %v3941
        %4194 = vmatpush.msra.mxu0 %v3937
        %4195 = vmatpush.msra.mxu0 %v3933
        %4196 = vmatpush.msra.mxu0 %v3929
        %4197 = vmatpush.msra.mxu0 %v3925
        %4198 = vmatmul.f32.gmra.mxu0 %v3792
        %v4199 = vpop.f32.mrf.mxu0
        %v4200 = vadd.f32 %v4180, %v4199
        %4201 = vdwg.mxu0
        %4202 = vmatpush.msra.mxu0 %v4049
        %4203 = vmatpush.msra.mxu0 %v4045
        %4204 = vmatpush.msra.mxu0 %v4041
        %4205 = vmatpush.msra.mxu0 %v4037
        %4206 = vmatpush.msra.mxu0 %v4033
        %4207 = vmatpush.msra.mxu0 %v4029
        %4208 = vmatpush.msra.mxu0 %v4025
        %4209 = vmatpush.msra.mxu0 %v4021
        %4210 = vmatpush.msra.mxu0 %v4017
        %4211 = vmatpush.msra.mxu0 %v4013
        %4212 = vmatpush.msra.mxu0 %v4009
        %4213 = vmatpush.msra.mxu0 %v4005
        %4214 = vmatpush.msra.mxu0 %v4001
        %4215 = vmatpush.msra.mxu0 %v3997
        %4216 = vmatpush.msra.mxu0 %v3993
        %4217 = vmatpush.msra.mxu0 %v3989
        %4218 = vmatmul.f32.gmra.mxu0 %v3794
        %v4219 = vpop.f32.mrf.mxu0
        %v4220 = vadd.f32 %v4200, %v4219
        %4221 = vdwg.mxu0
        %4222 = vmatpush.msra.mxu0 %v3858
        %4223 = vmatpush.msra.mxu0 %v3854
        %4224 = vmatpush.msra.mxu0 %v3850
        %4225 = vmatpush.msra.mxu0 %v3846
        %4226 = vmatpush.msra.mxu0 %v3842
        %4227 = vmatpush.msra.mxu0 %v3838
        %4228 = vmatpush.msra.mxu0 %v3834
        %4229 = vmatpush.msra.mxu0 %v3830
        %4230 = vmatpush.msra.mxu0 %v3826
        %4231 = vmatpush.msra.mxu0 %v3822
        %4232 = vmatpush.msra.mxu0 %v3818
        %4233 = vmatpush.msra.mxu0 %v3814
        %4234 = vmatpush.msra.mxu0 %v3810
        %4235 = vmatpush.msra.mxu0 %v3806
        %4236 = vmatpush.msra.mxu0 %v3802
        %4237 = vmatpush.msra.mxu0 %v3798
        %4238 = vmatmul.f32.gmra.mxu0 %v3788
        %v4239 = vpop.f32.mrf.mxu0
        %v4240 = vadd.f32 %v4056, %v4239
        %4241 = vdwg.mxu0
        %4242 = vmatpush.msra.mxu0 %v3922
        %4243 = vmatpush.msra.mxu0 %v3918
        %4244 = vmatpush.msra.mxu0 %v3914
        %4245 = vmatpush.msra.mxu0 %v3910
        %4246 = vmatpush.msra.mxu0 %v3906
        %4247 = vmatpush.msra.mxu0 %v3902
        %4248 = vmatpush.msra.mxu0 %v3898
        %4249 = vmatpush.msra.mxu0 %v3894
        %4250 = vmatpush.msra.mxu0 %v3890
        %4251 = vmatpush.msra.mxu0 %v3886
        %4252 = vmatpush.msra.mxu0 %v3882
        %4253 = vmatpush.msra.mxu0 %v3878
        %4254 = vmatpush.msra.mxu0 %v3874
        %4255 = vmatpush.msra.mxu0 %v3870
        %4256 = vmatpush.msra.mxu0 %v3866
        %4257 = vmatpush.msra.mxu0 %v3862
        %4258 = vmatmul.f32.gmra.mxu0 %v3790
        %v4259 = vpop.f32.mrf.mxu0
        %v4260 = vadd.f32 %v4240, %v4259
        %4261 = vdwg.mxu0
        %4262 = vmatpush.msra.mxu0 %v3986
        %4263 = vmatpush.msra.mxu0 %v3982
        %4264 = vmatpush.msra.mxu0 %v3978
        %4265 = vmatpush.msra.mxu0 %v3974
        %4266 = vmatpush.msra.mxu0 %v3970
        %4267 = vmatpush.msra.mxu0 %v3966
        %4268 = vmatpush.msra.mxu0 %v3962
        %4269 = vmatpush.msra.mxu0 %v3958
        %4270 = vmatpush.msra.mxu0 %v3954
        %4271 = vmatpush.msra.mxu0 %v3950
        %4272 = vmatpush.msra.mxu0 %v3946
        %4273 = vmatpush.msra.mxu0 %v3942
        %4274 = vmatpush.msra.mxu0 %v3938
        %4275 = vmatpush.msra.mxu0 %v3934
        %4276 = vmatpush.msra.mxu0 %v3930
        %4277 = vmatpush.msra.mxu0 %v3926
        %4278 = vmatmul.f32.gmra.mxu0 %v3792
        %v4279 = vpop.f32.mrf.mxu0
        %v4280 = vadd.f32 %v4260, %v4279
        %4281 = vdwg.mxu0
        %4282 = vmatpush.msra.mxu0 %v4050
        %4283 = vmatpush.msra.mxu0 %v4046
        %4284 = vmatpush.msra.mxu0 %v4042
        %4285 = vmatpush.msra.mxu0 %v4038
        %4286 = vmatpush.msra.mxu0 %v4034
        %4287 = vmatpush.msra.mxu0 %v4030
        %4288 = vmatpush.msra.mxu0 %v4026
        %4289 = vmatpush.msra.mxu0 %v4022
        %4290 = vmatpush.msra.mxu0 %v4018
        %4291 = vmatpush.msra.mxu0 %v4014
        %4292 = vmatpush.msra.mxu0 %v4010
        %4293 = vmatpush.msra.mxu0 %v4006
        %4294 = vmatpush.msra.mxu0 %v4002
        %4295 = vmatpush.msra.mxu0 %v3998
        %4296 = vmatpush.msra.mxu0 %v3994
        %4297 = vmatpush.msra.mxu0 %v3990
        %4298 = vmatmul.f32.gmra.mxu0 %v3794
        %v4299 = vpop.f32.mrf.mxu0
        %v4300 = vadd.f32 %v4280, %v4299
        %4301 = vdwg.mxu0
        %4302 = vmatpush.msra.mxu0 %v3859
        %4303 = vmatpush.msra.mxu0 %v3855
        %4304 = vmatpush.msra.mxu0 %v3851
        %4305 = vmatpush.msra.mxu0 %v3847
        %4306 = vmatpush.msra.mxu0 %v3843
        %4307 = vmatpush.msra.mxu0 %v3839
        %4308 = vmatpush.msra.mxu0 %v3835
        %4309 = vmatpush.msra.mxu0 %v3831
        %4310 = vmatpush.msra.mxu0 %v3827
        %4311 = vmatpush.msra.mxu0 %v3823
        %4312 = vmatpush.msra.mxu0 %v3819
        %4313 = vmatpush.msra.mxu0 %v3815
        %4314 = vmatpush.msra.mxu0 %v3811
        %4315 = vmatpush.msra.mxu0 %v3807
        %4316 = vmatpush.msra.mxu0 %v3803
        %4317 = vmatpush.msra.mxu0 %v3799
        %4318 = vmatmul.f32.gmra.mxu0 %v3788
        %v4319 = vpop.f32.mrf.mxu0
        %v4320 = vadd.f32 %v4057, %v4319
        %4321 = vdwg.mxu0
        %4322 = vmatpush.msra.mxu0 %v3923
        %4323 = vmatpush.msra.mxu0 %v3919
        %4324 = vmatpush.msra.mxu0 %v3915
        %4325 = vmatpush.msra.mxu0 %v3911
        %4326 = vmatpush.msra.mxu0 %v3907
        %4327 = vmatpush.msra.mxu0 %v3903
        %4328 = vmatpush.msra.mxu0 %v3899
        %4329 = vmatpush.msra.mxu0 %v3895
        %4330 = vmatpush.msra.mxu0 %v3891
        %4331 = vmatpush.msra.mxu0 %v3887
        %4332 = vmatpush.msra.mxu0 %v3883
        %4333 = vmatpush.msra.mxu0 %v3879
        %4334 = vmatpush.msra.mxu0 %v3875
        %4335 = vmatpush.msra.mxu0 %v3871
        %4336 = vmatpush.msra.mxu0 %v3867
        %4337 = vmatpush.msra.mxu0 %v3863
        %4338 = vmatmul.f32.gmra.mxu0 %v3790
        %v4339 = vpop.f32.mrf.mxu0
        %v4340 = vadd.f32 %v4320, %v4339
        %4341 = vdwg.mxu0
        %4342 = vmatpush.msra.mxu0 %v3987
        %4343 = vmatpush.msra.mxu0 %v3983
        %4344 = vmatpush.msra.mxu0 %v3979
        %4345 = vmatpush.msra.mxu0 %v3975
        %4346 = vmatpush.msra.mxu0 %v3971
        %4347 = vmatpush.msra.mxu0 %v3967
        %4348 = vmatpush.msra.mxu0 %v3963
        %4349 = vmatpush.msra.mxu0 %v3959
        %4350 = vmatpush.msra.mxu0 %v3955
        %4351 = vmatpush.msra.mxu0 %v3951
        %4352 = vmatpush.msra.mxu0 %v3947
        %4353 = vmatpush.msra.mxu0 %v3943
        %4354 = vmatpush.msra.mxu0 %v3939
        %4355 = vmatpush.msra.mxu0 %v3935
        %4356 = vmatpush.msra.mxu0 %v3931
        %4357 = vmatpush.msra.mxu0 %v3927
        %4358 = vmatmul.f32.gmra.mxu0 %v3792
        %v4359 = vpop.f32.mrf.mxu0
        %v4360 = vadd.f32 %v4340, %v4359
        %4361 = vdwg.mxu0
        %4362 = vmatpush.msra.mxu0 %v4051
        %4363 = vmatpush.msra.mxu0 %v4047
        %4364 = vmatpush.msra.mxu0 %v4043
        %4365 = vmatpush.msra.mxu0 %v4039
        %4366 = vmatpush.msra.mxu0 %v4035
        %4367 = vmatpush.msra.mxu0 %v4031
        %4368 = vmatpush.msra.mxu0 %v4027
        %4369 = vmatpush.msra.mxu0 %v4023
        %4370 = vmatpush.msra.mxu0 %v4019
        %4371 = vmatpush.msra.mxu0 %v4015
        %4372 = vmatpush.msra.mxu0 %v4011
        %4373 = vmatpush.msra.mxu0 %v4007
        %4374 = vmatpush.msra.mxu0 %v4003
        %4375 = vmatpush.msra.mxu0 %v3999
        %4376 = vmatpush.msra.mxu0 %v3995
        %4377 = vmatpush.msra.mxu0 %v3991
        %4378 = vmatmul.f32.gmra.mxu0 %v3794
        %v4379 = vpop.f32.mrf.mxu0
        %v4380 = vadd.f32 %v4360, %v4379
        %4381 = vdwg.mxu0
        %v4382 = vmax.f32 %v4140, 0.0
        %v4383 = vmax.f32 %v4220, 0.0
        %v4384 = vmax.f32 %v4300, 0.0
        %v4385 = vmax.f32 %v4380, 0.0
        %v4386 = vld [vmem:[%s7] sm:$0xff]
        %v4387 = vld [vmem:[%s7 + $0x8] sm:$0xff]
        %v4388 = vld [vmem:[%s7 + $0x10] sm:$0xff]
        %v4389 = vld [vmem:[%s7 + $0x18] sm:$0xff]
        %v4390 = vld [vmem:[%s7 + $0x20] sm:$0xff]
        %v4391 = vld [vmem:[%s7 + $0x28] sm:$0xff]
        %v4392 = vld [vmem:[%s7 + $0x30] sm:$0xff]
        %v4393 = vld [vmem:[%s7 + $0x38] sm:$0xff]
        %v4394 = vld [vmem:[%s7 + $0x40] sm:$0xff]
        %v4395 = vld [vmem:[%s7 + $0x48] sm:$0xff]
        %v4396 = vld [vmem:[%s7 + $0x50] sm:$0xff]
        %v4397 = vld [vmem:[%s7 + $0x58] sm:$0xff]
        %v4398 = vld [vmem:[%s7 + $0x60] sm:$0xff]
        %v4399 = vld [vmem:[%s7 + $0x68] sm:$0xff]
        %v4400 = vld [vmem:[%s7 + $0x70] sm:$0xff]
        %v4401 = vld [vmem:[%s7 + $0x78] sm:$0xff]
        %v4402 = vld [vmem:[%s7 + $0x80] sm:$0xff]
        %v4403 = vld [vmem:[%s7 + $0x88] sm:$0xff]
        %v4404 = vld [vmem:[%s7 + $0x90] sm:$0xff]
        %v4405 = vld [vmem:[%s7 + $0x98] sm:$0xff]
        %v4406 = vld [vmem:[%s7 + $0xa0] sm:$0xff]
        %v4407 = vld [vmem:[%s7 + $0xa8] sm:$0xff]
        %v4408 = vld [vmem:[%s7 + $0xb0] sm:$0xff]
        %v4409 = vld [vmem:[%s7 + $0xb8] sm:$0xff]
        %v4410 = vld [vmem:[%s7 + $0xc0] sm:$0xff]
        %v4411 = vld [vmem:[%s7 + $0xc8] sm:$0xff]
        %v4412 = vld [vmem:[%s7 + $0xd0] sm:$0xff]
        %v4413 = vld [vmem:[%s7 + $0xd8] sm:$0xff]
        %v4414 = vld [vmem:[%s7 + $0xe0] sm:$0xff]
        %v4415 = vld [vmem:[%s7 + $0xe8] sm:$0xff]
        %v4416 = vld [vmem:[%s7 + $0xf0] sm:$0xff]
        %v4417 = vld [vmem:[%s7 + $0xf8] sm:$0xff]
        %v4418 = vld [vmem:[%s7 + $0x100] sm:$0xff]
        %v4419 = vld [vmem:[%s7 + $0x108] sm:$0xff]
        %v4420 = vld [vmem:[%s7 + $0x110] sm:$0xff]
        %v4421 = vld [vmem:[%s7 + $0x118] sm:$0xff]
        %v4422 = vld [vmem:[%s7 + $0x120] sm:$0xff]
        %v4423 = vld [vmem:[%s7 + $0x128] sm:$0xff]
        %v4424 = vld [vmem:[%s7 + $0x130] sm:$0xff]
        %v4425 = vld [vmem:[%s7 + $0x138] sm:$0xff]
        %v4426 = vld [vmem:[%s7 + $0x140] sm:$0xff]
        %v4427 = vld [vmem:[%s7 + $0x148] sm:$0xff]
        %v4428 = vld [vmem:[%s7 + $0x150] sm:$0xff]
        %v4429 = vld [vmem:[%s7 + $0x158] sm:$0xff]
        %v4430 = vld [vmem:[%s7 + $0x160] sm:$0xff]
        %v4431 = vld [vmem:[%s7 + $0x168] sm:$0xff]
        %v4432 = vld [vmem:[%s7 + $0x170] sm:$0xff]
        %v4433 = vld [vmem:[%s7 + $0x178] sm:$0xff]
        %v4434 = vld [vmem:[%s7 + $0x180] sm:$0xff]
        %v4435 = vld [vmem:[%s7 + $0x188] sm:$0xff]
        %v4436 = vld [vmem:[%s7 + $0x190] sm:$0xff]
        %v4437 = vld [vmem:[%s7 + $0x198] sm:$0xff]
        %v4438 = vld [vmem:[%s7 + $0x1a0] sm:$0xff]
        %v4439 = vld [vmem:[%s7 + $0x1a8] sm:$0xff]
        %v4440 = vld [vmem:[%s7 + $0x1b0] sm:$0xff]
        %v4441 = vld [vmem:[%s7 + $0x1b8] sm:$0xff]
        %v4442 = vld [vmem:[%s7 + $0x1c0] sm:$0xff]
        %v4443 = vld [vmem:[%s7 + $0x1c8] sm:$0xff]
        %v4444 = vld [vmem:[%s7 + $0x1d0] sm:$0xff]
        %v4445 = vld [vmem:[%s7 + $0x1d8] sm:$0xff]
        %v4446 = vld [vmem:[%s7 + $0x1e0] sm:$0xff]
        %v4447 = vld [vmem:[%s7 + $0x1e8] sm:$0xff]
        %v4448 = vld [vmem:[%s7 + $0x1f0] sm:$0xf]
        %v4449 = vld [vmem:[%s8] sm:$0x1]
        %vm4450 = vcmask 949248
        %v4452 = vsel %vm4450, %v4385, 0
        %vm4454 = vcmask 1043456
        %v4456 = vsel %vm4454, %v4448, 0
        %4458 = vmatpush.msra.mxu0 %v4401
        %4459 = vmatpush.msra.mxu0 %v4400
        %4460 = vmatpush.msra.mxu0 %v4399
        %4461 = vmatpush.msra.mxu0 %v4398
        %4462 = vmatpush.msra.mxu0 %v4397
        %4463 = vmatpush.msra.mxu0 %v4396
        %4464 = vmatpush.msra.mxu0 %v4395
        %4465 = vmatpush.msra.mxu0 %v4394
        %4466 = vmatpush.msra.mxu0 %v4393
        %4467 = vmatpush.msra.mxu0 %v4392
        %4468 = vmatpush.msra.mxu0 %v4391
        %4469 = vmatpush.msra.mxu0 %v4390
        %4470 = vmatpush.msra.mxu0 %v4389
        %4471 = vmatpush.msra.mxu0 %v4388
        %4472 = vmatpush.msra.mxu0 %v4387
        %4473 = vmatpush.msra.mxu0 %v4386
        %4474 = vmatmul.f32.gmra.mxu0 %v4382
        %v4475 = vpop.f32.mrf.mxu0
        %v4476 = vadd.f32 %v4449, %v4475
        %4477 = vdwg.mxu0
        %4478 = vmatpush.msra.mxu0 %v4417
        %4479 = vmatpush.msra.mxu0 %v4416
        %4480 = vmatpush.msra.mxu0 %v4415
        %4481 = vmatpush.msra.mxu0 %v4414
        %4482 = vmatpush.msra.mxu0 %v4413
        %4483 = vmatpush.msra.mxu0 %v4412
        %4484 = vmatpush.msra.mxu0 %v4411
        %4485 = vmatpush.msra.mxu0 %v4410
        %4486 = vmatpush.msra.mxu0 %v4409
        %4487 = vmatpush.msra.mxu0 %v4408
        %4488 = vmatpush.msra.mxu0 %v4407
        %4489 = vmatpush.msra.mxu0 %v4406
        %4490 = vmatpush.msra.mxu0 %v4405
        %4491 = vmatpush.msra.mxu0 %v4404
        %4492 = vmatpush.msra.mxu0 %v4403
        %4493 = vmatpush.msra.mxu0 %v4402
        %4494 = vmatmul.f32.gmra.mxu0 %v4383
        %v4495 = vpop.f32.mrf.mxu0
        %v4496 = vadd.f32 %v4476, %v4495
        %4497 = vdwg.mxu0
        %4498 = vmatpush.msra.mxu0 %v4433
        %4499 = vmatpush.msra.mxu0 %v4432
        %4500 = vmatpush.msra.mxu0 %v4431
        %4501 = vmatpush.msra.mxu0 %v4430
        %4502 = vmatpush.msra.mxu0 %v4429
        %4503 = vmatpush.msra.mxu0 %v4428
        %4504 = vmatpush.msra.mxu0 %v4427
        %4505 = vmatpush.msra.mxu0 %v4426
        %4506 = vmatpush.msra.mxu0 %v4425
        %4507 = vmatpush.msra.mxu0 %v4424
        %4508 = vmatpush.msra.mxu0 %v4423
        %4509 = vmatpush.msra.mxu0 %v4422
        %4510 = vmatpush.msra.mxu0 %v4421
        %4511 = vmatpush.msra.mxu0 %v4420
        %4512 = vmatpush.msra.mxu0 %v4419
        %4513 = vmatpush.msra.mxu0 %v4418
        %4514 = vmatmul.f32.gmra.mxu0 %v4384
        %v4515 = vpop.f32.mrf.mxu0
        %v4516 = vadd.f32 %v4496, %v4515
        %4517 = vdwg.mxu0
        %4518 = vmatpush.msra.mxu0 0.0
        %4519 = vmatpush.msra.mxu0 %v4456
        %4520 = vmatpush.msra.mxu0 %v4447
        %4521 = vmatpush.msra.mxu0 %v4446
        %4522 = vmatpush.msra.mxu0 %v4445
        %4523 = vmatpush.msra.mxu0 %v4444
        %4524 = vmatpush.msra.mxu0 %v4443
        %4525 = vmatpush.msra.mxu0 %v4442
        %4526 = vmatpush.msra.mxu0 %v4441
        %4527 = vmatpush.msra.mxu0 %v4440
        %4528 = vmatpush.msra.mxu0 %v4439
        %4529 = vmatpush.msra.mxu0 %v4438
        %4530 = vmatpush.msra.mxu0 %v4437
        %4531 = vmatpush.msra.mxu0 %v4436
        %4532 = vmatpush.msra.mxu0 %v4435
        %4533 = vmatpush.msra.mxu0 %v4434
        %4534 = vmatmul.f32.gmra.mxu0 %v4452
        %v4535 = vpop.f32.mrf.mxu0
        %v4536 = vadd.f32 %v4516, %v4535
        %4537 = vdwg.mxu0
        %vm4538 = vcmask 73728
        %v4539 = vsel %vm4538, %v4536, -inf
        %4540 = vmax.xlane.f32.xlu0 %v4539
        %v4541 = vpop.xlane.xlu0 %4540
        %v4542 = vsub.f32 %v4536, %v4541
        %v4543 = vmul.f32 %v4542, 1.442695
        %v4544 = vpow.pop %v4543
        %v4545 = vsel %vm4538, %v4544, 0.0
        %4546 = vadd.xlane.f32.xlu0 %v4545
        %v4547 = vpop.xlane.xlu0 %4546
        %v4548 = vlog2.pop %v4547
        %v4549 = vmul.f32 %v4548, 0.6931472
        %v4550 = vsub.f32 %v4542, %v4549
        %4551 = vst.msk [vmem:[%s324] sm:$0x1] %vm4538, %v4550
        %s4552 = sand.u32 %s225, 1
        %s4553 = scalar_lea.sflag [#allocation4], %s4552
        %s4554 = sand.u32 %s225, 1
        %s4555 = scalar_lea.vmem [#allocation3], %s4554
        // Predicated region
        $region57: #{net3_forward.1} parent=55 // pred_check
          %p4556 = pneg %p235
        $region58: #{net3_forward.1} parent=55 // pred_check_branch
          %4558 = sbr.rel (%p4556) target = $region60
        $region59: #{net3_forward.1} parent=55 // pred_region
          %4560 = vsyncadd %s4553, 0
          %s4561 = scalar_lea.hbm %s9, %s23
          %s4563 = sshll.u32 %s4555, 4
          %s4564 = int_to_ptr.vmem [resolvable:$true] %s4563
          %s4565 = sshll.u32 %s4561, 4
          %s4566 = int_to_ptr.hbm [resolvable:$true] %s4565
          %4568 = dma.vmem_to_hbm [thread:$0]  %s4564, 16, %s4566, %s4553
        $region60: #{net3_forward.1} parent=55 // pred_fallthru
          _
      $region56: #{net3_forward.1} parent=5 // pred_fallthru
        _
      %p4569 = scmp.le.s32.totalorder 2, %s18
      // Predicated region
      $region61: #{net3_forward.1} parent=5 // pred_check
        %p4570 = pneg %p4569
      $region62: #{net3_forward.1} parent=5 // pred_check_branch
        %4572 = sbr.rel (%p4570) target = $region64
      $region63: #{net3_forward.1} parent=5 // pred_region
        %s4573 = ssub.s32 %s18, 2
        // Predicated region
        $region65: #{net3_forward.1} parent=63 // pred_check
          %p4574 = pneg %p241
        $region66: #{net3_forward.1} parent=63 // pred_check_branch
          %4576 = sbr.rel (%p4574) target = $region68
        $region67: #{net3_forward.1} parent=63 // pred_region
          %s4577 = sand.u32 %s226, 1
          %s4578 = scalar_lea.sflag [#allocation4], %s4577
          %s4579 = sand.u32 %s226, 1
          %s4580 = scalar_lea.vmem [#allocation3], %s4579
          %4582 = dma.done %s4578, 16
        $region68: #{net3_forward.1} parent=63 // pred_fallthru
          _
      $region64: #{net3_forward.1} parent=5 // pred_fallthru
        _
    $region6: #{net3_forward.1} parent=1 // loop_footer
      %s22 = sadd.s32 1, %s18
    $region7: #{net3_forward.1} parent=1 // loop_footer_branch
      %17 = sbr.rel target = $region3
    $region8: #{net3_forward.1} parent=1 // loop_exit
      _
    %4583 = vsyncpa [#allocation4], 1
    %s4584 = scalar_lea.sflag [#allocation4], 1
    %4585 = vsyncpa %s4584, 1

</llo_original>
